<compile_context>
chip_gen: v6e
topology: v6e:2x2x1
jax: 0.10.0
libtpu: 0.0.40
codegen_flags: <defaults>
</compile_context>

<pallas_src>
import math

import jax
import jax.numpy as jnp
from jax import lax
from jax.experimental import pallas as pl
from jax.experimental.pallas import tpu as pltpu

KSIZES = (1, 7, 21, 35)          # branch kernel sizes (PyTorch conv1/conv3/conv5/conv7)
KMAX = 35                        # unified kernel width
PMAX = 17                        # unified "same" padding
LAYER_SPECS = ((1, 1), (4, 2), (8, 6), (24, 20))   # (Cin, Cout) per InceptionLayer


def _layer_dims(in_dim):
    dims, L = [], in_dim
    for cin, cout in LAYER_SPECS:
        l2 = L // 2
        dims.append(dict(cin=cin, cout=cout, lin=L, l2=l2, npos=2 * l2,
                         s=L + 2 * PMAX))
        L = l2
    return dims


def _perm_even_odd(l2):
    """(2*l2, 2*l2) bf16 permutation: columns [0:l2] pick the even conv positions,
    columns [l2:2*l2] the odd ones.  Applied to the bf16 patch on the MXU, so the
    selection is exact and MaxPool1d(2) becomes one vectorized jnp.maximum."""
    npos = 2 * l2
    rows = lax.broadcasted_iota(jnp.int32, (npos, npos), 0)
    cols = lax.broadcasted_iota(jnp.int32, (npos, npos), 1)
    src = jnp.where(cols < l2, 2 * cols, 2 * (cols - l2) + 1)
    return (rows == src).astype(jnp.bfloat16)


def _make_kernel(dims, n_lin):
    n_inc = len(dims)

    def kernel(*refs):
        it = iter(refs)
        patch0 = next(it)                                   # (KMAX, 2*l2_0) bf16
        cw, cb = [], []
        for _ in range(n_inc):
            cw.append(next(it)); cb.append(next(it))
        lw, lb = [], []
        for _ in range(n_lin):
            lw.append(next(it)); lb.append(next(it))
        out_ref = next(it)                                  # (1, n_out_pad) f32
        acts = [next(it) for _ in range(n_inc - 1)]         # (Cin, L+2*PMAX) bf16
        pbufs = [next(it) for _ in range(n_inc - 1)]        # (KMAX*Cin, 2*l2) bf16

        def inception(patch, li):
            """unified 35-tap conv (all 4 branches) + MaxPool1d(2) + bias + ReLU."""
            l2, npos = dims[li]["l2"], dims[li]["npos"]
            if l2 > 1:
                # Group even/odd conv positions with one tiny exact bf16 MXU matmul.
                patch = jnp.dot(patch, _perm_even_odd(l2),
                                preferred_element_type=jnp.float32
                                ).astype(jnp.bfloat16)
            z = jnp.dot(cw[li][...], patch,
                        preferred_element_type=jnp.float32)       # (4*Cout, npos) f32
            pooled = jnp.maximum(z[:, :l2], z[:, l2:npos])        # MaxPool1d(2)
            return jnp.maximum(pooled + cb[li][...], 0.0)         # +bias (once), ReLU

        pooled = inception(patch0[...], 0)                        # (4, l2_0)

        for li in range(1, n_inc):
            d = dims[li]
            cin, npos, s = d["cin"], d["npos"], d["s"]
            l2_prev = dims[li - 1]["l2"]
            act, pbuf = acts[li - 1], pbufs[li - 1]
            # Channel-major, zero-padded activations (per-sample, no inter-sample pad).
            act[...] = jnp.zeros((cin, s), jnp.bfloat16)
            act[:, PMAX:PMAX + l2_prev] = pooled.astype(jnp.bfloat16)
            # Lane-dense im2col: tap k contributes Cin contiguous full-width rows.
            # Every logical element of pbuf is overwritten each grid step, so no
            # zero-init of the patch buffer is needed.
            for k in range(KMAX):
                pbuf[k * cin:(k + 1) * cin, :] = act[:, k:k + npos]
            pooled = inception(pbuf[...], li)                     # (4*Cout, l2)

        # Flatten((C, L=1)) == channel vector.  Fold the (C,1)->(1,C) transpose into the
        # first Linear by contracting dim 0 of both operands on the MXU.
        h = lax.dot_general(pooled.astype(jnp.bfloat16), lw[0][...],
                            (((0,), (0,)), ((), ())),
                            preferred_element_type=jnp.float32) + lb[0][...]
        for li in range(1, n_lin):
            h = jnp.maximum(h, 0.0).astype(jnp.bfloat16)
            h = jnp.dot(h, lw[li][...],
                        preferred_element_type=jnp.float32) + lb[li][...]
        out_ref[...] = h                                          # lane-dense (1, 128*k)

    return kernel


def build_inception_forward(params, batch, in_dim):
    dims = _layer_dims(in_dim)
    assert all(d["l2"] >= 1 for d in dims)
    # Final spatial length must be 1 so Flatten over (C, L) equals the channel vector.
    # TODO(synk): for other in_dims fold the (C, L) flatten permutation into lw[0].
    assert dims[-1]["l2"] == 1

    n_lin = len(params["linear"])
    n_out = params["linear"][-1][0].shape[1]
    flat_dim = 4 * dims[-1]["cout"] * dims[-1]["l2"]

    # Kernel-side constants: bf16 weights (halves weight DMA; DEFAULT MXU precision
    # truncates to bf16 anyway), f32 biases added to the f32 accumulators.
    const_args = []
    for layer in params["inception"]:
        const_args += [layer["w_mat"].astype(jnp.bfloat16),
                       layer["bias_col"].astype(jnp.float32)]
    pad128 = lambda n: max(128, -(-n // 128) * 128)
    sizes = [flat_dim] + [pad128(w.shape[1]) for (w, _) in params["linear"]]
    for li, (w, b) in enumerate(params["linear"]):
        din, dout = w.shape
        wp = jnp.zeros((sizes[li], sizes[li + 1]), jnp.float32).at[:din, :dout].set(w)
        bp = jnp.zeros((1, sizes[li + 1]), jnp.float32).at[:, :dout].set(b)
        const_args += [wp.astype(jnp.bfloat16), bp]
    n_out_pad = sizes[-1]

    in_specs = [pl.BlockSpec((None, KMAX, dims[0]["npos"]), lambda b: (b, 0, 0))]
    in_specs += [pl.BlockSpec(a.shape, lambda b: (0, 0)) for a in const_args]
    out_spec = pl.BlockSpec((None, 1, n_out_pad), lambda b: (b, 0, 0))

    scratch = [pltpu.VMEM((d["cin"], d["s"]), jnp.bfloat16) for d in dims[1:]]
    scratch += [pltpu.VMEM((KMAX * d["cin"], d["npos"]), jnp.bfloat16) for d in dims[1:]]

    # Advisory cost estimate so XLA can overlap the per-call weight DMA with neighbors.
    flops = 0
    for d in dims:
        kdim = KMAX * d["cin"]
        if d["l2"] > 1:
            flops += 2 * kdim * d["npos"] * d["npos"]
        flops += 2 * (4 * d["cout"]) * kdim * d["npos"]
    for li in range(n_lin):
        flops += 2 * sizes[li] * sizes[li + 1]
    flops *= batch
    bytes_accessed = sum(int(a.size) * a.dtype.itemsize for a in const_args)
    bytes_accessed += batch * (KMAX * dims[0]["npos"] * 2 + n_out_pad * 4)

    fused = pl.pallas_call(
        _make_kernel(dims, n_lin),
        out_shape=jax.ShapeDtypeStruct((batch, 1, n_out_pad), jnp.float32),
        grid=(batch,),
        in_specs=in_specs,
        out_specs=out_spec,
        scratch_shapes=scratch,
        compiler_params=pltpu.CompilerParams(dimension_semantics=("parallel",)),
        cost_estimate=pl.CostEstimate(flops=flops, transcendentals=0,
                                      bytes_accessed=bytes_accessed),
    )

    # Layer-0 (Cin=1) im2col patch is built in the wrapper: patch0[b, k, p] = xpad[b, k+p].
    tap = jnp.arange(KMAX)[:, None] + jnp.arange(dims[0]["npos"])[None, :]

    def forward(x):
        # x: (B, 1, in_dim), NCL like the PyTorch module.
        xp = jnp.pad(x[:, 0, :], ((0, 0), (PMAX, PMAX)))            # (B, in_dim + 34)
        patch0 = jnp.take(xp, tap, axis=1).astype(jnp.bfloat16)     # (B, KMAX, 2*l2_0)
        out = fused(patch0, *const_args)
        return out[:, 0, :n_out]

    return jax.jit(forward)


def init_params(key, in_dim=21, linear_out=500, net_out=2):
    """Deterministic synthetic init (PyTorch-style uniform bounds)."""
    dims = _layer_dims(in_dim)
    params = {"inception": [], "linear": []}
    for d in dims:
        cin, cout = d["cin"], d["cout"]
        w_unified = jnp.zeros((4 * cout, cin, KMAX), jnp.float32)
        biases, branches = [], []
        for bi, k in enumerate(KSIZES):
            key, kw, kb = jax.random.split(key, 3)
            bound = 1.0 / math.sqrt(cin * k)
            w = jax.random.uniform(kw, (cout, cin, k), jnp.float32, -bound, bound)
            b = jax.random.uniform(kb, (cout,), jnp.float32, -bound, bound)
            start = PMAX - k // 2                 # embed k-tap "same" conv into K=35 kernel
            w_unified = w_unified.at[bi * cout:(bi + 1) * cout, :, start:start + k].set(w)
            biases.append(b)
            branches.append((w, b, k // 2))
        bias = jnp.concatenate(biases)            # concat order: k=1,7,21,35 (PyTorch order)
        # (4*Cout, KMAX*Cin): column index = tap * Cin + channel (tap-major, channel-minor).
        w_mat = jnp.transpose(w_unified, (0, 2, 1)).reshape(4 * cout, KMAX * cin)
        params["inception"].append({"w_mat": w_mat, "bias_col": bias.reshape(-1, 1),
                                    "branches": branches})
    lin_in = 4 * dims[-1]["cout"] * dims[-1]["l2"]        # == 80 for in_dim=21
    for (din, dout) in [(lin_in, linear_out), (linear_out, 200), (200, net_out)]:
        key, kw, kb = jax.random.split(key, 3)
        bound = 1.0 / math.sqrt(din)
        w = jax.random.uniform(kw, (din, dout), jnp.float32, -bound, bound)
        b = jax.random.uniform(kb, (1, dout), jnp.float32, -bound, bound)
        params["linear"].append((w, b))
    return params


def reference_forward(params, x):
    """Pure-JAX reference (independent path: lax.conv per branch, HIGHEST precision)."""
    for layer in params["inception"]:
        outs = []
        for (w, b, p) in layer["branches"]:
            y = lax.conv_general_dilated(
                x, w, window_strides=(1,), padding=[(p, p)],
                dimension_numbers=("NCH", "OIH", "NCH"),
                precision=lax.Precision.HIGHEST)
            outs.append(y + b[None, :, None])
        y = jnp.concatenate(outs, axis=1)
        B, C, L = y.shape
        L2 = L // 2
        y = y[:, :, :2 * L2].reshape(B, C, L2, 2).max(axis=-1)
        x = jnp.maximum(y, 0.0)
    B = x.shape[0]
    x = x.reshape(B, -1)
    n_lin = len(params["linear"])
    for i, (w, b) in enumerate(params["linear"]):
        x = jnp.dot(x, w, precision=lax.Precision.HIGHEST) + b
        if i < n_lin - 1:
            x = jnp.maximum(x, 0.0)
    return x


if __name__ == "__main__":
    key = jax.random.PRNGKey(0)
    pkey, xkey = jax.random.split(key)
    in_dim, batch = 21, 2
    params = init_params(pkey, in_dim=in_dim, linear_out=500, net_out=2)
    # Module implies input (batch, 1 channel, in_dim=21)
    x = jax.random.normal(xkey, (batch, 1, in_dim), jnp.float32)

    forward = build_inception_forward(params, batch, in_dim)
    out = jax.block_until_ready(forward(x))
    assert out.shape == (batch, 2), out.shape

    ref = jax.block_until_ready(reference_forward(params, x))
    # Kernel uses bf16 weights/activations with f32 MXU accumulation (same effective
    # precision as DEFAULT); reference is f32 HIGHEST.  Use HIGH for the MLP dots if
    # tighter accuracy is ever needed.
    assert jnp.allclose(out, ref, atol=5e-2, rtol=5e-2), (out, ref, jnp.abs(out - ref).max())

    print("KERNEL_OK")
</pallas_src>

<mosaic_0001>
module attributes {stable_mosaic.version = 11 : i64} {
  func.func @kernel(%arg0: i32, %arg1: memref<1x35x20xbf16, #tpu.memory_space<vmem>>, %arg2: memref<4x35xbf16, #tpu.memory_space<vmem>>, %arg3: memref<4x1xf32, #tpu.memory_space<vmem>>, %arg4: memref<8x140xbf16, #tpu.memory_space<vmem>>, %arg5: memref<8x1xf32, #tpu.memory_space<vmem>>, %arg6: memref<24x280xbf16, #tpu.memory_space<vmem>>, %arg7: memref<24x1xf32, #tpu.memory_space<vmem>>, %arg8: memref<80x840xbf16, #tpu.memory_space<vmem>>, %arg9: memref<80x1xf32, #tpu.memory_space<vmem>>, %arg10: memref<80x512xbf16, #tpu.memory_space<vmem>>, %arg11: memref<1x512xf32, #tpu.memory_space<vmem>>, %arg12: memref<512x256xbf16, #tpu.memory_space<vmem>>, %arg13: memref<1x256xf32, #tpu.memory_space<vmem>>, %arg14: memref<256x128xbf16, #tpu.memory_space<vmem>>, %arg15: memref<1x128xf32, #tpu.memory_space<vmem>>, %arg16: memref<1x1x128xf32, #tpu.memory_space<vmem>>, %arg17: memref<4x44xbf16, #tpu.memory_space<vmem>>, %arg18: memref<8x39xbf16, #tpu.memory_space<vmem>>, %arg19: memref<24x36xbf16, #tpu.memory_space<vmem>>, %arg20: memref<140x10xbf16, #tpu.memory_space<vmem>>, %arg21: memref<280x4xbf16, #tpu.memory_space<vmem>>, %arg22: memref<840x2xbf16, #tpu.memory_space<vmem>>) attributes {dimension_semantics = [#tpu.dimension_semantics<parallel>], iteration_bounds = array<i64: 2>, scalar_prefetch = 0 : i64, scratch_operands = 6 : i64, tpu.core_type = #tpu.core_type<tc>, window_params = [{transform_indices = @transform_0, window_bounds = array<i64: 1, 35, 20>}, {pipeline_mode = #tpu.pipeline_mode<synchronous>, transform_indices = @transform_1, window_bounds = array<i64: 4, 35>}, {pipeline_mode = #tpu.pipeline_mode<synchronous>, transform_indices = @transform_2, window_bounds = array<i64: 4, 1>}, {pipeline_mode = #tpu.pipeline_mode<synchronous>, transform_indices = @transform_3, window_bounds = array<i64: 8, 140>}, {pipeline_mode = #tpu.pipeline_mode<synchronous>, transform_indices = @transform_4, window_bounds = array<i64: 8, 1>}, {pipeline_mode = #tpu.pipeline_mode<synchronous>, transform_indices = @transform_5, window_bounds = array<i64: 24, 280>}, {pipeline_mode = #tpu.pipeline_mode<synchronous>, transform_indices = @transform_6, window_bounds = array<i64: 24, 1>}, {pipeline_mode = #tpu.pipeline_mode<synchronous>, transform_indices = @transform_7, window_bounds = array<i64: 80, 840>}, {pipeline_mode = #tpu.pipeline_mode<synchronous>, transform_indices = @transform_8, window_bounds = array<i64: 80, 1>}, {pipeline_mode = #tpu.pipeline_mode<synchronous>, transform_indices = @transform_9, window_bounds = array<i64: 80, 512>}, {pipeline_mode = #tpu.pipeline_mode<synchronous>, transform_indices = @transform_10, window_bounds = array<i64: 1, 512>}, {pipeline_mode = #tpu.pipeline_mode<synchronous>, transform_indices = @transform_11, window_bounds = array<i64: 512, 256>}, {pipeline_mode = #tpu.pipeline_mode<synchronous>, transform_indices = @transform_12, window_bounds = array<i64: 1, 256>}, {pipeline_mode = #tpu.pipeline_mode<synchronous>, transform_indices = @transform_13, window_bounds = array<i64: 256, 128>}, {pipeline_mode = #tpu.pipeline_mode<synchronous>, transform_indices = @transform_14, window_bounds = array<i64: 1, 128>}, {transform_indices = @transform_15, window_bounds = array<i64: 1, 1, 128>}]} {
    %c0 = arith.constant 0 : index
    %c0_0 = arith.constant 0 : index
    %c0_1 = arith.constant 0 : index
    %0 = vector.load %arg1[%c0, %c0_0, %c0_1] : memref<1x35x20xbf16, #tpu.memory_space<vmem>>, vector<1x35x20xbf16>
    %1 = vector.shape_cast %0 : vector<1x35x20xbf16> to vector<35x20xbf16>
    %2 = tpu.iota {dimensions = array<i32: 0>} : vector<20x20xi32>
    %3 = tpu.iota {dimensions = array<i32: 1>} : vector<20x20xi32>
    %c10_i32 = arith.constant 10 : i32
    %4 = vector.broadcast %c10_i32 : i32 to vector<20x20xi32>
    %5 = arith.cmpi slt, %3, %4 : vector<20x20xi32>
    %c2_i32 = arith.constant 2 : i32
    %6 = vector.broadcast %c2_i32 : i32 to vector<20x20xi32>
    %7 = arith.muli %6, %3 : vector<20x20xi32>
    %c10_i32_2 = arith.constant 10 : i32
    %8 = vector.broadcast %c10_i32_2 : i32 to vector<20x20xi32>
    %9 = arith.subi %3, %8 : vector<20x20xi32>
    %c2_i32_3 = arith.constant 2 : i32
    %10 = vector.broadcast %c2_i32_3 : i32 to vector<20x20xi32>
    %11 = arith.muli %10, %9 : vector<20x20xi32>
    %c1_i32 = arith.constant 1 : i32
    %12 = vector.broadcast %c1_i32 : i32 to vector<20x20xi32>
    %13 = arith.addi %11, %12 : vector<20x20xi32>
    %14 = arith.select %5, %7, %13 : vector<20x20xi1>, vector<20x20xi32>
    %15 = arith.cmpi eq, %2, %14 : vector<20x20xi32>
    %16 = arith.extui %15 : vector<20x20xi1> to vector<20x20xi32>
    %17 = arith.sitofp %16 : vector<20x20xi32> to vector<20x20xf32>
    %18 = arith.truncf %17 : vector<20x20xf32> to vector<20x20xbf16>
    %cst = arith.constant dense<0.000000e+00> : vector<35x20xf32>
    %19 = tpu.matmul %1, %18, %cst {dimension_numbers = #tpu.dot_dimension_numbers<[1], [0], [0], [1], [0, 0, 1, 1], [], []>} : vector<35x20xbf16>, vector<20x20xbf16>, vector<35x20xf32> -> vector<35x20xf32>
    %20 = arith.truncf %19 : vector<35x20xf32> to vector<35x20xbf16>
    %c0_4 = arith.constant 0 : index
    %c0_5 = arith.constant 0 : index
    %21 = vector.load %arg2[%c0_4, %c0_5] : memref<4x35xbf16, #tpu.memory_space<vmem>>, vector<4x35xbf16>
    %cst_6 = arith.constant dense<0.000000e+00> : vector<4x20xf32>
    %22 = tpu.matmul %21, %20, %cst_6 {dimension_numbers = #tpu.dot_dimension_numbers<[1], [0], [0], [1], [0, 0, 1, 1], [], []>} : vector<4x35xbf16>, vector<35x20xbf16>, vector<4x20xf32> -> vector<4x20xf32>
    %23 = vector.extract_strided_slice %22 {offsets = [0, 0], sizes = [4, 10], strides = [1, 1]} : vector<4x20xf32> to vector<4x10xf32>
    %24 = vector.extract_strided_slice %22 {offsets = [0, 10], sizes = [4, 10], strides = [1, 1]} : vector<4x20xf32> to vector<4x10xf32>
    %25 = arith.maximumf %23, %24 : vector<4x10xf32>
    %c0_7 = arith.constant 0 : index
    %c0_8 = arith.constant 0 : index
    %26 = vector.load %arg3[%c0_7, %c0_8] : memref<4x1xf32, #tpu.memory_space<vmem>>, vector<4x1xf32>
    %27 = vector.broadcast %26 : vector<4x1xf32> to vector<4x10xf32>
    %28 = arith.addf %25, %27 : vector<4x10xf32>
    %cst_9 = arith.constant 0.000000e+00 : f32
    %29 = vector.broadcast %cst_9 : f32 to vector<4x10xf32>
    %30 = arith.maximumf %28, %29 : vector<4x10xf32>
    %cst_10 = arith.constant 0.000000e+00 : bf16
    %31 = vector.broadcast %cst_10 : bf16 to vector<4x44xbf16>
    %c0_11 = arith.constant 0 : index
    %c0_12 = arith.constant 0 : index
    %32 = vector.load %arg17[%c0_11, %c0_12] : memref<4x44xbf16, #tpu.memory_space<vmem>>, vector<4x44xbf16>
    tpu.vector_store %arg17[%c0_11, %c0_12], %31 {strides = array<i32>} : memref<4x44xbf16, #tpu.memory_space<vmem>>, vector<4x44xbf16>,
    %33 = arith.truncf %30 : vector<4x10xf32> to vector<4x10xbf16>
    %c0_13 = arith.constant 0 : index
    %c17 = arith.constant 17 : index
    %34 = vector.load %arg17[%c0_13, %c17] : memref<4x44xbf16, #tpu.memory_space<vmem>>, vector<4x10xbf16>
    tpu.vector_store %arg17[%c0_13, %c17], %33 {strides = array<i32>} : memref<4x44xbf16, #tpu.memory_space<vmem>>, vector<4x10xbf16>,
    %c0_14 = arith.constant 0 : index
    %c0_15 = arith.constant 0 : index
    %35 = vector.load %arg17[%c0_14, %c0_15] : memref<4x44xbf16, #tpu.memory_space<vmem>>, vector<4x10xbf16>
    %c0_16 = arith.constant 0 : index
    %c0_17 = arith.constant 0 : index
    %36 = vector.load %arg20[%c0_16, %c0_17] : memref<140x10xbf16, #tpu.memory_space<vmem>>, vector<4x10xbf16>
    tpu.vector_store %arg20[%c0_16, %c0_17], %35 {strides = array<i32>} : memref<140x10xbf16, #tpu.memory_space<vmem>>, vector<4x10xbf16>,
    %c0_18 = arith.constant 0 : index
    %c1 = arith.constant 1 : index
    %37 = vector.load %arg17[%c0_18, %c1] : memref<4x44xbf16, #tpu.memory_space<vmem>>, vector<4x10xbf16>
    %c4 = arith.constant 4 : index
    %c0_19 = arith.constant 0 : index
    %38 = vector.load %arg20[%c4, %c0_19] : memref<140x10xbf16, #tpu.memory_space<vmem>>, vector<4x10xbf16>
    tpu.vector_store %arg20[%c4, %c0_19], %37 {strides = array<i32>} : memref<140x10xbf16, #tpu.memory_space<vmem>>, vector<4x10xbf16>,
    %c0_20 = arith.constant 0 : index
    %c2 = arith.constant 2 : index
    %39 = vector.load %arg17[%c0_20, %c2] : memref<4x44xbf16, #tpu.memory_space<vmem>>, vector<4x10xbf16>
    %c8 = arith.constant 8 : index
    %c0_21 = arith.constant 0 : index
    %40 = vector.load %arg20[%c8, %c0_21] : memref<140x10xbf16, #tpu.memory_space<vmem>>, vector<4x10xbf16>
    tpu.vector_store %arg20[%c8, %c0_21], %39 {strides = array<i32>} : memref<140x10xbf16, #tpu.memory_space<vmem>>, vector<4x10xbf16>,
    %c0_22 = arith.constant 0 : index
    %c3 = arith.constant 3 : index
    %41 = vector.load %arg17[%c0_22, %c3] : memref<4x44xbf16, #tpu.memory_space<vmem>>, vector<4x10xbf16>
    %c12 = arith.constant 12 : index
    %c0_23 = arith.constant 0 : index
    %42 = vector.load %arg20[%c12, %c0_23] : memref<140x10xbf16, #tpu.memory_space<vmem>>, vector<4x10xbf16>
    tpu.vector_store %arg20[%c12, %c0_23], %41 {strides = array<i32>} : memref<140x10xbf16, #tpu.memory_space<vmem>>, vector<4x10xbf16>,
    %c0_24 = arith.constant 0 : index
    %c4_25 = arith.constant 4 : index
    %43 = vector.load %arg17[%c0_24, %c4_25] : memref<4x44xbf16, #tpu.memory_space<vmem>>, vector<4x10xbf16>
    %c16 = arith.constant 16 : index
    %c0_26 = arith.constant 0 : index
    %44 = vector.load %arg20[%c16, %c0_26] : memref<140x10xbf16, #tpu.memory_space<vmem>>, vector<4x10xbf16>
    tpu.vector_store %arg20[%c16, %c0_26], %43 {strides = array<i32>} : memref<140x10xbf16, #tpu.memory_space<vmem>>, vector<4x10xbf16>,
    %c0_27 = arith.constant 0 : index
    %c5 = arith.constant 5 : index
    %45 = vector.load %arg17[%c0_27, %c5] : memref<4x44xbf16, #tpu.memory_space<vmem>>, vector<4x10xbf16>
    %c20 = arith.constant 20 : index
    %c0_28 = arith.constant 0 : index
    %46 = vector.load %arg20[%c20, %c0_28] : memref<140x10xbf16, #tpu.memory_space<vmem>>, vector<4x10xbf16>
    tpu.vector_store %arg20[%c20, %c0_28], %45 {strides = array<i32>} : memref<140x10xbf16, #tpu.memory_space<vmem>>, vector<4x10xbf16>,
    %c0_29 = arith.constant 0 : index
    %c6 = arith.constant 6 : index
    %47 = vector.load %arg17[%c0_29, %c6] : memref<4x44xbf16, #tpu.memory_space<vmem>>, vector<4x10xbf16>
    %c24 = arith.constant 24 : index
    %c0_30 = arith.constant 0 : index
    %48 = vector.load %arg20[%c24, %c0_30] : memref<140x10xbf16, #tpu.memory_space<vmem>>, vector<4x10xbf16>
    tpu.vector_store %arg20[%c24, %c0_30], %47 {strides = array<i32>} : memref<140x10xbf16, #tpu.memory_space<vmem>>, vector<4x10xbf16>,
    %c0_31 = arith.constant 0 : index
    %c7 = arith.constant 7 : index
    %49 = vector.load %arg17[%c0_31, %c7] : memref<4x44xbf16, #tpu.memory_space<vmem>>, vector<4x10xbf16>
    %c28 = arith.constant 28 : index
    %c0_32 = arith.constant 0 : index
    %50 = vector.load %arg20[%c28, %c0_32] : memref<140x10xbf16, #tpu.memory_space<vmem>>, vector<4x10xbf16>
    tpu.vector_store %arg20[%c28, %c0_32], %49 {strides = array<i32>} : memref<140x10xbf16, #tpu.memory_space<vmem>>, vector<4x10xbf16>,
    %c0_33 = arith.constant 0 : index
    %c8_34 = arith.constant 8 : index
    %51 = vector.load %arg17[%c0_33, %c8_34] : memref<4x44xbf16, #tpu.memory_space<vmem>>, vector<4x10xbf16>
    %c32 = arith.constant 32 : index
    %c0_35 = arith.constant 0 : index
    %52 = vector.load %arg20[%c32, %c0_35] : memref<140x10xbf16, #tpu.memory_space<vmem>>, vector<4x10xbf16>
    tpu.vector_store %arg20[%c32, %c0_35], %51 {strides = array<i32>} : memref<140x10xbf16, #tpu.memory_space<vmem>>, vector<4x10xbf16>,
    %c0_36 = arith.constant 0 : index
    %c9 = arith.constant 9 : index
    %53 = vector.load %arg17[%c0_36, %c9] : memref<4x44xbf16, #tpu.memory_space<vmem>>, vector<4x10xbf16>
    %c36 = arith.constant 36 : index
    %c0_37 = arith.constant 0 : index
    %54 = vector.load %arg20[%c36, %c0_37] : memref<140x10xbf16, #tpu.memory_space<vmem>>, vector<4x10xbf16>
    tpu.vector_store %arg20[%c36, %c0_37], %53 {strides = array<i32>} : memref<140x10xbf16, #tpu.memory_space<vmem>>, vector<4x10xbf16>,
    %c0_38 = arith.constant 0 : index
    %c10 = arith.constant 10 : index
    %55 = vector.load %arg17[%c0_38, %c10] : memref<4x44xbf16, #tpu.memory_space<vmem>>, vector<4x10xbf16>
    %c40 = arith.constant 40 : index
    %c0_39 = arith.constant 0 : index
    %56 = vector.load %arg20[%c40, %c0_39] : memref<140x10xbf16, #tpu.memory_space<vmem>>, vector<4x10xbf16>
    tpu.vector_store %arg20[%c40, %c0_39], %55 {strides = array<i32>} : memref<140x10xbf16, #tpu.memory_space<vmem>>, vector<4x10xbf16>,
    %c0_40 = arith.constant 0 : index
    %c11 = arith.constant 11 : index
    %57 = vector.load %arg17[%c0_40, %c11] : memref<4x44xbf16, #tpu.memory_space<vmem>>, vector<4x10xbf16>
    %c44 = arith.constant 44 : index
    %c0_41 = arith.constant 0 : index
    %58 = vector.load %arg20[%c44, %c0_41] : memref<140x10xbf16, #tpu.memory_space<vmem>>, vector<4x10xbf16>
    tpu.vector_store %arg20[%c44, %c0_41], %57 {strides = array<i32>} : memref<140x10xbf16, #tpu.memory_space<vmem>>, vector<4x10xbf16>,
    %c0_42 = arith.constant 0 : index
    %c12_43 = arith.constant 12 : index
    %59 = vector.load %arg17[%c0_42, %c12_43] : memref<4x44xbf16, #tpu.memory_space<vmem>>, vector<4x10xbf16>
    %c48 = arith.constant 48 : index
    %c0_44 = arith.constant 0 : index
    %60 = vector.load %arg20[%c48, %c0_44] : memref<140x10xbf16, #tpu.memory_space<vmem>>, vector<4x10xbf16>
    tpu.vector_store %arg20[%c48, %c0_44], %59 {strides = array<i32>} : memref<140x10xbf16, #tpu.memory_space<vmem>>, vector<4x10xbf16>,
    %c0_45 = arith.constant 0 : index
    %c13 = arith.constant 13 : index
    %61 = vector.load %arg17[%c0_45, %c13] : memref<4x44xbf16, #tpu.memory_space<vmem>>, vector<4x10xbf16>
    %c52 = arith.constant 52 : index
    %c0_46 = arith.constant 0 : index
    %62 = vector.load %arg20[%c52, %c0_46] : memref<140x10xbf16, #tpu.memory_space<vmem>>, vector<4x10xbf16>
    tpu.vector_store %arg20[%c52, %c0_46], %61 {strides = array<i32>} : memref<140x10xbf16, #tpu.memory_space<vmem>>, vector<4x10xbf16>,
    %c0_47 = arith.constant 0 : index
    %c14 = arith.constant 14 : index
    %63 = vector.load %arg17[%c0_47, %c14] : memref<4x44xbf16, #tpu.memory_space<vmem>>, vector<4x10xbf16>
    %c56 = arith.constant 56 : index
    %c0_48 = arith.constant 0 : index
    %64 = vector.load %arg20[%c56, %c0_48] : memref<140x10xbf16, #tpu.memory_space<vmem>>, vector<4x10xbf16>
    tpu.vector_store %arg20[%c56, %c0_48], %63 {strides = array<i32>} : memref<140x10xbf16, #tpu.memory_space<vmem>>, vector<4x10xbf16>,
    %c0_49 = arith.constant 0 : index
    %c15 = arith.constant 15 : index
    %65 = vector.load %arg17[%c0_49, %c15] : memref<4x44xbf16, #tpu.memory_space<vmem>>, vector<4x10xbf16>
    %c60 = arith.constant 60 : index
    %c0_50 = arith.constant 0 : index
    %66 = vector.load %arg20[%c60, %c0_50] : memref<140x10xbf16, #tpu.memory_space<vmem>>, vector<4x10xbf16>
    tpu.vector_store %arg20[%c60, %c0_50], %65 {strides = array<i32>} : memref<140x10xbf16, #tpu.memory_space<vmem>>, vector<4x10xbf16>,
    %c0_51 = arith.constant 0 : index
    %c16_52 = arith.constant 16 : index
    %67 = vector.load %arg17[%c0_51, %c16_52] : memref<4x44xbf16, #tpu.memory_space<vmem>>, vector<4x10xbf16>
    %c64 = arith.constant 64 : index
    %c0_53 = arith.constant 0 : index
    %68 = vector.load %arg20[%c64, %c0_53] : memref<140x10xbf16, #tpu.memory_space<vmem>>, vector<4x10xbf16>
    tpu.vector_store %arg20[%c64, %c0_53], %67 {strides = array<i32>} : memref<140x10xbf16, #tpu.memory_space<vmem>>, vector<4x10xbf16>,
    %c0_54 = arith.constant 0 : index
    %c17_55 = arith.constant 17 : index
    %69 = vector.load %arg17[%c0_54, %c17_55] : memref<4x44xbf16, #tpu.memory_space<vmem>>, vector<4x10xbf16>
    %c68 = arith.constant 68 : index
    %c0_56 = arith.constant 0 : index
    %70 = vector.load %arg20[%c68, %c0_56] : memref<140x10xbf16, #tpu.memory_space<vmem>>, vector<4x10xbf16>
    tpu.vector_store %arg20[%c68, %c0_56], %69 {strides = array<i32>} : memref<140x10xbf16, #tpu.memory_space<vmem>>, vector<4x10xbf16>,
    %c0_57 = arith.constant 0 : index
    %c18 = arith.constant 18 : index
    %71 = vector.load %arg17[%c0_57, %c18] : memref<4x44xbf16, #tpu.memory_space<vmem>>, vector<4x10xbf16>
    %c72 = arith.constant 72 : index
    %c0_58 = arith.constant 0 : index
    %72 = vector.load %arg20[%c72, %c0_58] : memref<140x10xbf16, #tpu.memory_space<vmem>>, vector<4x10xbf16>
    tpu.vector_store %arg20[%c72, %c0_58], %71 {strides = array<i32>} : memref<140x10xbf16, #tpu.memory_space<vmem>>, vector<4x10xbf16>,
    %c0_59 = arith.constant 0 : index
    %c19 = arith.constant 19 : index
    %73 = vector.load %arg17[%c0_59, %c19] : memref<4x44xbf16, #tpu.memory_space<vmem>>, vector<4x10xbf16>
    %c76 = arith.constant 76 : index
    %c0_60 = arith.constant 0 : index
    %74 = vector.load %arg20[%c76, %c0_60] : memref<140x10xbf16, #tpu.memory_space<vmem>>, vector<4x10xbf16>
    tpu.vector_store %arg20[%c76, %c0_60], %73 {strides = array<i32>} : memref<140x10xbf16, #tpu.memory_space<vmem>>, vector<4x10xbf16>,
    %c0_61 = arith.constant 0 : index
    %c20_62 = arith.constant 20 : index
    %75 = vector.load %arg17[%c0_61, %c20_62] : memref<4x44xbf16, #tpu.memory_space<vmem>>, vector<4x10xbf16>
    %c80 = arith.constant 80 : index
    %c0_63 = arith.constant 0 : index
    %76 = vector.load %arg20[%c80, %c0_63] : memref<140x10xbf16, #tpu.memory_space<vmem>>, vector<4x10xbf16>
    tpu.vector_store %arg20[%c80, %c0_63], %75 {strides = array<i32>} : memref<140x10xbf16, #tpu.memory_space<vmem>>, vector<4x10xbf16>,
    %c0_64 = arith.constant 0 : index
    %c21 = arith.constant 21 : index
    %77 = vector.load %arg17[%c0_64, %c21] : memref<4x44xbf16, #tpu.memory_space<vmem>>, vector<4x10xbf16>
    %c84 = arith.constant 84 : index
    %c0_65 = arith.constant 0 : index
    %78 = vector.load %arg20[%c84, %c0_65] : memref<140x10xbf16, #tpu.memory_space<vmem>>, vector<4x10xbf16>
    tpu.vector_store %arg20[%c84, %c0_65], %77 {strides = array<i32>} : memref<140x10xbf16, #tpu.memory_space<vmem>>, vector<4x10xbf16>,
    %c0_66 = arith.constant 0 : index
    %c22 = arith.constant 22 : index
    %79 = vector.load %arg17[%c0_66, %c22] : memref<4x44xbf16, #tpu.memory_space<vmem>>, vector<4x10xbf16>
    %c88 = arith.constant 88 : index
    %c0_67 = arith.constant 0 : index
    %80 = vector.load %arg20[%c88, %c0_67] : memref<140x10xbf16, #tpu.memory_space<vmem>>, vector<4x10xbf16>
    tpu.vector_store %arg20[%c88, %c0_67], %79 {strides = array<i32>} : memref<140x10xbf16, #tpu.memory_space<vmem>>, vector<4x10xbf16>,
    %c0_68 = arith.constant 0 : index
    %c23 = arith.constant 23 : index
    %81 = vector.load %arg17[%c0_68, %c23] : memref<4x44xbf16, #tpu.memory_space<vmem>>, vector<4x10xbf16>
    %c92 = arith.constant 92 : index
    %c0_69 = arith.constant 0 : index
    %82 = vector.load %arg20[%c92, %c0_69] : memref<140x10xbf16, #tpu.memory_space<vmem>>, vector<4x10xbf16>
    tpu.vector_store %arg20[%c92, %c0_69], %81 {strides = array<i32>} : memref<140x10xbf16, #tpu.memory_space<vmem>>, vector<4x10xbf16>,
    %c0_70 = arith.constant 0 : index
    %c24_71 = arith.constant 24 : index
    %83 = vector.load %arg17[%c0_70, %c24_71] : memref<4x44xbf16, #tpu.memory_space<vmem>>, vector<4x10xbf16>
    %c96 = arith.constant 96 : index
    %c0_72 = arith.constant 0 : index
    %84 = vector.load %arg20[%c96, %c0_72] : memref<140x10xbf16, #tpu.memory_space<vmem>>, vector<4x10xbf16>
    tpu.vector_store %arg20[%c96, %c0_72], %83 {strides = array<i32>} : memref<140x10xbf16, #tpu.memory_space<vmem>>, vector<4x10xbf16>,
    %c0_73 = arith.constant 0 : index
    %c25 = arith.constant 25 : index
    %85 = vector.load %arg17[%c0_73, %c25] : memref<4x44xbf16, #tpu.memory_space<vmem>>, vector<4x10xbf16>
    %c100 = arith.constant 100 : index
    %c0_74 = arith.constant 0 : index
    %86 = vector.load %arg20[%c100, %c0_74] : memref<140x10xbf16, #tpu.memory_space<vmem>>, vector<4x10xbf16>
    tpu.vector_store %arg20[%c100, %c0_74], %85 {strides = array<i32>} : memref<140x10xbf16, #tpu.memory_space<vmem>>, vector<4x10xbf16>,
    %c0_75 = arith.constant 0 : index
    %c26 = arith.constant 26 : index
    %87 = vector.load %arg17[%c0_75, %c26] : memref<4x44xbf16, #tpu.memory_space<vmem>>, vector<4x10xbf16>
    %c104 = arith.constant 104 : index
    %c0_76 = arith.constant 0 : index
    %88 = vector.load %arg20[%c104, %c0_76] : memref<140x10xbf16, #tpu.memory_space<vmem>>, vector<4x10xbf16>
    tpu.vector_store %arg20[%c104, %c0_76], %87 {strides = array<i32>} : memref<140x10xbf16, #tpu.memory_space<vmem>>, vector<4x10xbf16>,
    %c0_77 = arith.constant 0 : index
    %c27 = arith.constant 27 : index
    %89 = vector.load %arg17[%c0_77, %c27] : memref<4x44xbf16, #tpu.memory_space<vmem>>, vector<4x10xbf16>
    %c108 = arith.constant 108 : index
    %c0_78 = arith.constant 0 : index
    %90 = vector.load %arg20[%c108, %c0_78] : memref<140x10xbf16, #tpu.memory_space<vmem>>, vector<4x10xbf16>
    tpu.vector_store %arg20[%c108, %c0_78], %89 {strides = array<i32>} : memref<140x10xbf16, #tpu.memory_space<vmem>>, vector<4x10xbf16>,
    %c0_79 = arith.constant 0 : index
    %c28_80 = arith.constant 28 : index
    %91 = vector.load %arg17[%c0_79, %c28_80] : memref<4x44xbf16, #tpu.memory_space<vmem>>, vector<4x10xbf16>
    %c112 = arith.constant 112 : index
    %c0_81 = arith.constant 0 : index
    %92 = vector.load %arg20[%c112, %c0_81] : memref<140x10xbf16, #tpu.memory_space<vmem>>, vector<4x10xbf16>
    tpu.vector_store %arg20[%c112, %c0_81], %91 {strides = array<i32>} : memref<140x10xbf16, #tpu.memory_space<vmem>>, vector<4x10xbf16>,
    %c0_82 = arith.constant 0 : index
    %c29 = arith.constant 29 : index
    %93 = vector.load %arg17[%c0_82, %c29] : memref<4x44xbf16, #tpu.memory_space<vmem>>, vector<4x10xbf16>
    %c116 = arith.constant 116 : index
    %c0_83 = arith.constant 0 : index
    %94 = vector.load %arg20[%c116, %c0_83] : memref<140x10xbf16, #tpu.memory_space<vmem>>, vector<4x10xbf16>
    tpu.vector_store %arg20[%c116, %c0_83], %93 {strides = array<i32>} : memref<140x10xbf16, #tpu.memory_space<vmem>>, vector<4x10xbf16>,
    %c0_84 = arith.constant 0 : index
    %c30 = arith.constant 30 : index
    %95 = vector.load %arg17[%c0_84, %c30] : memref<4x44xbf16, #tpu.memory_space<vmem>>, vector<4x10xbf16>
    %c120 = arith.constant 120 : index
    %c0_85 = arith.constant 0 : index
    %96 = vector.load %arg20[%c120, %c0_85] : memref<140x10xbf16, #tpu.memory_space<vmem>>, vector<4x10xbf16>
    tpu.vector_store %arg20[%c120, %c0_85], %95 {strides = array<i32>} : memref<140x10xbf16, #tpu.memory_space<vmem>>, vector<4x10xbf16>,
    %c0_86 = arith.constant 0 : index
    %c31 = arith.constant 31 : index
    %97 = vector.load %arg17[%c0_86, %c31] : memref<4x44xbf16, #tpu.memory_space<vmem>>, vector<4x10xbf16>
    %c124 = arith.constant 124 : index
    %c0_87 = arith.constant 0 : index
    %98 = vector.load %arg20[%c124, %c0_87] : memref<140x10xbf16, #tpu.memory_space<vmem>>, vector<4x10xbf16>
    tpu.vector_store %arg20[%c124, %c0_87], %97 {strides = array<i32>} : memref<140x10xbf16, #tpu.memory_space<vmem>>, vector<4x10xbf16>,
    %c0_88 = arith.constant 0 : index
    %c32_89 = arith.constant 32 : index
    %99 = vector.load %arg17[%c0_88, %c32_89] : memref<4x44xbf16, #tpu.memory_space<vmem>>, vector<4x10xbf16>
    %c128 = arith.constant 128 : index
    %c0_90 = arith.constant 0 : index
    %100 = vector.load %arg20[%c128, %c0_90] : memref<140x10xbf16, #tpu.memory_space<vmem>>, vector<4x10xbf16>
    tpu.vector_store %arg20[%c128, %c0_90], %99 {strides = array<i32>} : memref<140x10xbf16, #tpu.memory_space<vmem>>, vector<4x10xbf16>,
    %c0_91 = arith.constant 0 : index
    %c33 = arith.constant 33 : index
    %101 = vector.load %arg17[%c0_91, %c33] : memref<4x44xbf16, #tpu.memory_space<vmem>>, vector<4x10xbf16>
    %c132 = arith.constant 132 : index
    %c0_92 = arith.constant 0 : index
    %102 = vector.load %arg20[%c132, %c0_92] : memref<140x10xbf16, #tpu.memory_space<vmem>>, vector<4x10xbf16>
    tpu.vector_store %arg20[%c132, %c0_92], %101 {strides = array<i32>} : memref<140x10xbf16, #tpu.memory_space<vmem>>, vector<4x10xbf16>,
    %c0_93 = arith.constant 0 : index
    %c34 = arith.constant 34 : index
    %103 = vector.load %arg17[%c0_93, %c34] : memref<4x44xbf16, #tpu.memory_space<vmem>>, vector<4x10xbf16>
    %c136 = arith.constant 136 : index
    %c0_94 = arith.constant 0 : index
    %104 = vector.load %arg20[%c136, %c0_94] : memref<140x10xbf16, #tpu.memory_space<vmem>>, vector<4x10xbf16>
    tpu.vector_store %arg20[%c136, %c0_94], %103 {strides = array<i32>} : memref<140x10xbf16, #tpu.memory_space<vmem>>, vector<4x10xbf16>,
    %c0_95 = arith.constant 0 : index
    %c0_96 = arith.constant 0 : index
    %105 = vector.load %arg20[%c0_95, %c0_96] : memref<140x10xbf16, #tpu.memory_space<vmem>>, vector<140x10xbf16>
    %106 = tpu.iota {dimensions = array<i32: 0>} : vector<10x10xi32>
    %107 = tpu.iota {dimensions = array<i32: 1>} : vector<10x10xi32>
    %c5_i32 = arith.constant 5 : i32
    %108 = vector.broadcast %c5_i32 : i32 to vector<10x10xi32>
    %109 = arith.cmpi slt, %107, %108 : vector<10x10xi32>
    %c2_i32_97 = arith.constant 2 : i32
    %110 = vector.broadcast %c2_i32_97 : i32 to vector<10x10xi32>
    %111 = arith.muli %110, %107 : vector<10x10xi32>
    %c5_i32_98 = arith.constant 5 : i32
    %112 = vector.broadcast %c5_i32_98 : i32 to vector<10x10xi32>
    %113 = arith.subi %107, %112 : vector<10x10xi32>
    %c2_i32_99 = arith.constant 2 : i32
    %114 = vector.broadcast %c2_i32_99 : i32 to vector<10x10xi32>
    %115 = arith.muli %114, %113 : vector<10x10xi32>
    %c1_i32_100 = arith.constant 1 : i32
    %116 = vector.broadcast %c1_i32_100 : i32 to vector<10x10xi32>
    %117 = arith.addi %115, %116 : vector<10x10xi32>
    %118 = arith.select %109, %111, %117 : vector<10x10xi1>, vector<10x10xi32>
    %119 = arith.cmpi eq, %106, %118 : vector<10x10xi32>
    %120 = arith.extui %119 : vector<10x10xi1> to vector<10x10xi32>
    %121 = arith.sitofp %120 : vector<10x10xi32> to vector<10x10xf32>
    %122 = arith.truncf %121 : vector<10x10xf32> to vector<10x10xbf16>
    %cst_101 = arith.constant dense<0.000000e+00> : vector<140x10xf32>
    %123 = tpu.matmul %105, %122, %cst_101 {dimension_numbers = #tpu.dot_dimension_numbers<[1], [0], [0], [1], [0, 0, 1, 1], [], []>} : vector<140x10xbf16>, vector<10x10xbf16>, vector<140x10xf32> -> vector<140x10xf32>
    %124 = arith.truncf %123 : vector<140x10xf32> to vector<140x10xbf16>
    %c0_102 = arith.constant 0 : index
    %c0_103 = arith.constant 0 : index
    %125 = vector.load %arg4[%c0_102, %c0_103] : memref<8x140xbf16, #tpu.memory_space<vmem>>, vector<8x140xbf16>
    %cst_104 = arith.constant dense<0.000000e+00> : vector<8x10xf32>
    %126 = tpu.matmul %125, %124, %cst_104 {dimension_numbers = #tpu.dot_dimension_numbers<[1], [0], [0], [1], [0, 0, 1, 1], [], []>} : vector<8x140xbf16>, vector<140x10xbf16>, vector<8x10xf32> -> vector<8x10xf32>
    %127 = vector.extract_strided_slice %126 {offsets = [0, 0], sizes = [8, 5], strides = [1, 1]} : vector<8x10xf32> to vector<8x5xf32>
    %128 = vector.extract_strided_slice %126 {offsets = [0, 5], sizes = [8, 5], strides = [1, 1]} : vector<8x10xf32> to vector<8x5xf32>
    %129 = arith.maximumf %127, %128 : vector<8x5xf32>
    %c0_105 = arith.constant 0 : index
    %c0_106 = arith.constant 0 : index
    %130 = vector.load %arg5[%c0_105, %c0_106] : memref<8x1xf32, #tpu.memory_space<vmem>>, vector<8x1xf32>
    %131 = vector.broadcast %130 : vector<8x1xf32> to vector<8x5xf32>
    %132 = arith.addf %129, %131 : vector<8x5xf32>
    %cst_107 = arith.constant 0.000000e+00 : f32
    %133 = vector.broadcast %cst_107 : f32 to vector<8x5xf32>
    %134 = arith.maximumf %132, %133 : vector<8x5xf32>
    %cst_108 = arith.constant 0.000000e+00 : bf16
    %135 = vector.broadcast %cst_108 : bf16 to vector<8x39xbf16>
    %c0_109 = arith.constant 0 : index
    %c0_110 = arith.constant 0 : index
    %136 = vector.load %arg18[%c0_109, %c0_110] : memref<8x39xbf16, #tpu.memory_space<vmem>>, vector<8x39xbf16>
    tpu.vector_store %arg18[%c0_109, %c0_110], %135 {strides = array<i32>} : memref<8x39xbf16, #tpu.memory_space<vmem>>, vector<8x39xbf16>,
    %137 = arith.truncf %134 : vector<8x5xf32> to vector<8x5xbf16>
    %c0_111 = arith.constant 0 : index
    %c17_112 = arith.constant 17 : index
    %138 = vector.load %arg18[%c0_111, %c17_112] : memref<8x39xbf16, #tpu.memory_space<vmem>>, vector<8x5xbf16>
    tpu.vector_store %arg18[%c0_111, %c17_112], %137 {strides = array<i32>} : memref<8x39xbf16, #tpu.memory_space<vmem>>, vector<8x5xbf16>,
    %c0_113 = arith.constant 0 : index
    %c0_114 = arith.constant 0 : index
    %139 = vector.load %arg18[%c0_113, %c0_114] : memref<8x39xbf16, #tpu.memory_space<vmem>>, vector<8x4xbf16>
    %c0_115 = arith.constant 0 : index
    %c0_116 = arith.constant 0 : index
    %140 = vector.load %arg21[%c0_115, %c0_116] : memref<280x4xbf16, #tpu.memory_space<vmem>>, vector<8x4xbf16>
    tpu.vector_store %arg21[%c0_115, %c0_116], %139 {strides = array<i32>} : memref<280x4xbf16, #tpu.memory_space<vmem>>, vector<8x4xbf16>,
    %c0_117 = arith.constant 0 : index
    %c1_118 = arith.constant 1 : index
    %141 = vector.load %arg18[%c0_117, %c1_118] : memref<8x39xbf16, #tpu.memory_space<vmem>>, vector<8x4xbf16>
    %c8_119 = arith.constant 8 : index
    %c0_120 = arith.constant 0 : index
    %142 = vector.load %arg21[%c8_119, %c0_120] : memref<280x4xbf16, #tpu.memory_space<vmem>>, vector<8x4xbf16>
    tpu.vector_store %arg21[%c8_119, %c0_120], %141 {strides = array<i32>} : memref<280x4xbf16, #tpu.memory_space<vmem>>, vector<8x4xbf16>,
    %c0_121 = arith.constant 0 : index
    %c2_122 = arith.constant 2 : index
    %143 = vector.load %arg18[%c0_121, %c2_122] : memref<8x39xbf16, #tpu.memory_space<vmem>>, vector<8x4xbf16>
    %c16_123 = arith.constant 16 : index
    %c0_124 = arith.constant 0 : index
    %144 = vector.load %arg21[%c16_123, %c0_124] : memref<280x4xbf16, #tpu.memory_space<vmem>>, vector<8x4xbf16>
    tpu.vector_store %arg21[%c16_123, %c0_124], %143 {strides = array<i32>} : memref<280x4xbf16, #tpu.memory_space<vmem>>, vector<8x4xbf16>,
    %c0_125 = arith.constant 0 : index
    %c3_126 = arith.constant 3 : index
    %145 = vector.load %arg18[%c0_125, %c3_126] : memref<8x39xbf16, #tpu.memory_space<vmem>>, vector<8x4xbf16>
    %c24_127 = arith.constant 24 : index
    %c0_128 = arith.constant 0 : index
    %146 = vector.load %arg21[%c24_127, %c0_128] : memref<280x4xbf16, #tpu.memory_space<vmem>>, vector<8x4xbf16>
    tpu.vector_store %arg21[%c24_127, %c0_128], %145 {strides = array<i32>} : memref<280x4xbf16, #tpu.memory_space<vmem>>, vector<8x4xbf16>,
    %c0_129 = arith.constant 0 : index
    %c4_130 = arith.constant 4 : index
    %147 = vector.load %arg18[%c0_129, %c4_130] : memref<8x39xbf16, #tpu.memory_space<vmem>>, vector<8x4xbf16>
    %c32_131 = arith.constant 32 : index
    %c0_132 = arith.constant 0 : index
    %148 = vector.load %arg21[%c32_131, %c0_132] : memref<280x4xbf16, #tpu.memory_space<vmem>>, vector<8x4xbf16>
    tpu.vector_store %arg21[%c32_131, %c0_132], %147 {strides = array<i32>} : memref<280x4xbf16, #tpu.memory_space<vmem>>, vector<8x4xbf16>,
    %c0_133 = arith.constant 0 : index
    %c5_134 = arith.constant 5 : index
    %149 = vector.load %arg18[%c0_133, %c5_134] : memref<8x39xbf16, #tpu.memory_space<vmem>>, vector<8x4xbf16>
    %c40_135 = arith.constant 40 : index
    %c0_136 = arith.constant 0 : index
    %150 = vector.load %arg21[%c40_135, %c0_136] : memref<280x4xbf16, #tpu.memory_space<vmem>>, vector<8x4xbf16>
    tpu.vector_store %arg21[%c40_135, %c0_136], %149 {strides = array<i32>} : memref<280x4xbf16, #tpu.memory_space<vmem>>, vector<8x4xbf16>,
    %c0_137 = arith.constant 0 : index
    %c6_138 = arith.constant 6 : index
    %151 = vector.load %arg18[%c0_137, %c6_138] : memref<8x39xbf16, #tpu.memory_space<vmem>>, vector<8x4xbf16>
    %c48_139 = arith.constant 48 : index
    %c0_140 = arith.constant 0 : index
    %152 = vector.load %arg21[%c48_139, %c0_140] : memref<280x4xbf16, #tpu.memory_space<vmem>>, vector<8x4xbf16>
    tpu.vector_store %arg21[%c48_139, %c0_140], %151 {strides = array<i32>} : memref<280x4xbf16, #tpu.memory_space<vmem>>, vector<8x4xbf16>,
    %c0_141 = arith.constant 0 : index
    %c7_142 = arith.constant 7 : index
    %153 = vector.load %arg18[%c0_141, %c7_142] : memref<8x39xbf16, #tpu.memory_space<vmem>>, vector<8x4xbf16>
    %c56_143 = arith.constant 56 : index
    %c0_144 = arith.constant 0 : index
    %154 = vector.load %arg21[%c56_143, %c0_144] : memref<280x4xbf16, #tpu.memory_space<vmem>>, vector<8x4xbf16>
    tpu.vector_store %arg21[%c56_143, %c0_144], %153 {strides = array<i32>} : memref<280x4xbf16, #tpu.memory_space<vmem>>, vector<8x4xbf16>,
    %c0_145 = arith.constant 0 : index
    %c8_146 = arith.constant 8 : index
    %155 = vector.load %arg18[%c0_145, %c8_146] : memref<8x39xbf16, #tpu.memory_space<vmem>>, vector<8x4xbf16>
    %c64_147 = arith.constant 64 : index
    %c0_148 = arith.constant 0 : index
    %156 = vector.load %arg21[%c64_147, %c0_148] : memref<280x4xbf16, #tpu.memory_space<vmem>>, vector<8x4xbf16>
    tpu.vector_store %arg21[%c64_147, %c0_148], %155 {strides = array<i32>} : memref<280x4xbf16, #tpu.memory_space<vmem>>, vector<8x4xbf16>,
    %c0_149 = arith.constant 0 : index
    %c9_150 = arith.constant 9 : index
    %157 = vector.load %arg18[%c0_149, %c9_150] : memref<8x39xbf16, #tpu.memory_space<vmem>>, vector<8x4xbf16>
    %c72_151 = arith.constant 72 : index
    %c0_152 = arith.constant 0 : index
    %158 = vector.load %arg21[%c72_151, %c0_152] : memref<280x4xbf16, #tpu.memory_space<vmem>>, vector<8x4xbf16>
    tpu.vector_store %arg21[%c72_151, %c0_152], %157 {strides = array<i32>} : memref<280x4xbf16, #tpu.memory_space<vmem>>, vector<8x4xbf16>,
    %c0_153 = arith.constant 0 : index
    %c10_154 = arith.constant 10 : index
    %159 = vector.load %arg18[%c0_153, %c10_154] : memref<8x39xbf16, #tpu.memory_space<vmem>>, vector<8x4xbf16>
    %c80_155 = arith.constant 80 : index
    %c0_156 = arith.constant 0 : index
    %160 = vector.load %arg21[%c80_155, %c0_156] : memref<280x4xbf16, #tpu.memory_space<vmem>>, vector<8x4xbf16>
    tpu.vector_store %arg21[%c80_155, %c0_156], %159 {strides = array<i32>} : memref<280x4xbf16, #tpu.memory_space<vmem>>, vector<8x4xbf16>,
    %c0_157 = arith.constant 0 : index
    %c11_158 = arith.constant 11 : index
    %161 = vector.load %arg18[%c0_157, %c11_158] : memref<8x39xbf16, #tpu.memory_space<vmem>>, vector<8x4xbf16>
    %c88_159 = arith.constant 88 : index
    %c0_160 = arith.constant 0 : index
    %162 = vector.load %arg21[%c88_159, %c0_160] : memref<280x4xbf16, #tpu.memory_space<vmem>>, vector<8x4xbf16>
    tpu.vector_store %arg21[%c88_159, %c0_160], %161 {strides = array<i32>} : memref<280x4xbf16, #tpu.memory_space<vmem>>, vector<8x4xbf16>,
    %c0_161 = arith.constant 0 : index
    %c12_162 = arith.constant 12 : index
    %163 = vector.load %arg18[%c0_161, %c12_162] : memref<8x39xbf16, #tpu.memory_space<vmem>>, vector<8x4xbf16>
    %c96_163 = arith.constant 96 : index
    %c0_164 = arith.constant 0 : index
    %164 = vector.load %arg21[%c96_163, %c0_164] : memref<280x4xbf16, #tpu.memory_space<vmem>>, vector<8x4xbf16>
    tpu.vector_store %arg21[%c96_163, %c0_164], %163 {strides = array<i32>} : memref<280x4xbf16, #tpu.memory_space<vmem>>, vector<8x4xbf16>,
    %c0_165 = arith.constant 0 : index
    %c13_166 = arith.constant 13 : index
    %165 = vector.load %arg18[%c0_165, %c13_166] : memref<8x39xbf16, #tpu.memory_space<vmem>>, vector<8x4xbf16>
    %c104_167 = arith.constant 104 : index
    %c0_168 = arith.constant 0 : index
    %166 = vector.load %arg21[%c104_167, %c0_168] : memref<280x4xbf16, #tpu.memory_space<vmem>>, vector<8x4xbf16>
    tpu.vector_store %arg21[%c104_167, %c0_168], %165 {strides = array<i32>} : memref<280x4xbf16, #tpu.memory_space<vmem>>, vector<8x4xbf16>,
    %c0_169 = arith.constant 0 : index
    %c14_170 = arith.constant 14 : index
    %167 = vector.load %arg18[%c0_169, %c14_170] : memref<8x39xbf16, #tpu.memory_space<vmem>>, vector<8x4xbf16>
    %c112_171 = arith.constant 112 : index
    %c0_172 = arith.constant 0 : index
    %168 = vector.load %arg21[%c112_171, %c0_172] : memref<280x4xbf16, #tpu.memory_space<vmem>>, vector<8x4xbf16>
    tpu.vector_store %arg21[%c112_171, %c0_172], %167 {strides = array<i32>} : memref<280x4xbf16, #tpu.memory_space<vmem>>, vector<8x4xbf16>,
    %c0_173 = arith.constant 0 : index
    %c15_174 = arith.constant 15 : index
    %169 = vector.load %arg18[%c0_173, %c15_174] : memref<8x39xbf16, #tpu.memory_space<vmem>>, vector<8x4xbf16>
    %c120_175 = arith.constant 120 : index
    %c0_176 = arith.constant 0 : index
    %170 = vector.load %arg21[%c120_175, %c0_176] : memref<280x4xbf16, #tpu.memory_space<vmem>>, vector<8x4xbf16>
    tpu.vector_store %arg21[%c120_175, %c0_176], %169 {strides = array<i32>} : memref<280x4xbf16, #tpu.memory_space<vmem>>, vector<8x4xbf16>,
    %c0_177 = arith.constant 0 : index
    %c16_178 = arith.constant 16 : index
    %171 = vector.load %arg18[%c0_177, %c16_178] : memref<8x39xbf16, #tpu.memory_space<vmem>>, vector<8x4xbf16>
    %c128_179 = arith.constant 128 : index
    %c0_180 = arith.constant 0 : index
    %172 = vector.load %arg21[%c128_179, %c0_180] : memref<280x4xbf16, #tpu.memory_space<vmem>>, vector<8x4xbf16>
    tpu.vector_store %arg21[%c128_179, %c0_180], %171 {strides = array<i32>} : memref<280x4xbf16, #tpu.memory_space<vmem>>, vector<8x4xbf16>,
    %c0_181 = arith.constant 0 : index
    %c17_182 = arith.constant 17 : index
    %173 = vector.load %arg18[%c0_181, %c17_182] : memref<8x39xbf16, #tpu.memory_space<vmem>>, vector<8x4xbf16>
    %c136_183 = arith.constant 136 : index
    %c0_184 = arith.constant 0 : index
    %174 = vector.load %arg21[%c136_183, %c0_184] : memref<280x4xbf16, #tpu.memory_space<vmem>>, vector<8x4xbf16>
    tpu.vector_store %arg21[%c136_183, %c0_184], %173 {strides = array<i32>} : memref<280x4xbf16, #tpu.memory_space<vmem>>, vector<8x4xbf16>,
    %c0_185 = arith.constant 0 : index
    %c18_186 = arith.constant 18 : index
    %175 = vector.load %arg18[%c0_185, %c18_186] : memref<8x39xbf16, #tpu.memory_space<vmem>>, vector<8x4xbf16>
    %c144 = arith.constant 144 : index
    %c0_187 = arith.constant 0 : index
    %176 = vector.load %arg21[%c144, %c0_187] : memref<280x4xbf16, #tpu.memory_space<vmem>>, vector<8x4xbf16>
    tpu.vector_store %arg21[%c144, %c0_187], %175 {strides = array<i32>} : memref<280x4xbf16, #tpu.memory_space<vmem>>, vector<8x4xbf16>,
    %c0_188 = arith.constant 0 : index
    %c19_189 = arith.constant 19 : index
    %177 = vector.load %arg18[%c0_188, %c19_189] : memref<8x39xbf16, #tpu.memory_space<vmem>>, vector<8x4xbf16>
    %c152 = arith.constant 152 : index
    %c0_190 = arith.constant 0 : index
    %178 = vector.load %arg21[%c152, %c0_190] : memref<280x4xbf16, #tpu.memory_space<vmem>>, vector<8x4xbf16>
    tpu.vector_store %arg21[%c152, %c0_190], %177 {strides = array<i32>} : memref<280x4xbf16, #tpu.memory_space<vmem>>, vector<8x4xbf16>,
    %c0_191 = arith.constant 0 : index
    %c20_192 = arith.constant 20 : index
    %179 = vector.load %arg18[%c0_191, %c20_192] : memref<8x39xbf16, #tpu.memory_space<vmem>>, vector<8x4xbf16>
    %c160 = arith.constant 160 : index
    %c0_193 = arith.constant 0 : index
    %180 = vector.load %arg21[%c160, %c0_193] : memref<280x4xbf16, #tpu.memory_space<vmem>>, vector<8x4xbf16>
    tpu.vector_store %arg21[%c160, %c0_193], %179 {strides = array<i32>} : memref<280x4xbf16, #tpu.memory_space<vmem>>, vector<8x4xbf16>,
    %c0_194 = arith.constant 0 : index
    %c21_195 = arith.constant 21 : index
    %181 = vector.load %arg18[%c0_194, %c21_195] : memref<8x39xbf16, #tpu.memory_space<vmem>>, vector<8x4xbf16>
    %c168 = arith.constant 168 : index
    %c0_196 = arith.constant 0 : index
    %182 = vector.load %arg21[%c168, %c0_196] : memref<280x4xbf16, #tpu.memory_space<vmem>>, vector<8x4xbf16>
    tpu.vector_store %arg21[%c168, %c0_196], %181 {strides = array<i32>} : memref<280x4xbf16, #tpu.memory_space<vmem>>, vector<8x4xbf16>,
    %c0_197 = arith.constant 0 : index
    %c22_198 = arith.constant 22 : index
    %183 = vector.load %arg18[%c0_197, %c22_198] : memref<8x39xbf16, #tpu.memory_space<vmem>>, vector<8x4xbf16>
    %c176 = arith.constant 176 : index
    %c0_199 = arith.constant 0 : index
    %184 = vector.load %arg21[%c176, %c0_199] : memref<280x4xbf16, #tpu.memory_space<vmem>>, vector<8x4xbf16>
    tpu.vector_store %arg21[%c176, %c0_199], %183 {strides = array<i32>} : memref<280x4xbf16, #tpu.memory_space<vmem>>, vector<8x4xbf16>,
    %c0_200 = arith.constant 0 : index
    %c23_201 = arith.constant 23 : index
    %185 = vector.load %arg18[%c0_200, %c23_201] : memref<8x39xbf16, #tpu.memory_space<vmem>>, vector<8x4xbf16>
    %c184 = arith.constant 184 : index
    %c0_202 = arith.constant 0 : index
    %186 = vector.load %arg21[%c184, %c0_202] : memref<280x4xbf16, #tpu.memory_space<vmem>>, vector<8x4xbf16>
    tpu.vector_store %arg21[%c184, %c0_202], %185 {strides = array<i32>} : memref<280x4xbf16, #tpu.memory_space<vmem>>, vector<8x4xbf16>,
    %c0_203 = arith.constant 0 : index
    %c24_204 = arith.constant 24 : index
    %187 = vector.load %arg18[%c0_203, %c24_204] : memref<8x39xbf16, #tpu.memory_space<vmem>>, vector<8x4xbf16>
    %c192 = arith.constant 192 : index
    %c0_205 = arith.constant 0 : index
    %188 = vector.load %arg21[%c192, %c0_205] : memref<280x4xbf16, #tpu.memory_space<vmem>>, vector<8x4xbf16>
    tpu.vector_store %arg21[%c192, %c0_205], %187 {strides = array<i32>} : memref<280x4xbf16, #tpu.memory_space<vmem>>, vector<8x4xbf16>,
    %c0_206 = arith.constant 0 : index
    %c25_207 = arith.constant 25 : index
    %189 = vector.load %arg18[%c0_206, %c25_207] : memref<8x39xbf16, #tpu.memory_space<vmem>>, vector<8x4xbf16>
    %c200 = arith.constant 200 : index
    %c0_208 = arith.constant 0 : index
    %190 = vector.load %arg21[%c200, %c0_208] : memref<280x4xbf16, #tpu.memory_space<vmem>>, vector<8x4xbf16>
    tpu.vector_store %arg21[%c200, %c0_208], %189 {strides = array<i32>} : memref<280x4xbf16, #tpu.memory_space<vmem>>, vector<8x4xbf16>,
    %c0_209 = arith.constant 0 : index
    %c26_210 = arith.constant 26 : index
    %191 = vector.load %arg18[%c0_209, %c26_210] : memref<8x39xbf16, #tpu.memory_space<vmem>>, vector<8x4xbf16>
    %c208 = arith.constant 208 : index
    %c0_211 = arith.constant 0 : index
    %192 = vector.load %arg21[%c208, %c0_211] : memref<280x4xbf16, #tpu.memory_space<vmem>>, vector<8x4xbf16>
    tpu.vector_store %arg21[%c208, %c0_211], %191 {strides = array<i32>} : memref<280x4xbf16, #tpu.memory_space<vmem>>, vector<8x4xbf16>,
    %c0_212 = arith.constant 0 : index
    %c27_213 = arith.constant 27 : index
    %193 = vector.load %arg18[%c0_212, %c27_213] : memref<8x39xbf16, #tpu.memory_space<vmem>>, vector<8x4xbf16>
    %c216 = arith.constant 216 : index
    %c0_214 = arith.constant 0 : index
    %194 = vector.load %arg21[%c216, %c0_214] : memref<280x4xbf16, #tpu.memory_space<vmem>>, vector<8x4xbf16>
    tpu.vector_store %arg21[%c216, %c0_214], %193 {strides = array<i32>} : memref<280x4xbf16, #tpu.memory_space<vmem>>, vector<8x4xbf16>,
    %c0_215 = arith.constant 0 : index
    %c28_216 = arith.constant 28 : index
    %195 = vector.load %arg18[%c0_215, %c28_216] : memref<8x39xbf16, #tpu.memory_space<vmem>>, vector<8x4xbf16>
    %c224 = arith.constant 224 : index
    %c0_217 = arith.constant 0 : index
    %196 = vector.load %arg21[%c224, %c0_217] : memref<280x4xbf16, #tpu.memory_space<vmem>>, vector<8x4xbf16>
    tpu.vector_store %arg21[%c224, %c0_217], %195 {strides = array<i32>} : memref<280x4xbf16, #tpu.memory_space<vmem>>, vector<8x4xbf16>,
    %c0_218 = arith.constant 0 : index
    %c29_219 = arith.constant 29 : index
    %197 = vector.load %arg18[%c0_218, %c29_219] : memref<8x39xbf16, #tpu.memory_space<vmem>>, vector<8x4xbf16>
    %c232 = arith.constant 232 : index
    %c0_220 = arith.constant 0 : index
    %198 = vector.load %arg21[%c232, %c0_220] : memref<280x4xbf16, #tpu.memory_space<vmem>>, vector<8x4xbf16>
    tpu.vector_store %arg21[%c232, %c0_220], %197 {strides = array<i32>} : memref<280x4xbf16, #tpu.memory_space<vmem>>, vector<8x4xbf16>,
    %c0_221 = arith.constant 0 : index
    %c30_222 = arith.constant 30 : index
    %199 = vector.load %arg18[%c0_221, %c30_222] : memref<8x39xbf16, #tpu.memory_space<vmem>>, vector<8x4xbf16>
    %c240 = arith.constant 240 : index
    %c0_223 = arith.constant 0 : index
    %200 = vector.load %arg21[%c240, %c0_223] : memref<280x4xbf16, #tpu.memory_space<vmem>>, vector<8x4xbf16>
    tpu.vector_store %arg21[%c240, %c0_223], %199 {strides = array<i32>} : memref<280x4xbf16, #tpu.memory_space<vmem>>, vector<8x4xbf16>,
    %c0_224 = arith.constant 0 : index
    %c31_225 = arith.constant 31 : index
    %201 = vector.load %arg18[%c0_224, %c31_225] : memref<8x39xbf16, #tpu.memory_space<vmem>>, vector<8x4xbf16>
    %c248 = arith.constant 248 : index
    %c0_226 = arith.constant 0 : index
    %202 = vector.load %arg21[%c248, %c0_226] : memref<280x4xbf16, #tpu.memory_space<vmem>>, vector<8x4xbf16>
    tpu.vector_store %arg21[%c248, %c0_226], %201 {strides = array<i32>} : memref<280x4xbf16, #tpu.memory_space<vmem>>, vector<8x4xbf16>,
    %c0_227 = arith.constant 0 : index
    %c32_228 = arith.constant 32 : index
    %203 = vector.load %arg18[%c0_227, %c32_228] : memref<8x39xbf16, #tpu.memory_space<vmem>>, vector<8x4xbf16>
    %c256 = arith.constant 256 : index
    %c0_229 = arith.constant 0 : index
    %204 = vector.load %arg21[%c256, %c0_229] : memref<280x4xbf16, #tpu.memory_space<vmem>>, vector<8x4xbf16>
    tpu.vector_store %arg21[%c256, %c0_229], %203 {strides = array<i32>} : memref<280x4xbf16, #tpu.memory_space<vmem>>, vector<8x4xbf16>,
    %c0_230 = arith.constant 0 : index
    %c33_231 = arith.constant 33 : index
    %205 = vector.load %arg18[%c0_230, %c33_231] : memref<8x39xbf16, #tpu.memory_space<vmem>>, vector<8x4xbf16>
    %c264 = arith.constant 264 : index
    %c0_232 = arith.constant 0 : index
    %206 = vector.load %arg21[%c264, %c0_232] : memref<280x4xbf16, #tpu.memory_space<vmem>>, vector<8x4xbf16>
    tpu.vector_store %arg21[%c264, %c0_232], %205 {strides = array<i32>} : memref<280x4xbf16, #tpu.memory_space<vmem>>, vector<8x4xbf16>,
    %c0_233 = arith.constant 0 : index
    %c34_234 = arith.constant 34 : index
    %207 = vector.load %arg18[%c0_233, %c34_234] : memref<8x39xbf16, #tpu.memory_space<vmem>>, vector<8x4xbf16>
    %c272 = arith.constant 272 : index
    %c0_235 = arith.constant 0 : index
    %208 = vector.load %arg21[%c272, %c0_235] : memref<280x4xbf16, #tpu.memory_space<vmem>>, vector<8x4xbf16>
    tpu.vector_store %arg21[%c272, %c0_235], %207 {strides = array<i32>} : memref<280x4xbf16, #tpu.memory_space<vmem>>, vector<8x4xbf16>,
    %c0_236 = arith.constant 0 : index
    %c0_237 = arith.constant 0 : index
    %209 = vector.load %arg21[%c0_236, %c0_237] : memref<280x4xbf16, #tpu.memory_space<vmem>>, vector<280x4xbf16>
    %210 = tpu.iota {dimensions = array<i32: 0>} : vector<4x4xi32>
    %211 = tpu.iota {dimensions = array<i32: 1>} : vector<4x4xi32>
    %c2_i32_238 = arith.constant 2 : i32
    %212 = vector.broadcast %c2_i32_238 : i32 to vector<4x4xi32>
    %213 = arith.cmpi slt, %211, %212 : vector<4x4xi32>
    %c2_i32_239 = arith.constant 2 : i32
    %214 = vector.broadcast %c2_i32_239 : i32 to vector<4x4xi32>
    %215 = arith.muli %214, %211 : vector<4x4xi32>
    %c2_i32_240 = arith.constant 2 : i32
    %216 = vector.broadcast %c2_i32_240 : i32 to vector<4x4xi32>
    %217 = arith.subi %211, %216 : vector<4x4xi32>
    %c2_i32_241 = arith.constant 2 : i32
    %218 = vector.broadcast %c2_i32_241 : i32 to vector<4x4xi32>
    %219 = arith.muli %218, %217 : vector<4x4xi32>
    %c1_i32_242 = arith.constant 1 : i32
    %220 = vector.broadcast %c1_i32_242 : i32 to vector<4x4xi32>
    %221 = arith.addi %219, %220 : vector<4x4xi32>
    %222 = arith.select %213, %215, %221 : vector<4x4xi1>, vector<4x4xi32>
    %223 = arith.cmpi eq, %210, %222 : vector<4x4xi32>
    %224 = arith.extui %223 : vector<4x4xi1> to vector<4x4xi32>
    %225 = arith.sitofp %224 : vector<4x4xi32> to vector<4x4xf32>
    %226 = arith.truncf %225 : vector<4x4xf32> to vector<4x4xbf16>
    %cst_243 = arith.constant dense<0.000000e+00> : vector<280x4xf32>
    %227 = tpu.matmul %209, %226, %cst_243 {dimension_numbers = #tpu.dot_dimension_numbers<[1], [0], [0], [1], [0, 0, 1, 1], [], []>} : vector<280x4xbf16>, vector<4x4xbf16>, vector<280x4xf32> -> vector<280x4xf32>
    %228 = arith.truncf %227 : vector<280x4xf32> to vector<280x4xbf16>
    %c0_244 = arith.constant 0 : index
    %c0_245 = arith.constant 0 : index
    %229 = vector.load %arg6[%c0_244, %c0_245] : memref<24x280xbf16, #tpu.memory_space<vmem>>, vector<24x280xbf16>
    %cst_246 = arith.constant dense<0.000000e+00> : vector<24x4xf32>
    %230 = tpu.matmul %229, %228, %cst_246 {dimension_numbers = #tpu.dot_dimension_numbers<[1], [0], [0], [1], [0, 0, 1, 1], [], []>} : vector<24x280xbf16>, vector<280x4xbf16>, vector<24x4xf32> -> vector<24x4xf32>
    %231 = vector.extract_strided_slice %230 {offsets = [0, 0], sizes = [24, 2], strides = [1, 1]} : vector<24x4xf32> to vector<24x2xf32>
    %232 = vector.extract_strided_slice %230 {offsets = [0, 2], sizes = [24, 2], strides = [1, 1]} : vector<24x4xf32> to vector<24x2xf32>
    %233 = arith.maximumf %231, %232 : vector<24x2xf32>
    %c0_247 = arith.constant 0 : index
    %c0_248 = arith.constant 0 : index
    %234 = vector.load %arg7[%c0_247, %c0_248] : memref<24x1xf32, #tpu.memory_space<vmem>>, vector<24x1xf32>
    %235 = vector.broadcast %234 : vector<24x1xf32> to vector<24x2xf32>
    %236 = arith.addf %233, %235 : vector<24x2xf32>
    %cst_249 = arith.constant 0.000000e+00 : f32
    %237 = vector.broadcast %cst_249 : f32 to vector<24x2xf32>
    %238 = arith.maximumf %236, %237 : vector<24x2xf32>
    %cst_250 = arith.constant 0.000000e+00 : bf16
    %239 = vector.broadcast %cst_250 : bf16 to vector<24x36xbf16>
    %c0_251 = arith.constant 0 : index
    %c0_252 = arith.constant 0 : index
    %240 = vector.load %arg19[%c0_251, %c0_252] : memref<24x36xbf16, #tpu.memory_space<vmem>>, vector<24x36xbf16>
    tpu.vector_store %arg19[%c0_251, %c0_252], %239 {strides = array<i32>} : memref<24x36xbf16, #tpu.memory_space<vmem>>, vector<24x36xbf16>,
    %241 = arith.truncf %238 : vector<24x2xf32> to vector<24x2xbf16>
    %c0_253 = arith.constant 0 : index
    %c17_254 = arith.constant 17 : index
    %242 = vector.load %arg19[%c0_253, %c17_254] : memref<24x36xbf16, #tpu.memory_space<vmem>>, vector<24x2xbf16>
    tpu.vector_store %arg19[%c0_253, %c17_254], %241 {strides = array<i32>} : memref<24x36xbf16, #tpu.memory_space<vmem>>, vector<24x2xbf16>,
    %c0_255 = arith.constant 0 : index
    %c0_256 = arith.constant 0 : index
    %243 = vector.load %arg19[%c0_255, %c0_256] : memref<24x36xbf16, #tpu.memory_space<vmem>>, vector<24x2xbf16>
    %c0_257 = arith.constant 0 : index
    %c0_258 = arith.constant 0 : index
    %244 = vector.load %arg22[%c0_257, %c0_258] : memref<840x2xbf16, #tpu.memory_space<vmem>>, vector<24x2xbf16>
    tpu.vector_store %arg22[%c0_257, %c0_258], %243 {strides = array<i32>} : memref<840x2xbf16, #tpu.memory_space<vmem>>, vector<24x2xbf16>,
    %c0_259 = arith.constant 0 : index
    %c1_260 = arith.constant 1 : index
    %245 = vector.load %arg19[%c0_259, %c1_260] : memref<24x36xbf16, #tpu.memory_space<vmem>>, vector<24x2xbf16>
    %c24_261 = arith.constant 24 : index
    %c0_262 = arith.constant 0 : index
    %246 = vector.load %arg22[%c24_261, %c0_262] : memref<840x2xbf16, #tpu.memory_space<vmem>>, vector<24x2xbf16>
    tpu.vector_store %arg22[%c24_261, %c0_262], %245 {strides = array<i32>} : memref<840x2xbf16, #tpu.memory_space<vmem>>, vector<24x2xbf16>,
    %c0_263 = arith.constant 0 : index
    %c2_264 = arith.constant 2 : index
    %247 = vector.load %arg19[%c0_263, %c2_264] : memref<24x36xbf16, #tpu.memory_space<vmem>>, vector<24x2xbf16>
    %c48_265 = arith.constant 48 : index
    %c0_266 = arith.constant 0 : index
    %248 = vector.load %arg22[%c48_265, %c0_266] : memref<840x2xbf16, #tpu.memory_space<vmem>>, vector<24x2xbf16>
    tpu.vector_store %arg22[%c48_265, %c0_266], %247 {strides = array<i32>} : memref<840x2xbf16, #tpu.memory_space<vmem>>, vector<24x2xbf16>,
    %c0_267 = arith.constant 0 : index
    %c3_268 = arith.constant 3 : index
    %249 = vector.load %arg19[%c0_267, %c3_268] : memref<24x36xbf16, #tpu.memory_space<vmem>>, vector<24x2xbf16>
    %c72_269 = arith.constant 72 : index
    %c0_270 = arith.constant 0 : index
    %250 = vector.load %arg22[%c72_269, %c0_270] : memref<840x2xbf16, #tpu.memory_space<vmem>>, vector<24x2xbf16>
    tpu.vector_store %arg22[%c72_269, %c0_270], %249 {strides = array<i32>} : memref<840x2xbf16, #tpu.memory_space<vmem>>, vector<24x2xbf16>,
    %c0_271 = arith.constant 0 : index
    %c4_272 = arith.constant 4 : index
    %251 = vector.load %arg19[%c0_271, %c4_272] : memref<24x36xbf16, #tpu.memory_space<vmem>>, vector<24x2xbf16>
    %c96_273 = arith.constant 96 : index
    %c0_274 = arith.constant 0 : index
    %252 = vector.load %arg22[%c96_273, %c0_274] : memref<840x2xbf16, #tpu.memory_space<vmem>>, vector<24x2xbf16>
    tpu.vector_store %arg22[%c96_273, %c0_274], %251 {strides = array<i32>} : memref<840x2xbf16, #tpu.memory_space<vmem>>, vector<24x2xbf16>,
    %c0_275 = arith.constant 0 : index
    %c5_276 = arith.constant 5 : index
    %253 = vector.load %arg19[%c0_275, %c5_276] : memref<24x36xbf16, #tpu.memory_space<vmem>>, vector<24x2xbf16>
    %c120_277 = arith.constant 120 : index
    %c0_278 = arith.constant 0 : index
    %254 = vector.load %arg22[%c120_277, %c0_278] : memref<840x2xbf16, #tpu.memory_space<vmem>>, vector<24x2xbf16>
    tpu.vector_store %arg22[%c120_277, %c0_278], %253 {strides = array<i32>} : memref<840x2xbf16, #tpu.memory_space<vmem>>, vector<24x2xbf16>,
    %c0_279 = arith.constant 0 : index
    %c6_280 = arith.constant 6 : index
    %255 = vector.load %arg19[%c0_279, %c6_280] : memref<24x36xbf16, #tpu.memory_space<vmem>>, vector<24x2xbf16>
    %c144_281 = arith.constant 144 : index
    %c0_282 = arith.constant 0 : index
    %256 = vector.load %arg22[%c144_281, %c0_282] : memref<840x2xbf16, #tpu.memory_space<vmem>>, vector<24x2xbf16>
    tpu.vector_store %arg22[%c144_281, %c0_282], %255 {strides = array<i32>} : memref<840x2xbf16, #tpu.memory_space<vmem>>, vector<24x2xbf16>,
    %c0_283 = arith.constant 0 : index
    %c7_284 = arith.constant 7 : index
    %257 = vector.load %arg19[%c0_283, %c7_284] : memref<24x36xbf16, #tpu.memory_space<vmem>>, vector<24x2xbf16>
    %c168_285 = arith.constant 168 : index
    %c0_286 = arith.constant 0 : index
    %258 = vector.load %arg22[%c168_285, %c0_286] : memref<840x2xbf16, #tpu.memory_space<vmem>>, vector<24x2xbf16>
    tpu.vector_store %arg22[%c168_285, %c0_286], %257 {strides = array<i32>} : memref<840x2xbf16, #tpu.memory_space<vmem>>, vector<24x2xbf16>,
    %c0_287 = arith.constant 0 : index
    %c8_288 = arith.constant 8 : index
    %259 = vector.load %arg19[%c0_287, %c8_288] : memref<24x36xbf16, #tpu.memory_space<vmem>>, vector<24x2xbf16>
    %c192_289 = arith.constant 192 : index
    %c0_290 = arith.constant 0 : index
    %260 = vector.load %arg22[%c192_289, %c0_290] : memref<840x2xbf16, #tpu.memory_space<vmem>>, vector<24x2xbf16>
    tpu.vector_store %arg22[%c192_289, %c0_290], %259 {strides = array<i32>} : memref<840x2xbf16, #tpu.memory_space<vmem>>, vector<24x2xbf16>,
    %c0_291 = arith.constant 0 : index
    %c9_292 = arith.constant 9 : index
    %261 = vector.load %arg19[%c0_291, %c9_292] : memref<24x36xbf16, #tpu.memory_space<vmem>>, vector<24x2xbf16>
    %c216_293 = arith.constant 216 : index
    %c0_294 = arith.constant 0 : index
    %262 = vector.load %arg22[%c216_293, %c0_294] : memref<840x2xbf16, #tpu.memory_space<vmem>>, vector<24x2xbf16>
    tpu.vector_store %arg22[%c216_293, %c0_294], %261 {strides = array<i32>} : memref<840x2xbf16, #tpu.memory_space<vmem>>, vector<24x2xbf16>,
    %c0_295 = arith.constant 0 : index
    %c10_296 = arith.constant 10 : index
    %263 = vector.load %arg19[%c0_295, %c10_296] : memref<24x36xbf16, #tpu.memory_space<vmem>>, vector<24x2xbf16>
    %c240_297 = arith.constant 240 : index
    %c0_298 = arith.constant 0 : index
    %264 = vector.load %arg22[%c240_297, %c0_298] : memref<840x2xbf16, #tpu.memory_space<vmem>>, vector<24x2xbf16>
    tpu.vector_store %arg22[%c240_297, %c0_298], %263 {strides = array<i32>} : memref<840x2xbf16, #tpu.memory_space<vmem>>, vector<24x2xbf16>,
    %c0_299 = arith.constant 0 : index
    %c11_300 = arith.constant 11 : index
    %265 = vector.load %arg19[%c0_299, %c11_300] : memref<24x36xbf16, #tpu.memory_space<vmem>>, vector<24x2xbf16>
    %c264_301 = arith.constant 264 : index
    %c0_302 = arith.constant 0 : index
    %266 = vector.load %arg22[%c264_301, %c0_302] : memref<840x2xbf16, #tpu.memory_space<vmem>>, vector<24x2xbf16>
    tpu.vector_store %arg22[%c264_301, %c0_302], %265 {strides = array<i32>} : memref<840x2xbf16, #tpu.memory_space<vmem>>, vector<24x2xbf16>,
    %c0_303 = arith.constant 0 : index
    %c12_304 = arith.constant 12 : index
    %267 = vector.load %arg19[%c0_303, %c12_304] : memref<24x36xbf16, #tpu.memory_space<vmem>>, vector<24x2xbf16>
    %c288 = arith.constant 288 : index
    %c0_305 = arith.constant 0 : index
    %268 = vector.load %arg22[%c288, %c0_305] : memref<840x2xbf16, #tpu.memory_space<vmem>>, vector<24x2xbf16>
    tpu.vector_store %arg22[%c288, %c0_305], %267 {strides = array<i32>} : memref<840x2xbf16, #tpu.memory_space<vmem>>, vector<24x2xbf16>,
    %c0_306 = arith.constant 0 : index
    %c13_307 = arith.constant 13 : index
    %269 = vector.load %arg19[%c0_306, %c13_307] : memref<24x36xbf16, #tpu.memory_space<vmem>>, vector<24x2xbf16>
    %c312 = arith.constant 312 : index
    %c0_308 = arith.constant 0 : index
    %270 = vector.load %arg22[%c312, %c0_308] : memref<840x2xbf16, #tpu.memory_space<vmem>>, vector<24x2xbf16>
    tpu.vector_store %arg22[%c312, %c0_308], %269 {strides = array<i32>} : memref<840x2xbf16, #tpu.memory_space<vmem>>, vector<24x2xbf16>,
    %c0_309 = arith.constant 0 : index
    %c14_310 = arith.constant 14 : index
    %271 = vector.load %arg19[%c0_309, %c14_310] : memref<24x36xbf16, #tpu.memory_space<vmem>>, vector<24x2xbf16>
    %c336 = arith.constant 336 : index
    %c0_311 = arith.constant 0 : index
    %272 = vector.load %arg22[%c336, %c0_311] : memref<840x2xbf16, #tpu.memory_space<vmem>>, vector<24x2xbf16>
    tpu.vector_store %arg22[%c336, %c0_311], %271 {strides = array<i32>} : memref<840x2xbf16, #tpu.memory_space<vmem>>, vector<24x2xbf16>,
    %c0_312 = arith.constant 0 : index
    %c15_313 = arith.constant 15 : index
    %273 = vector.load %arg19[%c0_312, %c15_313] : memref<24x36xbf16, #tpu.memory_space<vmem>>, vector<24x2xbf16>
    %c360 = arith.constant 360 : index
    %c0_314 = arith.constant 0 : index
    %274 = vector.load %arg22[%c360, %c0_314] : memref<840x2xbf16, #tpu.memory_space<vmem>>, vector<24x2xbf16>
    tpu.vector_store %arg22[%c360, %c0_314], %273 {strides = array<i32>} : memref<840x2xbf16, #tpu.memory_space<vmem>>, vector<24x2xbf16>,
    %c0_315 = arith.constant 0 : index
    %c16_316 = arith.constant 16 : index
    %275 = vector.load %arg19[%c0_315, %c16_316] : memref<24x36xbf16, #tpu.memory_space<vmem>>, vector<24x2xbf16>
    %c384 = arith.constant 384 : index
    %c0_317 = arith.constant 0 : index
    %276 = vector.load %arg22[%c384, %c0_317] : memref<840x2xbf16, #tpu.memory_space<vmem>>, vector<24x2xbf16>
    tpu.vector_store %arg22[%c384, %c0_317], %275 {strides = array<i32>} : memref<840x2xbf16, #tpu.memory_space<vmem>>, vector<24x2xbf16>,
    %c0_318 = arith.constant 0 : index
    %c17_319 = arith.constant 17 : index
    %277 = vector.load %arg19[%c0_318, %c17_319] : memref<24x36xbf16, #tpu.memory_space<vmem>>, vector<24x2xbf16>
    %c408 = arith.constant 408 : index
    %c0_320 = arith.constant 0 : index
    %278 = vector.load %arg22[%c408, %c0_320] : memref<840x2xbf16, #tpu.memory_space<vmem>>, vector<24x2xbf16>
    tpu.vector_store %arg22[%c408, %c0_320], %277 {strides = array<i32>} : memref<840x2xbf16, #tpu.memory_space<vmem>>, vector<24x2xbf16>,
    %c0_321 = arith.constant 0 : index
    %c18_322 = arith.constant 18 : index
    %279 = vector.load %arg19[%c0_321, %c18_322] : memref<24x36xbf16, #tpu.memory_space<vmem>>, vector<24x2xbf16>
    %c432 = arith.constant 432 : index
    %c0_323 = arith.constant 0 : index
    %280 = vector.load %arg22[%c432, %c0_323] : memref<840x2xbf16, #tpu.memory_space<vmem>>, vector<24x2xbf16>
    tpu.vector_store %arg22[%c432, %c0_323], %279 {strides = array<i32>} : memref<840x2xbf16, #tpu.memory_space<vmem>>, vector<24x2xbf16>,
    %c0_324 = arith.constant 0 : index
    %c19_325 = arith.constant 19 : index
    %281 = vector.load %arg19[%c0_324, %c19_325] : memref<24x36xbf16, #tpu.memory_space<vmem>>, vector<24x2xbf16>
    %c456 = arith.constant 456 : index
    %c0_326 = arith.constant 0 : index
    %282 = vector.load %arg22[%c456, %c0_326] : memref<840x2xbf16, #tpu.memory_space<vmem>>, vector<24x2xbf16>
    tpu.vector_store %arg22[%c456, %c0_326], %281 {strides = array<i32>} : memref<840x2xbf16, #tpu.memory_space<vmem>>, vector<24x2xbf16>,
    %c0_327 = arith.constant 0 : index
    %c20_328 = arith.constant 20 : index
    %283 = vector.load %arg19[%c0_327, %c20_328] : memref<24x36xbf16, #tpu.memory_space<vmem>>, vector<24x2xbf16>
    %c480 = arith.constant 480 : index
    %c0_329 = arith.constant 0 : index
    %284 = vector.load %arg22[%c480, %c0_329] : memref<840x2xbf16, #tpu.memory_space<vmem>>, vector<24x2xbf16>
    tpu.vector_store %arg22[%c480, %c0_329], %283 {strides = array<i32>} : memref<840x2xbf16, #tpu.memory_space<vmem>>, vector<24x2xbf16>,
    %c0_330 = arith.constant 0 : index
    %c21_331 = arith.constant 21 : index
    %285 = vector.load %arg19[%c0_330, %c21_331] : memref<24x36xbf16, #tpu.memory_space<vmem>>, vector<24x2xbf16>
    %c504 = arith.constant 504 : index
    %c0_332 = arith.constant 0 : index
    %286 = vector.load %arg22[%c504, %c0_332] : memref<840x2xbf16, #tpu.memory_space<vmem>>, vector<24x2xbf16>
    tpu.vector_store %arg22[%c504, %c0_332], %285 {strides = array<i32>} : memref<840x2xbf16, #tpu.memory_space<vmem>>, vector<24x2xbf16>,
    %c0_333 = arith.constant 0 : index
    %c22_334 = arith.constant 22 : index
    %287 = vector.load %arg19[%c0_333, %c22_334] : memref<24x36xbf16, #tpu.memory_space<vmem>>, vector<24x2xbf16>
    %c528 = arith.constant 528 : index
    %c0_335 = arith.constant 0 : index
    %288 = vector.load %arg22[%c528, %c0_335] : memref<840x2xbf16, #tpu.memory_space<vmem>>, vector<24x2xbf16>
    tpu.vector_store %arg22[%c528, %c0_335], %287 {strides = array<i32>} : memref<840x2xbf16, #tpu.memory_space<vmem>>, vector<24x2xbf16>,
    %c0_336 = arith.constant 0 : index
    %c23_337 = arith.constant 23 : index
    %289 = vector.load %arg19[%c0_336, %c23_337] : memref<24x36xbf16, #tpu.memory_space<vmem>>, vector<24x2xbf16>
    %c552 = arith.constant 552 : index
    %c0_338 = arith.constant 0 : index
    %290 = vector.load %arg22[%c552, %c0_338] : memref<840x2xbf16, #tpu.memory_space<vmem>>, vector<24x2xbf16>
    tpu.vector_store %arg22[%c552, %c0_338], %289 {strides = array<i32>} : memref<840x2xbf16, #tpu.memory_space<vmem>>, vector<24x2xbf16>,
    %c0_339 = arith.constant 0 : index
    %c24_340 = arith.constant 24 : index
    %291 = vector.load %arg19[%c0_339, %c24_340] : memref<24x36xbf16, #tpu.memory_space<vmem>>, vector<24x2xbf16>
    %c576 = arith.constant 576 : index
    %c0_341 = arith.constant 0 : index
    %292 = vector.load %arg22[%c576, %c0_341] : memref<840x2xbf16, #tpu.memory_space<vmem>>, vector<24x2xbf16>
    tpu.vector_store %arg22[%c576, %c0_341], %291 {strides = array<i32>} : memref<840x2xbf16, #tpu.memory_space<vmem>>, vector<24x2xbf16>,
    %c0_342 = arith.constant 0 : index
    %c25_343 = arith.constant 25 : index
    %293 = vector.load %arg19[%c0_342, %c25_343] : memref<24x36xbf16, #tpu.memory_space<vmem>>, vector<24x2xbf16>
    %c600 = arith.constant 600 : index
    %c0_344 = arith.constant 0 : index
    %294 = vector.load %arg22[%c600, %c0_344] : memref<840x2xbf16, #tpu.memory_space<vmem>>, vector<24x2xbf16>
    tpu.vector_store %arg22[%c600, %c0_344], %293 {strides = array<i32>} : memref<840x2xbf16, #tpu.memory_space<vmem>>, vector<24x2xbf16>,
    %c0_345 = arith.constant 0 : index
    %c26_346 = arith.constant 26 : index
    %295 = vector.load %arg19[%c0_345, %c26_346] : memref<24x36xbf16, #tpu.memory_space<vmem>>, vector<24x2xbf16>
    %c624 = arith.constant 624 : index
    %c0_347 = arith.constant 0 : index
    %296 = vector.load %arg22[%c624, %c0_347] : memref<840x2xbf16, #tpu.memory_space<vmem>>, vector<24x2xbf16>
    tpu.vector_store %arg22[%c624, %c0_347], %295 {strides = array<i32>} : memref<840x2xbf16, #tpu.memory_space<vmem>>, vector<24x2xbf16>,
    %c0_348 = arith.constant 0 : index
    %c27_349 = arith.constant 27 : index
    %297 = vector.load %arg19[%c0_348, %c27_349] : memref<24x36xbf16, #tpu.memory_space<vmem>>, vector<24x2xbf16>
    %c648 = arith.constant 648 : index
    %c0_350 = arith.constant 0 : index
    %298 = vector.load %arg22[%c648, %c0_350] : memref<840x2xbf16, #tpu.memory_space<vmem>>, vector<24x2xbf16>
    tpu.vector_store %arg22[%c648, %c0_350], %297 {strides = array<i32>} : memref<840x2xbf16, #tpu.memory_space<vmem>>, vector<24x2xbf16>,
    %c0_351 = arith.constant 0 : index
    %c28_352 = arith.constant 28 : index
    %299 = vector.load %arg19[%c0_351, %c28_352] : memref<24x36xbf16, #tpu.memory_space<vmem>>, vector<24x2xbf16>
    %c672 = arith.constant 672 : index
    %c0_353 = arith.constant 0 : index
    %300 = vector.load %arg22[%c672, %c0_353] : memref<840x2xbf16, #tpu.memory_space<vmem>>, vector<24x2xbf16>
    tpu.vector_store %arg22[%c672, %c0_353], %299 {strides = array<i32>} : memref<840x2xbf16, #tpu.memory_space<vmem>>, vector<24x2xbf16>,
    %c0_354 = arith.constant 0 : index
    %c29_355 = arith.constant 29 : index
    %301 = vector.load %arg19[%c0_354, %c29_355] : memref<24x36xbf16, #tpu.memory_space<vmem>>, vector<24x2xbf16>
    %c696 = arith.constant 696 : index
    %c0_356 = arith.constant 0 : index
    %302 = vector.load %arg22[%c696, %c0_356] : memref<840x2xbf16, #tpu.memory_space<vmem>>, vector<24x2xbf16>
    tpu.vector_store %arg22[%c696, %c0_356], %301 {strides = array<i32>} : memref<840x2xbf16, #tpu.memory_space<vmem>>, vector<24x2xbf16>,
    %c0_357 = arith.constant 0 : index
    %c30_358 = arith.constant 30 : index
    %303 = vector.load %arg19[%c0_357, %c30_358] : memref<24x36xbf16, #tpu.memory_space<vmem>>, vector<24x2xbf16>
    %c720 = arith.constant 720 : index
    %c0_359 = arith.constant 0 : index
    %304 = vector.load %arg22[%c720, %c0_359] : memref<840x2xbf16, #tpu.memory_space<vmem>>, vector<24x2xbf16>
    tpu.vector_store %arg22[%c720, %c0_359], %303 {strides = array<i32>} : memref<840x2xbf16, #tpu.memory_space<vmem>>, vector<24x2xbf16>,
    %c0_360 = arith.constant 0 : index
    %c31_361 = arith.constant 31 : index
    %305 = vector.load %arg19[%c0_360, %c31_361] : memref<24x36xbf16, #tpu.memory_space<vmem>>, vector<24x2xbf16>
    %c744 = arith.constant 744 : index
    %c0_362 = arith.constant 0 : index
    %306 = vector.load %arg22[%c744, %c0_362] : memref<840x2xbf16, #tpu.memory_space<vmem>>, vector<24x2xbf16>
    tpu.vector_store %arg22[%c744, %c0_362], %305 {strides = array<i32>} : memref<840x2xbf16, #tpu.memory_space<vmem>>, vector<24x2xbf16>,
    %c0_363 = arith.constant 0 : index
    %c32_364 = arith.constant 32 : index
    %307 = vector.load %arg19[%c0_363, %c32_364] : memref<24x36xbf16, #tpu.memory_space<vmem>>, vector<24x2xbf16>
    %c768 = arith.constant 768 : index
    %c0_365 = arith.constant 0 : index
    %308 = vector.load %arg22[%c768, %c0_365] : memref<840x2xbf16, #tpu.memory_space<vmem>>, vector<24x2xbf16>
    tpu.vector_store %arg22[%c768, %c0_365], %307 {strides = array<i32>} : memref<840x2xbf16, #tpu.memory_space<vmem>>, vector<24x2xbf16>,
    %c0_366 = arith.constant 0 : index
    %c33_367 = arith.constant 33 : index
    %309 = vector.load %arg19[%c0_366, %c33_367] : memref<24x36xbf16, #tpu.memory_space<vmem>>, vector<24x2xbf16>
    %c792 = arith.constant 792 : index
    %c0_368 = arith.constant 0 : index
    %310 = vector.load %arg22[%c792, %c0_368] : memref<840x2xbf16, #tpu.memory_space<vmem>>, vector<24x2xbf16>
    tpu.vector_store %arg22[%c792, %c0_368], %309 {strides = array<i32>} : memref<840x2xbf16, #tpu.memory_space<vmem>>, vector<24x2xbf16>,
    %c0_369 = arith.constant 0 : index
    %c34_370 = arith.constant 34 : index
    %311 = vector.load %arg19[%c0_369, %c34_370] : memref<24x36xbf16, #tpu.memory_space<vmem>>, vector<24x2xbf16>
    %c816 = arith.constant 816 : index
    %c0_371 = arith.constant 0 : index
    %312 = vector.load %arg22[%c816, %c0_371] : memref<840x2xbf16, #tpu.memory_space<vmem>>, vector<24x2xbf16>
    tpu.vector_store %arg22[%c816, %c0_371], %311 {strides = array<i32>} : memref<840x2xbf16, #tpu.memory_space<vmem>>, vector<24x2xbf16>,
    %c0_372 = arith.constant 0 : index
    %c0_373 = arith.constant 0 : index
    %313 = vector.load %arg22[%c0_372, %c0_373] : memref<840x2xbf16, #tpu.memory_space<vmem>>, vector<840x2xbf16>
    %c0_374 = arith.constant 0 : index
    %c0_375 = arith.constant 0 : index
    %314 = vector.load %arg8[%c0_374, %c0_375] : memref<80x840xbf16, #tpu.memory_space<vmem>>, vector<80x840xbf16>
    %cst_376 = arith.constant dense<0.000000e+00> : vector<80x2xf32>
    %315 = tpu.matmul %314, %313, %cst_376 {dimension_numbers = #tpu.dot_dimension_numbers<[1], [0], [0], [1], [0, 0, 1, 1], [], []>} : vector<80x840xbf16>, vector<840x2xbf16>, vector<80x2xf32> -> vector<80x2xf32>
    %316 = vector.extract_strided_slice %315 {offsets = [0, 0], sizes = [80, 1], strides = [1, 1]} : vector<80x2xf32> to vector<80x1xf32>
    %317 = vector.extract_strided_slice %315 {offsets = [0, 1], sizes = [80, 1], strides = [1, 1]} : vector<80x2xf32> to vector<80x1xf32>
    %318 = arith.maximumf %316, %317 : vector<80x1xf32>
    %c0_377 = arith.constant 0 : index
    %c0_378 = arith.constant 0 : index
    %319 = vector.load %arg9[%c0_377, %c0_378] : memref<80x1xf32, #tpu.memory_space<vmem>>, vector<80x1xf32>
    %320 = arith.addf %318, %319 : vector<80x1xf32>
    %cst_379 = arith.constant 0.000000e+00 : f32
    %321 = vector.broadcast %cst_379 : f32 to vector<80x1xf32>
    %322 = arith.maximumf %320, %321 : vector<80x1xf32>
    %323 = arith.truncf %322 : vector<80x1xf32> to vector<80x1xbf16>
    %c0_380 = arith.constant 0 : index
    %c0_381 = arith.constant 0 : index
    %324 = vector.load %arg10[%c0_380, %c0_381] : memref<80x512xbf16, #tpu.memory_space<vmem>>, vector<80x512xbf16>
    %cst_382 = arith.constant dense<0.000000e+00> : vector<1x512xf32>
    %325 = tpu.matmul %323, %324, %cst_382 {dimension_numbers = #tpu.dot_dimension_numbers<[0], [0], [1], [1], [0, 1, 1, 1], [], []>} : vector<80x1xbf16>, vector<80x512xbf16>, vector<1x512xf32> -> vector<1x512xf32>
    %c0_383 = arith.constant 0 : index
    %c0_384 = arith.constant 0 : index
    %326 = vector.load %arg11[%c0_383, %c0_384] : memref<1x512xf32, #tpu.memory_space<vmem>>, vector<1x512xf32>
    %327 = arith.addf %325, %326 : vector<1x512xf32>
    %cst_385 = arith.constant 0.000000e+00 : f32
    %328 = vector.broadcast %cst_385 : f32 to vector<1x512xf32>
    %329 = arith.maximumf %327, %328 : vector<1x512xf32>
    %330 = arith.truncf %329 : vector<1x512xf32> to vector<1x512xbf16>
    %c0_386 = arith.constant 0 : index
    %c0_387 = arith.constant 0 : index
    %331 = vector.load %arg12[%c0_386, %c0_387] : memref<512x256xbf16, #tpu.memory_space<vmem>>, vector<512x256xbf16>
    %cst_388 = arith.constant dense<0.000000e+00> : vector<1x256xf32>
    %332 = tpu.matmul %330, %331, %cst_388 {dimension_numbers = #tpu.dot_dimension_numbers<[1], [0], [0], [1], [0, 0, 1, 1], [], []>} : vector<1x512xbf16>, vector<512x256xbf16>, vector<1x256xf32> -> vector<1x256xf32>
    %c0_389 = arith.constant 0 : index
    %c0_390 = arith.constant 0 : index
    %333 = vector.load %arg13[%c0_389, %c0_390] : memref<1x256xf32, #tpu.memory_space<vmem>>, vector<1x256xf32>
    %334 = arith.addf %332, %333 : vector<1x256xf32>
    %cst_391 = arith.constant 0.000000e+00 : f32
    %335 = vector.broadcast %cst_391 : f32 to vector<1x256xf32>
    %336 = arith.maximumf %334, %335 : vector<1x256xf32>
    %337 = arith.truncf %336 : vector<1x256xf32> to vector<1x256xbf16>
    %c0_392 = arith.constant 0 : index
    %c0_393 = arith.constant 0 : index
    %338 = vector.load %arg14[%c0_392, %c0_393] : memref<256x128xbf16, #tpu.memory_space<vmem>>, vector<256x128xbf16>
    %cst_394 = arith.constant dense<0.000000e+00> : vector<1x128xf32>
    %339 = tpu.matmul %337, %338, %cst_394 {dimension_numbers = #tpu.dot_dimension_numbers<[1], [0], [0], [1], [0, 0, 1, 1], [], []>} : vector<1x256xbf16>, vector<256x128xbf16>, vector<1x128xf32> -> vector<1x128xf32>
    %c0_395 = arith.constant 0 : index
    %c0_396 = arith.constant 0 : index
    %340 = vector.load %arg15[%c0_395, %c0_396] : memref<1x128xf32, #tpu.memory_space<vmem>>, vector<1x128xf32>
    %341 = arith.addf %339, %340 : vector<1x128xf32>
    %c0_397 = arith.constant 0 : index
    %c0_398 = arith.constant 0 : index
    %c0_399 = arith.constant 0 : index
    %342 = vector.load %arg16[%c0_397, %c0_398, %c0_399] : memref<1x1x128xf32, #tpu.memory_space<vmem>>, vector<1x1x128xf32>
    %343 = vector.shape_cast %342 : vector<1x1x128xf32> to vector<1x128xf32>
    %344 = vector.shape_cast %341 : vector<1x128xf32> to vector<1x1x128xf32>
    tpu.vector_store %arg16[%c0_397, %c0_398, %c0_399], %344 {strides = array<i32>} : memref<1x1x128xf32, #tpu.memory_space<vmem>>, vector<1x1x128xf32>,
    return
  }
  func.func @transform_0(%arg0: i32) -> (i32, i32, i32) {
    %c0_i32 = arith.constant 0 : i32
    %c0_i32_0 = arith.constant 0 : i32
    %c0_i32_1 = arith.constant 0 : i32
    return %arg0, %c0_i32, %c0_i32_0 : i32, i32, i32
  }
  func.func @transform_1(%arg0: i32) -> (i32, i32) {
    %c0_i32 = arith.constant 0 : i32
    %c0_i32_0 = arith.constant 0 : i32
    %c0_i32_1 = arith.constant 0 : i32
    return %c0_i32, %c0_i32_0 : i32, i32
  }
  func.func @transform_2(%arg0: i32) -> (i32, i32) {
    %c0_i32 = arith.constant 0 : i32
    %c0_i32_0 = arith.constant 0 : i32
    %c0_i32_1 = arith.constant 0 : i32
    return %c0_i32, %c0_i32_0 : i32, i32
  }
  func.func @transform_3(%arg0: i32) -> (i32, i32) {
    %c0_i32 = arith.constant 0 : i32
    %c0_i32_0 = arith.constant 0 : i32
    %c0_i32_1 = arith.constant 0 : i32
    return %c0_i32, %c0_i32_0 : i32, i32
  }
  func.func @transform_4(%arg0: i32) -> (i32, i32) {
    %c0_i32 = arith.constant 0 : i32
    %c0_i32_0 = arith.constant 0 : i32
    %c0_i32_1 = arith.constant 0 : i32
    return %c0_i32, %c0_i32_0 : i32, i32
  }
  func.func @transform_5(%arg0: i32) -> (i32, i32) {
    %c0_i32 = arith.constant 0 : i32
    %c0_i32_0 = arith.constant 0 : i32
    %c0_i32_1 = arith.constant 0 : i32
    return %c0_i32, %c0_i32_0 : i32, i32
  }
  func.func @transform_6(%arg0: i32) -> (i32, i32) {
    %c0_i32 = arith.constant 0 : i32
    %c0_i32_0 = arith.constant 0 : i32
    %c0_i32_1 = arith.constant 0 : i32
    return %c0_i32, %c0_i32_0 : i32, i32
  }
  func.func @transform_7(%arg0: i32) -> (i32, i32) {
    %c0_i32 = arith.constant 0 : i32
    %c0_i32_0 = arith.constant 0 : i32
    %c0_i32_1 = arith.constant 0 : i32
    return %c0_i32, %c0_i32_0 : i32, i32
  }
  func.func @transform_8(%arg0: i32) -> (i32, i32) {
    %c0_i32 = arith.constant 0 : i32
    %c0_i32_0 = arith.constant 0 : i32
    %c0_i32_1 = arith.constant 0 : i32
    return %c0_i32, %c0_i32_0 : i32, i32
  }
  func.func @transform_9(%arg0: i32) -> (i32, i32) {
    %c0_i32 = arith.constant 0 : i32
    %c0_i32_0 = arith.constant 0 : i32
    %c0_i32_1 = arith.constant 0 : i32
    return %c0_i32, %c0_i32_0 : i32, i32
  }
  func.func @transform_10(%arg0: i32) -> (i32, i32) {
    %c0_i32 = arith.constant 0 : i32
    %c0_i32_0 = arith.constant 0 : i32
    %c0_i32_1 = arith.constant 0 : i32
    return %c0_i32, %c0_i32_0 : i32, i32
  }
  func.func @transform_11(%arg0: i32) -> (i32, i32) {
    %c0_i32 = arith.constant 0 : i32
    %c0_i32_0 = arith.constant 0 : i32
    %c0_i32_1 = arith.constant 0 : i32
    return %c0_i32, %c0_i32_0 : i32, i32
  }
  func.func @transform_12(%arg0: i32) -> (i32, i32) {
    %c0_i32 = arith.constant 0 : i32
    %c0_i32_0 = arith.constant 0 : i32
    %c0_i32_1 = arith.constant 0 : i32
    return %c0_i32, %c0_i32_0 : i32, i32
  }
  func.func @transform_13(%arg0: i32) -> (i32, i32) {
    %c0_i32 = arith.constant 0 : i32
    %c0_i32_0 = arith.constant 0 : i32
    %c0_i32_1 = arith.constant 0 : i32
    return %c0_i32, %c0_i32_0 : i32, i32
  }
  func.func @transform_14(%arg0: i32) -> (i32, i32) {
    %c0_i32 = arith.constant 0 : i32
    %c0_i32_0 = arith.constant 0 : i32
    %c0_i32_1 = arith.constant 0 : i32
    return %c0_i32, %c0_i32_0 : i32, i32
  }
  func.func @transform_15(%arg0: i32) -> (i32, i32, i32) {
    %c0_i32 = arith.constant 0 : i32
    %c0_i32_0 = arith.constant 0 : i32
    %c0_i32_1 = arith.constant 0 : i32
    return %arg0, %c0_i32, %c0_i32_0 : i32, i32, i32
  }
}

</mosaic_0001>

<llo_original>
// kernel: forward.1
$region0: #{forward.1}
  #allocation0 [shape = 'u32[]', space=smem, size = 0x4, offset = 0x4, fixed_abs, tag = 'smem constant byte address 0x4 - core index']
  #allocation1 [shape = 'u32[144,128]{1,0:T(1,128)}', space=vmem, size = 0x12000, scoped, tag = 'internal scratch']
  #allocation2 [shape = 'bf16[4,44]{1,0:T(4,128)(2,1)}', space=vmem, size = 0x400, scoped, tag = 'scratch operand']
  #allocation3 [shape = 'bf16[8,39]{1,0:T(8,128)(2,1)}', space=vmem, size = 0x800, scoped, tag = 'scratch operand']
  #allocation4 [shape = 'bf16[24,36]{1,0:T(8,128)(2,1)}', space=vmem, size = 0x1800, scoped, tag = 'scratch operand']
  #allocation5 [shape = 'bf16[140,10]{1,0:T(8,128)(2,1)}', space=vmem, size = 0x9000, scoped, tag = 'scratch operand']
  #allocation6 [shape = 'bf16[280,4]{1,0:T(8,128)(2,1)}', space=vmem, size = 0x11800, scoped, tag = 'scratch operand']
  #allocation7 [shape = 'bf16[840,2]{1,0:T(8,128)(2,1)}', space=vmem, size = 0x34800, scoped, tag = 'scratch operand']
  %s0 = inlined_call_operand.vmem [shape: bf16[2,35,20], index: 0, kind: input, shape index: {}]
  %s1 = inlined_call_operand.hbm [shape: bf16[4,35], index: 1, kind: input, shape index: {}]
  %s2 = inlined_call_operand.hbm [shape: f32[4,1], index: 2, kind: input, shape index: {}]
  %s3 = inlined_call_operand.hbm [shape: bf16[8,140], index: 3, kind: input, shape index: {}]
  %s4 = inlined_call_operand.hbm [shape: f32[8,1], index: 4, kind: input, shape index: {}]
  %s5 = inlined_call_operand.hbm [shape: bf16[24,280], index: 5, kind: input, shape index: {}]
  %s6 = inlined_call_operand.vmem [shape: f32[24,1], index: 6, kind: input, shape index: {}]
  %s7 = inlined_call_operand.vmem [shape: bf16[80,840], index: 7, kind: input, shape index: {}]
  %s8 = inlined_call_operand.vmem [shape: f32[80,1], index: 8, kind: input, shape index: {}]
  %s9 = inlined_call_operand.hbm [shape: bf16[80,512], index: 9, kind: input, shape index: {}]
  %s10 = inlined_call_operand.hbm [shape: f32[1,512], index: 10, kind: input, shape index: {}]
  %s11 = inlined_call_operand.vmem [shape: bf16[512,256], index: 11, kind: input, shape index: {}]
  %s12 = inlined_call_operand.hbm [shape: f32[1,256], index: 12, kind: input, shape index: {}]
  %s13 = inlined_call_operand.hbm [shape: bf16[256,128], index: 13, kind: input, shape index: {}]
  %s14 = inlined_call_operand.hbm [shape: f32[1,128], index: 14, kind: input, shape index: {}]
  %s15 = inlined_call_operand.hbm [shape: f32[2,1,128], index: 15, kind: output, shape index: {}]
  %s16 = sld [smem:[#allocation0]]
  $region133: #{forward.1} parent=0
    _
  %s18 = ssub.s32 1, %s16
  %s19 = scalar_select 0, %s18, %s16
  $region1: #{forward.1} parent=0
    #allocation8 [shape = 'u8[1024]{0}', space=vmem, size = 0x400, scoped, tag = 'input window, operand 1, single buffered']
    #allocation9 [shape = 's32[2]{0}', space=sflag, size = 0x8, scoped, tag = 'scoped memory for forward.1']
    #allocation10 [shape = 's32[2]{0}', space=sflag, size = 0x8, scoped, tag = 'scoped memory for forward.1']
    #allocation11 [shape = 'u8[2048]{0}', space=vmem, size = 0x800, scoped, tag = 'input window, operand 2, single buffered']
    #allocation12 [shape = 's32[1]{0}', space=sflag, size = 0x4, scoped, tag = 'scoped memory for forward.1']
    #allocation13 [shape = 'u8[4096]{0}', space=vmem, size = 0x1000, scoped, tag = 'input window, operand 3, single buffered']
    #allocation14 [shape = 'u8[4096]{0}', space=vmem, size = 0x1000, scoped, tag = 'input window, operand 4, single buffered']
    #allocation15 [shape = 's32[1]{0}', space=sflag, size = 0x4, scoped, tag = 'scoped memory for forward.1']
    #allocation16 [shape = 'u8[18432]{0}', space=vmem, size = 0x4800, scoped, tag = 'input window, operand 5, single buffered']
    #allocation17 [shape = 'u8[81920]{0}', space=vmem, size = 0x14000, scoped, tag = 'input window, operand 9, single buffered']
    #allocation18 [shape = 's32[1]{0}', space=sflag, size = 0x4, scoped, tag = 'scoped memory for forward.1']
    #allocation19 [shape = 'u8[2048]{0}', space=vmem, size = 0x800, scoped, tag = 'input window, operand 10, single buffered']
    #allocation20 [shape = 'u8[1024]{0}', space=vmem, size = 0x400, scoped, tag = 'input window, operand 12, single buffered']
    #allocation21 [shape = 's32[1]{0}', space=sflag, size = 0x4, scoped, tag = 'scoped memory for forward.1']
    #allocation22 [shape = 'u8[65536]{0}', space=vmem, size = 0x10000, scoped, tag = 'input window, operand 13, single buffered']
    #allocation23 [shape = 'u8[512]{0}', space=vmem, size = 0x400, scoped, tag = 'input window, operand 14, single buffered']
    #allocation24 [shape = 's32[1]{0}', space=sflag, size = 0x4, scoped, tag = 'scoped memory for forward.1']
    #allocation25 [shape = 'u8[1024]{0}', space=vmem, size = 0x400, scoped, tag = 'output window, operand 0']
    %20 = vsyncpa [#allocation9], 0
    %21 = vsyncpa [#allocation12], 0
    %22 = vsyncpa [#allocation15], 0
    %23 = vsyncpa [#allocation18], 0
    %24 = vsyncpa [#allocation21], 0
    %25 = vsyncpa [#allocation24], 0
    %26 = vsyncpa [#allocation10], 0
    %s27 = scalar_lea.sflag [#allocation10], 1
    %28 = vsyncpa %s27, 0
    loop: start=0, step=1, limit=4
    $region2: #{forward.1} parent=1 // loop_pre_header
      _
    $region3: #{forward.1} parent=1 // loop_header
      %s30 = sphi 0, %s34
      %p31 = scmp.ge.s32.totalorder %s30, 4
      %s40 = sphi 0, %s42
      %s43 = sphi 0, %s40
      %s44 = sphi 0, %s43
      %s60 = sphi 0, %s44
      %s64 = sphi 0, %s64
      %s66 = sphi 0, %s64
      %s67 = sphi 0, %s66
      %s81 = sphi 0, %s67
      %s85 = sphi 0, %s85
      %s87 = sphi 0, %s85
      %s88 = sphi 0, %s87
      %s102 = sphi 0, %s88
      %s106 = sphi 0, %s106
      %s108 = sphi 0, %s106
      %s109 = sphi 0, %s108
      %s123 = sphi 0, %s109
      %s127 = sphi 0, %s127
      %s129 = sphi 0, %s127
      %s130 = sphi 0, %s129
      %s144 = sphi 0, %s130
      %s148 = sphi 0, %s148
      %s150 = sphi 0, %s148
      %s151 = sphi 0, %s150
      %s165 = sphi 0, %s151
      %s169 = sphi 0, %s169
      %s171 = sphi 0, %s169
      %s172 = sphi 0, %s171
      %s186 = sphi 0, %s172
      %s190 = sphi 0, %s190
      %s192 = sphi 0, %s190
      %s193 = sphi 0, %s192
      %s207 = sphi 0, %s193
      %s211 = sphi 0, %s211
      %s213 = sphi 0, %s211
      %s214 = sphi 0, %s213
      %s228 = sphi 0, %s214
      %s232 = sphi 0, %s232
      %s234 = sphi 0, %s232
      %s235 = sphi 0, %s234
      %s249 = sphi 0, %s235
      %s253 = sphi 0, %s253
      %s255 = sphi 0, %s253
      %s256 = sphi 0, %s255
      %s270 = sphi 0, %s256
      %s274 = sphi 0, %s274
      %s276 = sphi 0, %s274
      %s277 = sphi 0, %s276
      %s291 = sphi 0, %s277
      %s295 = sphi 0, %s295
      %s297 = sphi 0, %s295
      %s298 = sphi 0, %s297
      %s312 = sphi 0, %s298
      %s316 = sphi 0, %s316
      %s318 = sphi 0, %s316
      %s319 = sphi 0, %s318
      %s333 = sphi 0, %s319
      %s337 = sphi 0, %s337
      %s339 = sphi 0, %s337
      %s340 = sphi 0, %s339
      %s354 = sphi 0, %s340
      %s360 = sphi 0, %s362
      %s363 = sphi 0, %s360
      %s364 = sphi 0, %s363
      %s380 = sphi 0, %s364
    $region4: #{forward.1} parent=1 // loop_header_branch
      %33 = sbr.rel (%p31) target = $region8
    $region5: #{forward.1} parent=1 // loop_body
      %s35 = ssub.s32 %s30, 1
      %s36 = ssub.s32 %s30, 2
      %s37 = sadd.s32 %s30, 1
      %s38 = ssub.s32 %s30, %s37
      %p39 = scmp.eq.s32.totalorder %s38, 0
      %s41 = sadd.s32 %s40, 1
      %s42 = scalar_select %p39, %s40, %s41
      %p45 = pneg %p39
      %p46 = scmp.eq.s32.totalorder %s30, 1
      %p47 = por %p45, %p46
      %p48 = scmp.ne.s32.totalorder %s40, %s43
      %p49 = scmp.eq.s32.totalorder %s30, 0
      %p50 = por %p48, %p49
      %p51 = scmp.ne.s32.totalorder %s40, %s43
      %p52 = scmp.eq.s32.totalorder %s35, 1
      %p53 = por %p51, %p52
      %p54 = scmp.ne.s32.totalorder %s43, %s44
      %p55 = scmp.eq.s32.totalorder %s35, 0
      %p56 = por %p54, %p55
      %p57 = scmp.ne.s32.totalorder %s43, %s44
      %p58 = scmp.eq.s32.totalorder %s36, 1
      %p59 = por %p57, %p58
      %p61 = scmp.ne.s32.totalorder %s44, %s60
      %p62 = scmp.eq.s32.totalorder %s36, 0
      %p63 = por %p61, %p62
      %s65 = sadd.s32 %s64, 1
      %p68 = scmp.eq.s32.totalorder %s30, 1
      %p69 = scmp.ne.s32.totalorder %s64, %s66
      %p70 = scmp.eq.s32.totalorder %s30, 0
      %p71 = por %p69, %p70
      %p72 = scmp.ne.s32.totalorder %s64, %s66
      %p73 = scmp.eq.s32.totalorder %s35, 1
      %p74 = por %p72, %p73
      %p75 = scmp.ne.s32.totalorder %s66, %s67
      %p76 = scmp.eq.s32.totalorder %s35, 0
      %p77 = por %p75, %p76
      %p78 = scmp.ne.s32.totalorder %s66, %s67
      %p79 = scmp.eq.s32.totalorder %s36, 1
      %p80 = por %p78, %p79
      %p82 = scmp.ne.s32.totalorder %s67, %s81
      %p83 = scmp.eq.s32.totalorder %s36, 0
      %p84 = por %p82, %p83
      %s86 = sadd.s32 %s85, 1
      %p89 = scmp.eq.s32.totalorder %s30, 1
      %p90 = scmp.ne.s32.totalorder %s85, %s87
      %p91 = scmp.eq.s32.totalorder %s30, 0
      %p92 = por %p90, %p91
      %p93 = scmp.ne.s32.totalorder %s85, %s87
      %p94 = scmp.eq.s32.totalorder %s35, 1
      %p95 = por %p93, %p94
      %p96 = scmp.ne.s32.totalorder %s87, %s88
      %p97 = scmp.eq.s32.totalorder %s35, 0
      %p98 = por %p96, %p97
      %p99 = scmp.ne.s32.totalorder %s87, %s88
      %p100 = scmp.eq.s32.totalorder %s36, 1
      %p101 = por %p99, %p100
      %p103 = scmp.ne.s32.totalorder %s88, %s102
      %p104 = scmp.eq.s32.totalorder %s36, 0
      %p105 = por %p103, %p104
      %s107 = sadd.s32 %s106, 1
      %p110 = scmp.eq.s32.totalorder %s30, 1
      %p111 = scmp.ne.s32.totalorder %s106, %s108
      %p112 = scmp.eq.s32.totalorder %s30, 0
      %p113 = por %p111, %p112
      %p114 = scmp.ne.s32.totalorder %s106, %s108
      %p115 = scmp.eq.s32.totalorder %s35, 1
      %p116 = por %p114, %p115
      %p117 = scmp.ne.s32.totalorder %s108, %s109
      %p118 = scmp.eq.s32.totalorder %s35, 0
      %p119 = por %p117, %p118
      %p120 = scmp.ne.s32.totalorder %s108, %s109
      %p121 = scmp.eq.s32.totalorder %s36, 1
      %p122 = por %p120, %p121
      %p124 = scmp.ne.s32.totalorder %s109, %s123
      %p125 = scmp.eq.s32.totalorder %s36, 0
      %p126 = por %p124, %p125
      %s128 = sadd.s32 %s127, 1
      %p131 = scmp.eq.s32.totalorder %s30, 1
      %p132 = scmp.ne.s32.totalorder %s127, %s129
      %p133 = scmp.eq.s32.totalorder %s30, 0
      %p134 = por %p132, %p133
      %p135 = scmp.ne.s32.totalorder %s127, %s129
      %p136 = scmp.eq.s32.totalorder %s35, 1
      %p137 = por %p135, %p136
      %p138 = scmp.ne.s32.totalorder %s129, %s130
      %p139 = scmp.eq.s32.totalorder %s35, 0
      %p140 = por %p138, %p139
      %p141 = scmp.ne.s32.totalorder %s129, %s130
      %p142 = scmp.eq.s32.totalorder %s36, 1
      %p143 = por %p141, %p142
      %p145 = scmp.ne.s32.totalorder %s130, %s144
      %p146 = scmp.eq.s32.totalorder %s36, 0
      %p147 = por %p145, %p146
      %s149 = sadd.s32 %s148, 1
      %p152 = scmp.eq.s32.totalorder %s30, 1
      %p153 = scmp.ne.s32.totalorder %s148, %s150
      %p154 = scmp.eq.s32.totalorder %s30, 0
      %p155 = por %p153, %p154
      %p156 = scmp.ne.s32.totalorder %s148, %s150
      %p157 = scmp.eq.s32.totalorder %s35, 1
      %p158 = por %p156, %p157
      %p159 = scmp.ne.s32.totalorder %s150, %s151
      %p160 = scmp.eq.s32.totalorder %s35, 0
      %p161 = por %p159, %p160
      %p162 = scmp.ne.s32.totalorder %s150, %s151
      %p163 = scmp.eq.s32.totalorder %s36, 1
      %p164 = por %p162, %p163
      %p166 = scmp.ne.s32.totalorder %s151, %s165
      %p167 = scmp.eq.s32.totalorder %s36, 0
      %p168 = por %p166, %p167
      %s170 = sadd.s32 %s169, 1
      %p173 = scmp.eq.s32.totalorder %s30, 1
      %p174 = scmp.ne.s32.totalorder %s169, %s171
      %p175 = scmp.eq.s32.totalorder %s30, 0
      %p176 = por %p174, %p175
      %p177 = scmp.ne.s32.totalorder %s169, %s171
      %p178 = scmp.eq.s32.totalorder %s35, 1
      %p179 = por %p177, %p178
      %p180 = scmp.ne.s32.totalorder %s171, %s172
      %p181 = scmp.eq.s32.totalorder %s35, 0
      %p182 = por %p180, %p181
      %p183 = scmp.ne.s32.totalorder %s171, %s172
      %p184 = scmp.eq.s32.totalorder %s36, 1
      %p185 = por %p183, %p184
      %p187 = scmp.ne.s32.totalorder %s172, %s186
      %p188 = scmp.eq.s32.totalorder %s36, 0
      %p189 = por %p187, %p188
      %s191 = sadd.s32 %s190, 1
      %p194 = scmp.eq.s32.totalorder %s30, 1
      %p195 = scmp.ne.s32.totalorder %s190, %s192
      %p196 = scmp.eq.s32.totalorder %s30, 0
      %p197 = por %p195, %p196
      %p198 = scmp.ne.s32.totalorder %s190, %s192
      %p199 = scmp.eq.s32.totalorder %s35, 1
      %p200 = por %p198, %p199
      %p201 = scmp.ne.s32.totalorder %s192, %s193
      %p202 = scmp.eq.s32.totalorder %s35, 0
      %p203 = por %p201, %p202
      %p204 = scmp.ne.s32.totalorder %s192, %s193
      %p205 = scmp.eq.s32.totalorder %s36, 1
      %p206 = por %p204, %p205
      %p208 = scmp.ne.s32.totalorder %s193, %s207
      %p209 = scmp.eq.s32.totalorder %s36, 0
      %p210 = por %p208, %p209
      %s212 = sadd.s32 %s211, 1
      %p215 = scmp.eq.s32.totalorder %s30, 1
      %p216 = scmp.ne.s32.totalorder %s211, %s213
      %p217 = scmp.eq.s32.totalorder %s30, 0
      %p218 = por %p216, %p217
      %p219 = scmp.ne.s32.totalorder %s211, %s213
      %p220 = scmp.eq.s32.totalorder %s35, 1
      %p221 = por %p219, %p220
      %p222 = scmp.ne.s32.totalorder %s213, %s214
      %p223 = scmp.eq.s32.totalorder %s35, 0
      %p224 = por %p222, %p223
      %p225 = scmp.ne.s32.totalorder %s213, %s214
      %p226 = scmp.eq.s32.totalorder %s36, 1
      %p227 = por %p225, %p226
      %p229 = scmp.ne.s32.totalorder %s214, %s228
      %p230 = scmp.eq.s32.totalorder %s36, 0
      %p231 = por %p229, %p230
      %s233 = sadd.s32 %s232, 1
      %p236 = scmp.eq.s32.totalorder %s30, 1
      %p237 = scmp.ne.s32.totalorder %s232, %s234
      %p238 = scmp.eq.s32.totalorder %s30, 0
      %p239 = por %p237, %p238
      %p240 = scmp.ne.s32.totalorder %s232, %s234
      %p241 = scmp.eq.s32.totalorder %s35, 1
      %p242 = por %p240, %p241
      %p243 = scmp.ne.s32.totalorder %s234, %s235
      %p244 = scmp.eq.s32.totalorder %s35, 0
      %p245 = por %p243, %p244
      %p246 = scmp.ne.s32.totalorder %s234, %s235
      %p247 = scmp.eq.s32.totalorder %s36, 1
      %p248 = por %p246, %p247
      %p250 = scmp.ne.s32.totalorder %s235, %s249
      %p251 = scmp.eq.s32.totalorder %s36, 0
      %p252 = por %p250, %p251
      %s254 = sadd.s32 %s253, 1
      %p257 = scmp.eq.s32.totalorder %s30, 1
      %p258 = scmp.ne.s32.totalorder %s253, %s255
      %p259 = scmp.eq.s32.totalorder %s30, 0
      %p260 = por %p258, %p259
      %p261 = scmp.ne.s32.totalorder %s253, %s255
      %p262 = scmp.eq.s32.totalorder %s35, 1
      %p263 = por %p261, %p262
      %p264 = scmp.ne.s32.totalorder %s255, %s256
      %p265 = scmp.eq.s32.totalorder %s35, 0
      %p266 = por %p264, %p265
      %p267 = scmp.ne.s32.totalorder %s255, %s256
      %p268 = scmp.eq.s32.totalorder %s36, 1
      %p269 = por %p267, %p268
      %p271 = scmp.ne.s32.totalorder %s256, %s270
      %p272 = scmp.eq.s32.totalorder %s36, 0
      %p273 = por %p271, %p272
      %s275 = sadd.s32 %s274, 1
      %p278 = scmp.eq.s32.totalorder %s30, 1
      %p279 = scmp.ne.s32.totalorder %s274, %s276
      %p280 = scmp.eq.s32.totalorder %s30, 0
      %p281 = por %p279, %p280
      %p282 = scmp.ne.s32.totalorder %s274, %s276
      %p283 = scmp.eq.s32.totalorder %s35, 1
      %p284 = por %p282, %p283
      %p285 = scmp.ne.s32.totalorder %s276, %s277
      %p286 = scmp.eq.s32.totalorder %s35, 0
      %p287 = por %p285, %p286
      %p288 = scmp.ne.s32.totalorder %s276, %s277
      %p289 = scmp.eq.s32.totalorder %s36, 1
      %p290 = por %p288, %p289
      %p292 = scmp.ne.s32.totalorder %s277, %s291
      %p293 = scmp.eq.s32.totalorder %s36, 0
      %p294 = por %p292, %p293
      %s296 = sadd.s32 %s295, 1
      %p299 = scmp.eq.s32.totalorder %s30, 1
      %p300 = scmp.ne.s32.totalorder %s295, %s297
      %p301 = scmp.eq.s32.totalorder %s30, 0
      %p302 = por %p300, %p301
      %p303 = scmp.ne.s32.totalorder %s295, %s297
      %p304 = scmp.eq.s32.totalorder %s35, 1
      %p305 = por %p303, %p304
      %p306 = scmp.ne.s32.totalorder %s297, %s298
      %p307 = scmp.eq.s32.totalorder %s35, 0
      %p308 = por %p306, %p307
      %p309 = scmp.ne.s32.totalorder %s297, %s298
      %p310 = scmp.eq.s32.totalorder %s36, 1
      %p311 = por %p309, %p310
      %p313 = scmp.ne.s32.totalorder %s298, %s312
      %p314 = scmp.eq.s32.totalorder %s36, 0
      %p315 = por %p313, %p314
      %s317 = sadd.s32 %s316, 1
      %p320 = scmp.eq.s32.totalorder %s30, 1
      %p321 = scmp.ne.s32.totalorder %s316, %s318
      %p322 = scmp.eq.s32.totalorder %s30, 0
      %p323 = por %p321, %p322
      %p324 = scmp.ne.s32.totalorder %s316, %s318
      %p325 = scmp.eq.s32.totalorder %s35, 1
      %p326 = por %p324, %p325
      %p327 = scmp.ne.s32.totalorder %s318, %s319
      %p328 = scmp.eq.s32.totalorder %s35, 0
      %p329 = por %p327, %p328
      %p330 = scmp.ne.s32.totalorder %s318, %s319
      %p331 = scmp.eq.s32.totalorder %s36, 1
      %p332 = por %p330, %p331
      %p334 = scmp.ne.s32.totalorder %s319, %s333
      %p335 = scmp.eq.s32.totalorder %s36, 0
      %p336 = por %p334, %p335
      %s338 = sadd.s32 %s337, 1
      %p341 = scmp.eq.s32.totalorder %s30, 1
      %p342 = scmp.ne.s32.totalorder %s337, %s339
      %p343 = scmp.eq.s32.totalorder %s30, 0
      %p344 = por %p342, %p343
      %p345 = scmp.ne.s32.totalorder %s337, %s339
      %p346 = scmp.eq.s32.totalorder %s35, 1
      %p347 = por %p345, %p346
      %p348 = scmp.ne.s32.totalorder %s339, %s340
      %p349 = scmp.eq.s32.totalorder %s35, 0
      %p350 = por %p348, %p349
      %p351 = scmp.ne.s32.totalorder %s339, %s340
      %p352 = scmp.eq.s32.totalorder %s36, 1
      %p353 = por %p351, %p352
      %p355 = scmp.ne.s32.totalorder %s340, %s354
      %p356 = scmp.eq.s32.totalorder %s36, 0
      %p357 = por %p355, %p356
      %s358 = ssub.s32 %s30, %s37
      %p359 = scmp.eq.s32.totalorder %s358, 0
      %s361 = sadd.s32 %s360, 1
      %s362 = scalar_select %p359, %s360, %s361
      %p365 = pneg %p359
      %p366 = scmp.eq.s32.totalorder %s30, 1
      %p367 = por %p365, %p366
      %p368 = scmp.ne.s32.totalorder %s360, %s363
      %p369 = scmp.eq.s32.totalorder %s30, 0
      %p370 = por %p368, %p369
      %p371 = scmp.ne.s32.totalorder %s360, %s363
      %p372 = scmp.eq.s32.totalorder %s35, 1
      %p373 = por %p371, %p372
      %p374 = scmp.ne.s32.totalorder %s363, %s364
      %p375 = scmp.eq.s32.totalorder %s35, 0
      %p376 = por %p374, %p375
      %p377 = scmp.ne.s32.totalorder %s363, %s364
      %p378 = scmp.eq.s32.totalorder %s36, 1
      %p379 = por %p377, %p378
      %p381 = scmp.ne.s32.totalorder %s364, %s380
      %p382 = scmp.eq.s32.totalorder %s36, 0
      %p383 = por %p381, %p382
      %p384 = scmp.le.s32.totalorder 1, %s30
      %p385 = scmp.lt.s32.totalorder %s30, 3
      %p386 = pnand %p384, %p385
      %p387 = pneg %p386
      // Predicated region
      $region9: #{forward.1} parent=5 // pred_check
        _
      $region10: #{forward.1} parent=5 // pred_check_branch
        %389 = sbr.rel (%p386) target = $region12
      $region11: #{forward.1} parent=5 // pred_region
        %s390 = ssub.s32 %s30, 1
        // Predicated region
        $region13: #{forward.1} parent=11 // pred_check
          %p391 = pneg %p77
        $region14: #{forward.1} parent=11 // pred_check_branch
          %393 = sbr.rel (%p391) target = $region16
        $region15: #{forward.1} parent=11 // pred_region
          %s395 = ssub.s32 32, 32
          %396 = vsyncadd [#allocation9], %s395
          %s398 = sshll.u32 [#allocation8], 4
          %s399 = int_to_ptr.vmem [resolvable:$true] %s398
          %401 = dma.hbm_to_vmem [thread:$0]  %s1, 32, %s399, [#allocation9]
        $region16: #{forward.1} parent=11 // pred_fallthru
          _
        // Predicated region
        $region17: #{forward.1} parent=11 // pred_check
          %p402 = pneg %p98
        $region18: #{forward.1} parent=11 // pred_check_branch
          %404 = sbr.rel (%p402) target = $region20
        $region19: #{forward.1} parent=11 // pred_region
          %s406 = ssub.s32 64, 64
          %407 = vsyncadd [#allocation12], %s406
          %s409 = sshll.u32 [#allocation11], 4
          %s410 = int_to_ptr.vmem [resolvable:$true] %s409
          %412 = dma.hbm_to_vmem [thread:$0]  %s2, 64, %s410, [#allocation12]
        $region20: #{forward.1} parent=11 // pred_fallthru
          _
        // Predicated region
        $region21: #{forward.1} parent=11 // pred_check
          %p413 = pneg %p119
        $region22: #{forward.1} parent=11 // pred_check_branch
          %415 = sbr.rel (%p413) target = $region24
        $region23: #{forward.1} parent=11 // pred_region
          %s417 = ssub.s32 128, 128
          %418 = vsyncadd [#allocation12], %s417
          %s420 = sshll.u32 [#allocation13], 4
          %s421 = int_to_ptr.vmem [resolvable:$true] %s420
          %423 = dma.hbm_to_vmem [thread:$0]  %s3, 128, %s421, [#allocation12]
        $region24: #{forward.1} parent=11 // pred_fallthru
          _
        // Predicated region
        $region25: #{forward.1} parent=11 // pred_check
          %p424 = pneg %p140
        $region26: #{forward.1} parent=11 // pred_check_branch
          %426 = sbr.rel (%p424) target = $region28
        $region27: #{forward.1} parent=11 // pred_region
          %s428 = ssub.s32 128, 128
          %429 = vsyncadd [#allocation15], %s428
          %s431 = sshll.u32 [#allocation14], 4
          %s432 = int_to_ptr.vmem [resolvable:$true] %s431
          %434 = dma.hbm_to_vmem [thread:$0]  %s4, 128, %s432, [#allocation15]
        $region28: #{forward.1} parent=11 // pred_fallthru
          _
        // Predicated region
        $region29: #{forward.1} parent=11 // pred_check
          %p435 = pneg %p161
        $region30: #{forward.1} parent=11 // pred_check_branch
          %437 = sbr.rel (%p435) target = $region32
        $region31: #{forward.1} parent=11 // pred_region
          %s439 = ssub.s32 576, 576
          %440 = vsyncadd [#allocation15], %s439
          %s441 = sshll.u32 [#allocation16], 4
          %s442 = int_to_ptr.vmem [resolvable:$true] %s441
          %447 = dma.hbm_to_vmem [thread:$0]  %s5, 576, %s442, [#allocation15], 192, 192, 12
        $region32: #{forward.1} parent=11 // pred_fallthru
          _
        // Predicated region
        $region33: #{forward.1} parent=11 // pred_check
          %p448 = pneg %p182
        $region34: #{forward.1} parent=11 // pred_check_branch
          %450 = sbr.rel (%p448) target = $region36
        $region35: #{forward.1} parent=11 // pred_region
          _
        $region36: #{forward.1} parent=11 // pred_fallthru
          _
        // Predicated region
        $region37: #{forward.1} parent=11 // pred_check
          %p451 = pneg %p203
        $region38: #{forward.1} parent=11 // pred_check_branch
          %453 = sbr.rel (%p451) target = $region40
        $region39: #{forward.1} parent=11 // pred_region
          _
        $region40: #{forward.1} parent=11 // pred_fallthru
          _
        // Predicated region
        $region41: #{forward.1} parent=11 // pred_check
          %p454 = pneg %p224
        $region42: #{forward.1} parent=11 // pred_check_branch
          %456 = sbr.rel (%p454) target = $region44
        $region43: #{forward.1} parent=11 // pred_region
          _
        $region44: #{forward.1} parent=11 // pred_fallthru
          _
        // Predicated region
        $region45: #{forward.1} parent=11 // pred_check
          %p457 = pneg %p245
        $region46: #{forward.1} parent=11 // pred_check_branch
          %459 = sbr.rel (%p457) target = $region48
        $region47: #{forward.1} parent=11 // pred_region
          %s461 = ssub.s32 2560, 2560
          %462 = vsyncadd [#allocation18], %s461
          %s463 = sshll.u32 [#allocation17], 4
          %s464 = int_to_ptr.vmem [resolvable:$true] %s463
          %469 = dma.hbm_to_vmem [thread:$0]  %s9, 2560, %s464, [#allocation18], 256, 256, 16
        $region48: #{forward.1} parent=11 // pred_fallthru
          _
        // Predicated region
        $region49: #{forward.1} parent=11 // pred_check
          %p470 = pneg %p266
        $region50: #{forward.1} parent=11 // pred_check_branch
          %472 = sbr.rel (%p470) target = $region52
        $region51: #{forward.1} parent=11 // pred_region
          %s474 = ssub.s32 64, 64
          %475 = vsyncadd [#allocation18], %s474
          %s477 = sshll.u32 [#allocation19], 4
          %s478 = int_to_ptr.vmem [resolvable:$true] %s477
          %480 = dma.hbm_to_vmem [thread:$0]  %s10, 64, %s478, [#allocation18]
        $region52: #{forward.1} parent=11 // pred_fallthru
          _
        // Predicated region
        $region53: #{forward.1} parent=11 // pred_check
          %p481 = pneg %p287
        $region54: #{forward.1} parent=11 // pred_check_branch
          %483 = sbr.rel (%p481) target = $region56
        $region55: #{forward.1} parent=11 // pred_region
          _
        $region56: #{forward.1} parent=11 // pred_fallthru
          _
        // Predicated region
        $region57: #{forward.1} parent=11 // pred_check
          %p484 = pneg %p308
        $region58: #{forward.1} parent=11 // pred_check_branch
          %486 = sbr.rel (%p484) target = $region60
        $region59: #{forward.1} parent=11 // pred_region
          %s488 = ssub.s32 32, 32
          %489 = vsyncadd [#allocation21], %s488
          %s491 = sshll.u32 [#allocation20], 4
          %s492 = int_to_ptr.vmem [resolvable:$true] %s491
          %494 = dma.hbm_to_vmem [thread:$0]  %s12, 32, %s492, [#allocation21]
        $region60: #{forward.1} parent=11 // pred_fallthru
          _
        // Predicated region
        $region61: #{forward.1} parent=11 // pred_check
          %p495 = pneg %p329
        $region62: #{forward.1} parent=11 // pred_check_branch
          %497 = sbr.rel (%p495) target = $region64
        $region63: #{forward.1} parent=11 // pred_region
          %s499 = ssub.s32 2048, 2048
          %500 = vsyncadd [#allocation21], %s499
          %s501 = sshll.u32 [#allocation22], 4
          %s502 = int_to_ptr.vmem [resolvable:$true] %s501
          %507 = dma.hbm_to_vmem [thread:$0]  %s13, 2048, %s502, [#allocation21], 64, 64, 4
        $region64: #{forward.1} parent=11 // pred_fallthru
          _
        // Predicated region
        $region65: #{forward.1} parent=11 // pred_check
          %p508 = pneg %p350
        $region66: #{forward.1} parent=11 // pred_check_branch
          %510 = sbr.rel (%p508) target = $region68
        $region67: #{forward.1} parent=11 // pred_region
          %s512 = ssub.s32 16, 16
          %513 = vsyncadd [#allocation24], %s512
          %s515 = sshll.u32 [#allocation23], 4
          %s516 = int_to_ptr.vmem [resolvable:$true] %s515
          %518 = dma.hbm_to_vmem [thread:$0]  %s14, 16, %s516, [#allocation24]
        $region68: #{forward.1} parent=11 // pred_fallthru
          _
      $region12: #{forward.1} parent=5 // pred_fallthru
        _
      %p519 = scmp.lt.s32.totalorder %s30, 2
      // Predicated region
      $region69: #{forward.1} parent=5 // pred_check
        %p520 = pneg %p519
      $region70: #{forward.1} parent=5 // pred_check_branch
        %522 = sbr.rel (%p520) target = $region72
      $region71: #{forward.1} parent=5 // pred_region
        // Predicated region
        $region73: #{forward.1} parent=71 // pred_check
          %p523 = pneg %p50
        $region74: #{forward.1} parent=71 // pred_check_branch
          %525 = sbr.rel (%p523) target = $region76
        $region75: #{forward.1} parent=71 // pred_region
          %p526 = scmp.lt.s32.totalorder %s30, 1
          %s527 = scalar_select %p526, %s30, 1
          %s528 = smul.addr %s527, 5
          %s529 = smul.addr %s528, 4
          %s530 = scalar_lea.vmem %s0, %s529
        $region76: #{forward.1} parent=71 // pred_fallthru
          _
      $region72: #{forward.1} parent=5 // pred_fallthru
        _
      %p531 = scmp.le.s32.totalorder 1, %s30
      %p532 = scmp.lt.s32.totalorder %s30, 3
      %p533 = pnand %p531, %p532
      %p534 = pneg %p533
      // Predicated region
      $region77: #{forward.1} parent=5 // pred_check
        _
      $region78: #{forward.1} parent=5 // pred_check_branch
        %536 = sbr.rel (%p533) target = $region80
      $region79: #{forward.1} parent=5 // pred_region
        %s537 = ssub.s32 %s30, 1
        // Predicated region
        $region81: #{forward.1} parent=79 // pred_check
          %p538 = pneg %p77
        $region82: #{forward.1} parent=79 // pred_check_branch
          %540 = sbr.rel (%p538) target = $region84
        $region83: #{forward.1} parent=79 // pred_region
          %541 = dma.done [#allocation9], 32
        $region84: #{forward.1} parent=79 // pred_fallthru
          _
        // Predicated region
        $region85: #{forward.1} parent=79 // pred_check
          %p542 = pneg %p98
        $region86: #{forward.1} parent=79 // pred_check_branch
          %544 = sbr.rel (%p542) target = $region88
        $region87: #{forward.1} parent=79 // pred_region
          %545 = dma.done [#allocation12], 64
        $region88: #{forward.1} parent=79 // pred_fallthru
          _
        // Predicated region
        $region89: #{forward.1} parent=79 // pred_check
          %p546 = pneg %p119
        $region90: #{forward.1} parent=79 // pred_check_branch
          %548 = sbr.rel (%p546) target = $region92
        $region91: #{forward.1} parent=79 // pred_region
          %549 = dma.done [#allocation12], 128
        $region92: #{forward.1} parent=79 // pred_fallthru
          _
        // Predicated region
        $region93: #{forward.1} parent=79 // pred_check
          %p550 = pneg %p140
        $region94: #{forward.1} parent=79 // pred_check_branch
          %552 = sbr.rel (%p550) target = $region96
        $region95: #{forward.1} parent=79 // pred_region
          %553 = dma.done [#allocation15], 128
        $region96: #{forward.1} parent=79 // pred_fallthru
          _
        // Predicated region
        $region97: #{forward.1} parent=79 // pred_check
          %p554 = pneg %p161
        $region98: #{forward.1} parent=79 // pred_check_branch
          %556 = sbr.rel (%p554) target = $region100
        $region99: #{forward.1} parent=79 // pred_region
          %557 = dma.done [#allocation15], 576
        $region100: #{forward.1} parent=79 // pred_fallthru
          _
        // Predicated region
        $region101: #{forward.1} parent=79 // pred_check
          %p558 = pneg %p245
        $region102: #{forward.1} parent=79 // pred_check_branch
          %560 = sbr.rel (%p558) target = $region104
        $region103: #{forward.1} parent=79 // pred_region
          %561 = dma.done [#allocation18], 2560
        $region104: #{forward.1} parent=79 // pred_fallthru
          _
        // Predicated region
        $region105: #{forward.1} parent=79 // pred_check
          %p562 = pneg %p266
        $region106: #{forward.1} parent=79 // pred_check_branch
          %564 = sbr.rel (%p562) target = $region108
        $region107: #{forward.1} parent=79 // pred_region
          %565 = dma.done [#allocation18], 64
        $region108: #{forward.1} parent=79 // pred_fallthru
          _
        // Predicated region
        $region109: #{forward.1} parent=79 // pred_check
          %p566 = pneg %p308
        $region110: #{forward.1} parent=79 // pred_check_branch
          %568 = sbr.rel (%p566) target = $region112
        $region111: #{forward.1} parent=79 // pred_region
          %569 = dma.done [#allocation21], 32
        $region112: #{forward.1} parent=79 // pred_fallthru
          _
        // Predicated region
        $region113: #{forward.1} parent=79 // pred_check
          %p570 = pneg %p329
        $region114: #{forward.1} parent=79 // pred_check_branch
          %572 = sbr.rel (%p570) target = $region116
        $region115: #{forward.1} parent=79 // pred_region
          %573 = dma.done [#allocation21], 2048
        $region116: #{forward.1} parent=79 // pred_fallthru
          _
        // Predicated region
        $region117: #{forward.1} parent=79 // pred_check
          %p574 = pneg %p350
        $region118: #{forward.1} parent=79 // pred_check_branch
          %576 = sbr.rel (%p574) target = $region120
        $region119: #{forward.1} parent=79 // pred_region
          %577 = dma.done [#allocation24], 16
        $region120: #{forward.1} parent=79 // pred_fallthru
          _
        %p578 = scmp.lt.s32.totalorder %s35, 1
        %s579 = scalar_select %p578, %s35, 1
        %s580 = smul.addr %s579, 5
        %s581 = smul.addr %s580, 4
        %s582 = scalar_lea.vmem %s0, %s581
        %p583 = pneg %p56
        %p584 = pneg %p53
        %p585 = pneg %p77
        %p586 = pneg %p74
        %p587 = pneg %p98
        %p588 = pneg %p95
        %p589 = pneg %p119
        %p590 = pneg %p116
        %p591 = pneg %p140
        %p592 = pneg %p137
        %p593 = pneg %p161
        %p594 = pneg %p158
        %p595 = pneg %p182
        %p596 = pneg %p179
        %p597 = pneg %p203
        %p598 = pneg %p200
        %p599 = pneg %p224
        %p600 = pneg %p221
        %p601 = pneg %p245
        %p602 = pneg %p242
        %p603 = pneg %p266
        %p604 = pneg %p263
        %p605 = pneg %p287
        %p606 = pneg %p284
        %p607 = pneg %p308
        %p608 = pneg %p305
        %p609 = pneg %p329
        %p610 = pneg %p326
        %p611 = pneg %p350
        %p612 = pneg %p347
        %p613 = pneg %p376
        %p614 = pneg %p373
        %s615 = sand.u32 %s363, 1
        %s616 = scalar_lea.sflag [#allocation10], %s615
        %s617 = sand.u32 %s363, 1
        %s618 = scalar_lea.vmem [#allocation25], %s617
        %p619 = scmp.lt.s32.totalorder %s35, 1
        %s620 = scalar_select %p619, %s35, 1
        %s621 = smul.addr %s620, 5
        %s622 = smul.addr %s621, 4
        %s623 = scalar_lea.vmem %s0, %s622
        %v625 = vld [vmem:[%s623] sm:$0xf]
        %v626 = vld [vmem:[%s623 + $0x4] sm:$0xf]
        %v627 = vld [vmem:[%s623 + $0x8] sm:$0xf]
        %v628 = vld [vmem:[%s623 + $0xc] sm:$0xf]
        %v629 = vld [vmem:[%s623 + $0x10] sm:$0x3]
        %v630 = vlaneseq
        %v631 = vshrl.u32 %v630, 7
        %v632 = vadd.s32 %v631, 8
        %v633 = vadd.s32 %v631, 16
        %v634 = vlaneseq
        %v635 = vand.u32 %v634, 127
        %vm636 = vcmp.lt.s32.totalorder %v635, 10
        %v637 = vmul.u32 %v635, 2
        %v638 = vsub.s32 %v635, 10
        %v639 = vmul.u32 %v638, 2
        %v640 = vadd.s32 %v639, 1
        %v641 = vsel %vm636, %v637, %v640
        %vm642 = vcmp.eq.s32.totalorder %v631, %v641
        %vm643 = vcmp.eq.s32.totalorder %v632, %v641
        %vm644 = vcmp.eq.s32.totalorder %v633, %v641
        %v645 = vsel %vm642, 1, 0
        %v646 = vsel %vm643, 1, 0
        %v647 = vsel %vm644, 1, 0
        %v648 = vcvt.s32.f32 %v645
        %v649 = vcvt.s32.f32 %v646
        %v650 = vcvt.s32.f32 %v647
        %v651 = vpack.c.bf16 %v649, %v648
        %v652 = vpack.c.bf16 %v650, %v650
        %v658 = vunpack.c.l.b16 %v625
        %v659 = vunpack.c.l.b16 %v626
        %v660 = vunpack.c.l.b16 %v627
        %v661 = vunpack.c.l.b16 %v628
        %v662 = vunpack.c.l.b16 %v629
        %v663 = vpack.c.b16 %v659, %v658
        %v664 = vpack.c.b16 %v661, %v660
        %v665 = vpack.c.b16 %v662, %v662
        %vm666 = vcmask 162816
        %v668 = vsel %vm666, %v663, 0
        %v671 = vsel %vm666, %v664, 0
        %v674 = vsel %vm666, %v665, 0
        %vm676 = vcmask 1041408
        %v678 = vsel %vm676, %v652, 0
        %680 = vmatprep.subr.bf16.mxu0 0
        %681 = vmatpush1.bf16.msra.mxu0 0
        %682 = vmatprep.subr.bf16.mxu0 0
        %683 = vmatpush1.bf16.msra.mxu0 0
        %684 = vmatprep.subr.bf16.mxu0 0
        %685 = vmatpush1.bf16.msra.mxu0 0
        %686 = vmatprep.subr.bf16.mxu0 0
        %687 = vmatpush1.bf16.msra.mxu0 0
        %688 = vmatprep.subr.bf16.mxu0 0
        %689 = vmatpush1.bf16.msra.mxu0 0
        %690 = vmatprep.subr.bf16.mxu0 0
        %691 = vmatpush1.bf16.msra.mxu0 0
        %692 = vmatprep.subr.bf16.mxu0 0
        %693 = vmatpush1.bf16.msra.mxu0 %v678
        %694 = vmatprep.subr.bf16.mxu0 0
        %695 = vmatpush1.bf16.msra.mxu0 %v651
        %696 = vmatprep.subr.bf16.mxu0 0
        %697 = vmatpush2.bf16.msra.mxu0 0
        %698 = vmatprep.subr.bf16.mxu0 0
        %699 = vmatpush2.bf16.msra.mxu0 0
        %700 = vmatprep.subr.bf16.mxu0 0
        %701 = vmatpush2.bf16.msra.mxu0 0
        %702 = vmatprep.subr.bf16.mxu0 0
        %703 = vmatpush2.bf16.msra.mxu0 0
        %704 = vmatprep.subr.bf16.mxu0 0
        %705 = vmatpush2.bf16.msra.mxu0 0
        %706 = vmatprep.subr.bf16.mxu0 0
        %707 = vmatpush2.bf16.msra.mxu0 0
        %708 = vmatprep.subr.bf16.mxu0 0
        %709 = vmatpush2.bf16.msra.mxu0 0
        %710 = vmatprep.subr.bf16.mxu0 0
        %711 = vmatpush2.bf16.msra.mxu0 0
        %712 = vmatprep.mubr.bf16.mxu0 0
        %713 = vmatmul.mubr.bf16.gmra.mxu0 %v668
        %v714 = vpop.f32.mrf.mxu0
        %v715 = vadd.f32 0.0, %v714
        %v716 = vpop.f32.mrf.mxu0
        %v717 = vpop.f32.mrf.mxu0
        %v718 = vadd.f32 0.0, %v717
        %v719 = vpop.f32.mrf.mxu0
        %720 = vmatprep.mubr.bf16.mxu0 0
        %721 = vmatmul.mubr.bf16.gmra.mxu0 %v671
        %v722 = vpop.f32.mrf.mxu0
        %v723 = vadd.f32 0.0, %v722
        %v724 = vpop.f32.mrf.mxu0
        %v725 = vpop.f32.mrf.mxu0
        %v726 = vadd.f32 0.0, %v725
        %v727 = vpop.f32.mrf.mxu0
        %728 = vmatprep.mubr.bf16.mxu0 0
        %729 = vmatmul.mubr.bf16.gmra.mxu0 %v674
        %v730 = vpop.f32.mrf.mxu0
        %v731 = vadd.f32 0.0, %v730
        %v732 = vpop.f32.mrf.mxu0
        %v733 = vpop.f32.mrf.mxu0
        %v734 = vpop.f32.mrf.mxu0
        %735 = vdwg.mxu0
        %v736 = vpack.c.bf16 %v718, %v715
        %v737 = vpack.c.bf16 %v726, %v723
        %v738 = vpack.c.bf16 %v731, %v731
        %v739 = vld [vmem:[#allocation8] sm:$0x3]
        %vm740 = vcmask 285696
        %v742 = vsel %vm740, %v739, 0
        %vm744 = vcmask 1040384
        %v745 = vsel %vm744, 4294967295, 65535
        %v746 = vsel %vm676, %v745, 0
        %v748 = vand.u32 %v738, %v746
        %750 = vmatprep.subr.bf16.mxu0 0
        %751 = vmatpush1.bf16.msra.mxu0 0
        %752 = vmatprep.subr.bf16.mxu0 0
        %753 = vmatpush1.bf16.msra.mxu0 0
        %754 = vmatprep.subr.bf16.mxu0 0
        %755 = vmatpush1.bf16.msra.mxu0 0
        %756 = vmatprep.subr.bf16.mxu0 0
        %757 = vmatpush1.bf16.msra.mxu0 0
        %758 = vmatprep.subr.bf16.mxu0 0
        %759 = vmatpush1.bf16.msra.mxu0 0
        %760 = vmatprep.subr.bf16.mxu0 0
        %761 = vmatpush1.bf16.msra.mxu0 %v748
        %762 = vmatprep.subr.bf16.mxu0 0
        %763 = vmatpush1.bf16.msra.mxu0 %v737
        %764 = vmatprep.subr.bf16.mxu0 0
        %765 = vmatpush1.bf16.msra.mxu0 %v736
        %766 = vmatprep.subr.bf16.mxu0 0
        %767 = vmatpush2.bf16.msra.mxu0 0
        %768 = vmatprep.subr.bf16.mxu0 0
        %769 = vmatpush2.bf16.msra.mxu0 0
        %770 = vmatprep.subr.bf16.mxu0 0
        %771 = vmatpush2.bf16.msra.mxu0 0
        %772 = vmatprep.subr.bf16.mxu0 0
        %773 = vmatpush2.bf16.msra.mxu0 0
        %774 = vmatprep.subr.bf16.mxu0 0
        %775 = vmatpush2.bf16.msra.mxu0 0
        %776 = vmatprep.subr.bf16.mxu0 0
        %777 = vmatpush2.bf16.msra.mxu0 0
        %778 = vmatprep.subr.bf16.mxu0 0
        %779 = vmatpush2.bf16.msra.mxu0 0
        %780 = vmatprep.subr.bf16.mxu0 0
        %781 = vmatpush2.bf16.msra.mxu0 0
        %782 = vmatprep.mubr.bf16.mxu0 0
        %783 = vmatmul.mubr.bf16.gmra.mxu0 %v742
        %v784 = vpop.f32.mrf.mxu0
        %v785 = vadd.f32 0.0, %v784
        %v786 = vpop.f32.mrf.mxu0
        %v787 = vpop.f32.mrf.mxu0
        %v788 = vpop.f32.mrf.mxu0
        %789 = vdwg.mxu0
        %791 = vrot.lane.b32.xlu0 %v785, 118
        %v792 = vpop.permute.xlu0 %791
        %v794 = vmax.f32 %v785, %v792
        %v795 = vld [vmem:[#allocation11] sm:$0xf]
        %797 = vset.pattern.permute.xlu0 0
        %798 = vperm.xlu0 %797, %v795
        %v799 = vpop.permute.xlu0 %798
        %v801 = vadd.f32 %v794, %v799
        %v802 = vmax.f32 %v801, 0.0
        %vm803 = vcmask 353280
        %804 = vst.msk [vmem:[#allocation2] sm:$0x3] %vm803, 0
        %v805 = vpack.c.bf16 %v802, %v802
        %v808 = vunpack.c.l.s4 1983009808
        %v809 = vunpack.c.0.s8 %v808
        %v810 = vlaneseq
        %v811 = vshrl.u32 %v810, 7
        %v812 = vsub.s32 %v809, %v811
        %v813 = vrot.slane %v805, %v812
        %814 = vrot.lane.b32.xlu0 %v813, 17
        %v815 = vpop.permute.xlu0 %814
        %vm817 = vcmask 214152
        %818 = vst.msk [vmem:[#allocation2] sm:$0x3] %vm817, %v815
        %v819 = vld [vmem:[#allocation2] sm:$0x3]
        %vm820 = vcmask 74752
        %821 = vst.msk [vmem:[#allocation5] sm:$0x3] %vm820, %v819
        %v822 = vld [vmem:[#allocation2] sm:$0x3]
        %v824 = vcombine.low %v822, %v822
        %v826 = vunpack.c.l.s4 1983009808
        %v827 = vunpack.c.0.s8 %v826
        %v828 = vlaneseq
        %v829 = vshrl.u32 %v828, 7
        %v830 = vsub.s32 %v827, %v829
        %v831 = vrot.slane %v824, %v830
        %832 = vrot.lane.b32.xlu0 %v831, 127
        %v833 = vpop.permute.xlu0 %832
        %vm835 = vcmask 76802
        %836 = vst.msk [vmem:[#allocation5] sm:$0xc] %vm835, %v833
        %v837 = vld [vmem:[#allocation2] sm:$0x3]
        %v840 = vunpack.c.l.s4 1983009808
        %v841 = vunpack.c.0.s8 %v840
        %v842 = vlaneseq
        %v843 = vshrl.u32 %v842, 7
        %v844 = vsub.s32 %v841, %v843
        %v845 = vrot.slane %v837, %v844
        %846 = vrot.lane.b32.xlu0 %v845, 126
        %v847 = vpop.permute.xlu0 %846
        %849 = vst.msk [vmem:[#allocation5 + $0x4] sm:$0x3] %vm820, %v847
        %v850 = vld [vmem:[#allocation2] sm:$0x3]
        %v852 = vcombine.low %v850, %v850
        %v854 = vunpack.c.l.s4 1983009808
        %v855 = vunpack.c.0.s8 %v854
        %v856 = vlaneseq
        %v857 = vshrl.u32 %v856, 7
        %v858 = vsub.s32 %v855, %v857
        %v859 = vrot.slane %v852, %v858
        %860 = vrot.lane.b32.xlu0 %v859, 125
        %v861 = vpop.permute.xlu0 %860
        %863 = vst.msk [vmem:[#allocation5 + $0x4] sm:$0xc] %vm835, %v861
        %v864 = vld [vmem:[#allocation2] sm:$0x3]
        %v867 = vunpack.c.l.s4 1983009808
        %v868 = vunpack.c.0.s8 %v867
        %v869 = vlaneseq
        %v870 = vshrl.u32 %v869, 7
        %v871 = vsub.s32 %v868, %v870
        %v872 = vrot.slane %v864, %v871
        %873 = vrot.lane.b32.xlu0 %v872, 124
        %v874 = vpop.permute.xlu0 %873
        %876 = vst.msk [vmem:[#allocation5 + $0x8] sm:$0x3] %vm820, %v874
        %v877 = vld [vmem:[#allocation2] sm:$0x3]
        %v879 = vcombine.low %v877, %v877
        %v881 = vunpack.c.l.s4 1983009808
        %v882 = vunpack.c.0.s8 %v881
        %v883 = vlaneseq
        %v884 = vshrl.u32 %v883, 7
        %v885 = vsub.s32 %v882, %v884
        %v886 = vrot.slane %v879, %v885
        %887 = vrot.lane.b32.xlu0 %v886, 123
        %v888 = vpop.permute.xlu0 %887
        %890 = vst.msk [vmem:[#allocation5 + $0x8] sm:$0xc] %vm835, %v888
        %v891 = vld [vmem:[#allocation2] sm:$0x3]
        %v894 = vunpack.c.l.s4 1983009808
        %v895 = vunpack.c.0.s8 %v894
        %v896 = vlaneseq
        %v897 = vshrl.u32 %v896, 7
        %v898 = vsub.s32 %v895, %v897
        %v899 = vrot.slane %v891, %v898
        %900 = vrot.lane.b32.xlu0 %v899, 122
        %v901 = vpop.permute.xlu0 %900
        %903 = vst.msk [vmem:[#allocation5 + $0xc] sm:$0x3] %vm820, %v901
        %v904 = vld [vmem:[#allocation2] sm:$0x3]
        %v906 = vcombine.low %v904, %v904
        %v908 = vunpack.c.l.s4 1983009808
        %v909 = vunpack.c.0.s8 %v908
        %v910 = vlaneseq
        %v911 = vshrl.u32 %v910, 7
        %v912 = vsub.s32 %v909, %v911
        %v913 = vrot.slane %v906, %v912
        %914 = vrot.lane.b32.xlu0 %v913, 121
        %v915 = vpop.permute.xlu0 %914
        %917 = vst.msk [vmem:[#allocation5 + $0xc] sm:$0xc] %vm835, %v915
        %v918 = vld [vmem:[#allocation2] sm:$0x3]
        %v921 = vunpack.c.l.s4 1983009808
        %v922 = vunpack.c.0.s8 %v921
        %v923 = vlaneseq
        %v924 = vshrl.u32 %v923, 7
        %v925 = vsub.s32 %v922, %v924
        %v926 = vrot.slane %v918, %v925
        %927 = vrot.lane.b32.xlu0 %v926, 120
        %v928 = vpop.permute.xlu0 %927
        %930 = vst.msk [vmem:[#allocation5 + $0x10] sm:$0x3] %vm820, %v928
        %v931 = vld [vmem:[#allocation2] sm:$0x3]
        %v933 = vcombine.low %v931, %v931
        %v935 = vunpack.c.l.s4 1983009808
        %v936 = vunpack.c.0.s8 %v935
        %v937 = vlaneseq
        %v938 = vshrl.u32 %v937, 7
        %v939 = vsub.s32 %v936, %v938
        %v940 = vrot.slane %v933, %v939
        %941 = vrot.lane.b32.xlu0 %v940, 119
        %v942 = vpop.permute.xlu0 %941
        %944 = vst.msk [vmem:[#allocation5 + $0x10] sm:$0xc] %vm835, %v942
        %v945 = vld [vmem:[#allocation2] sm:$0x3]
        %v948 = vunpack.c.l.s4 1983009808
        %v949 = vunpack.c.0.s8 %v948
        %v950 = vlaneseq
        %v951 = vshrl.u32 %v950, 7
        %v952 = vsub.s32 %v949, %v951
        %v953 = vrot.slane %v945, %v952
        %954 = vrot.lane.b32.xlu0 %v953, 118
        %v955 = vpop.permute.xlu0 %954
        %957 = vst.msk [vmem:[#allocation5 + $0x14] sm:$0x3] %vm820, %v955
        %v958 = vld [vmem:[#allocation2] sm:$0x3]
        %v960 = vcombine.low %v958, %v958
        %v962 = vunpack.c.l.s4 1983009808
        %v963 = vunpack.c.0.s8 %v962
        %v964 = vlaneseq
        %v965 = vshrl.u32 %v964, 7
        %v966 = vsub.s32 %v963, %v965
        %v967 = vrot.slane %v960, %v966
        %968 = vrot.lane.b32.xlu0 %v967, 117
        %v969 = vpop.permute.xlu0 %968
        %971 = vst.msk [vmem:[#allocation5 + $0x14] sm:$0xc] %vm835, %v969
        %v972 = vld [vmem:[#allocation2] sm:$0x3]
        %v975 = vunpack.c.l.s4 1983009808
        %v976 = vunpack.c.0.s8 %v975
        %v977 = vlaneseq
        %v978 = vshrl.u32 %v977, 7
        %v979 = vsub.s32 %v976, %v978
        %v980 = vrot.slane %v972, %v979
        %981 = vrot.lane.b32.xlu0 %v980, 116
        %v982 = vpop.permute.xlu0 %981
        %984 = vst.msk [vmem:[#allocation5 + $0x18] sm:$0x3] %vm820, %v982
        %v985 = vld [vmem:[#allocation2] sm:$0x3]
        %v987 = vcombine.low %v985, %v985
        %v989 = vunpack.c.l.s4 1983009808
        %v990 = vunpack.c.0.s8 %v989
        %v991 = vlaneseq
        %v992 = vshrl.u32 %v991, 7
        %v993 = vsub.s32 %v990, %v992
        %v994 = vrot.slane %v987, %v993
        %995 = vrot.lane.b32.xlu0 %v994, 115
        %v996 = vpop.permute.xlu0 %995
        %998 = vst.msk [vmem:[#allocation5 + $0x18] sm:$0xc] %vm835, %v996
        %v999 = vld [vmem:[#allocation2] sm:$0x3]
        %v1002 = vunpack.c.l.s4 1983009808
        %v1003 = vunpack.c.0.s8 %v1002
        %v1004 = vlaneseq
        %v1005 = vshrl.u32 %v1004, 7
        %v1006 = vsub.s32 %v1003, %v1005
        %v1007 = vrot.slane %v999, %v1006
        %1008 = vrot.lane.b32.xlu0 %v1007, 114
        %v1009 = vpop.permute.xlu0 %1008
        %1011 = vst.msk [vmem:[#allocation5 + $0x1c] sm:$0x3] %vm820, %v1009
        %v1012 = vld [vmem:[#allocation2] sm:$0x3]
        %v1014 = vcombine.low %v1012, %v1012
        %v1016 = vunpack.c.l.s4 1983009808
        %v1017 = vunpack.c.0.s8 %v1016
        %v1018 = vlaneseq
        %v1019 = vshrl.u32 %v1018, 7
        %v1020 = vsub.s32 %v1017, %v1019
        %v1021 = vrot.slane %v1014, %v1020
        %1022 = vrot.lane.b32.xlu0 %v1021, 113
        %v1023 = vpop.permute.xlu0 %1022
        %1025 = vst.msk [vmem:[#allocation5 + $0x1c] sm:$0xc] %vm835, %v1023
        %v1026 = vld [vmem:[#allocation2] sm:$0x3]
        %v1029 = vunpack.c.l.s4 1983009808
        %v1030 = vunpack.c.0.s8 %v1029
        %v1031 = vlaneseq
        %v1032 = vshrl.u32 %v1031, 7
        %v1033 = vsub.s32 %v1030, %v1032
        %v1034 = vrot.slane %v1026, %v1033
        %1035 = vrot.lane.b32.xlu0 %v1034, 112
        %v1036 = vpop.permute.xlu0 %1035
        %1038 = vst.msk [vmem:[#allocation5 + $0x20] sm:$0x3] %vm820, %v1036
        %v1039 = vld [vmem:[#allocation2] sm:$0x3]
        %v1041 = vcombine.low %v1039, %v1039
        %v1043 = vunpack.c.l.s4 1983009808
        %v1044 = vunpack.c.0.s8 %v1043
        %v1045 = vlaneseq
        %v1046 = vshrl.u32 %v1045, 7
        %v1047 = vsub.s32 %v1044, %v1046
        %v1048 = vrot.slane %v1041, %v1047
        %1049 = vrot.lane.b32.xlu0 %v1048, 111
        %v1050 = vpop.permute.xlu0 %1049
        %1052 = vst.msk [vmem:[#allocation5 + $0x20] sm:$0xc] %vm835, %v1050
        %v1053 = vld [vmem:[#allocation2] sm:$0x3]
        %v1056 = vunpack.c.l.s4 1983009808
        %v1057 = vunpack.c.0.s8 %v1056
        %v1058 = vlaneseq
        %v1059 = vshrl.u32 %v1058, 7
        %v1060 = vsub.s32 %v1057, %v1059
        %v1061 = vrot.slane %v1053, %v1060
        %1062 = vrot.lane.b32.xlu0 %v1061, 110
        %v1063 = vpop.permute.xlu0 %1062
        %1065 = vst.msk [vmem:[#allocation5 + $0x24] sm:$0x3] %vm820, %v1063
        %v1066 = vld [vmem:[#allocation2] sm:$0x3]
        %v1068 = vcombine.low %v1066, %v1066
        %v1070 = vunpack.c.l.s4 1983009808
        %v1071 = vunpack.c.0.s8 %v1070
        %v1072 = vlaneseq
        %v1073 = vshrl.u32 %v1072, 7
        %v1074 = vsub.s32 %v1071, %v1073
        %v1075 = vrot.slane %v1068, %v1074
        %1076 = vrot.lane.b32.xlu0 %v1075, 109
        %v1077 = vpop.permute.xlu0 %1076
        %1079 = vst.msk [vmem:[#allocation5 + $0x24] sm:$0xc] %vm835, %v1077
        %v1080 = vld [vmem:[#allocation2] sm:$0x3]
        %v1083 = vunpack.c.l.s4 1983009808
        %v1084 = vunpack.c.0.s8 %v1083
        %v1085 = vlaneseq
        %v1086 = vshrl.u32 %v1085, 7
        %v1087 = vsub.s32 %v1084, %v1086
        %v1088 = vrot.slane %v1080, %v1087
        %1089 = vrot.lane.b32.xlu0 %v1088, 108
        %v1090 = vpop.permute.xlu0 %1089
        %1092 = vst.msk [vmem:[#allocation5 + $0x28] sm:$0x3] %vm820, %v1090
        %v1093 = vld [vmem:[#allocation2] sm:$0x3]
        %v1095 = vcombine.low %v1093, %v1093
        %v1097 = vunpack.c.l.s4 1983009808
        %v1098 = vunpack.c.0.s8 %v1097
        %v1099 = vlaneseq
        %v1100 = vshrl.u32 %v1099, 7
        %v1101 = vsub.s32 %v1098, %v1100
        %v1102 = vrot.slane %v1095, %v1101
        %1103 = vrot.lane.b32.xlu0 %v1102, 107
        %v1104 = vpop.permute.xlu0 %1103
        %1106 = vst.msk [vmem:[#allocation5 + $0x28] sm:$0xc] %vm835, %v1104
        %v1107 = vld [vmem:[#allocation2] sm:$0x3]
        %v1110 = vunpack.c.l.s4 1983009808
        %v1111 = vunpack.c.0.s8 %v1110
        %v1112 = vlaneseq
        %v1113 = vshrl.u32 %v1112, 7
        %v1114 = vsub.s32 %v1111, %v1113
        %v1115 = vrot.slane %v1107, %v1114
        %1116 = vrot.lane.b32.xlu0 %v1115, 106
        %v1117 = vpop.permute.xlu0 %1116
        %1119 = vst.msk [vmem:[#allocation5 + $0x2c] sm:$0x3] %vm820, %v1117
        %v1120 = vld [vmem:[#allocation2] sm:$0x3]
        %v1122 = vcombine.low %v1120, %v1120
        %v1124 = vunpack.c.l.s4 1983009808
        %v1125 = vunpack.c.0.s8 %v1124
        %v1126 = vlaneseq
        %v1127 = vshrl.u32 %v1126, 7
        %v1128 = vsub.s32 %v1125, %v1127
        %v1129 = vrot.slane %v1122, %v1128
        %1130 = vrot.lane.b32.xlu0 %v1129, 105
        %v1131 = vpop.permute.xlu0 %1130
        %1133 = vst.msk [vmem:[#allocation5 + $0x2c] sm:$0xc] %vm835, %v1131
        %v1134 = vld [vmem:[#allocation2] sm:$0x3]
        %v1137 = vunpack.c.l.s4 1983009808
        %v1138 = vunpack.c.0.s8 %v1137
        %v1139 = vlaneseq
        %v1140 = vshrl.u32 %v1139, 7
        %v1141 = vsub.s32 %v1138, %v1140
        %v1142 = vrot.slane %v1134, %v1141
        %1143 = vrot.lane.b32.xlu0 %v1142, 104
        %v1144 = vpop.permute.xlu0 %1143
        %1146 = vst.msk [vmem:[#allocation5 + $0x30] sm:$0x3] %vm820, %v1144
        %v1147 = vld [vmem:[#allocation2] sm:$0x3]
        %v1149 = vcombine.low %v1147, %v1147
        %v1151 = vunpack.c.l.s4 1983009808
        %v1152 = vunpack.c.0.s8 %v1151
        %v1153 = vlaneseq
        %v1154 = vshrl.u32 %v1153, 7
        %v1155 = vsub.s32 %v1152, %v1154
        %v1156 = vrot.slane %v1149, %v1155
        %1157 = vrot.lane.b32.xlu0 %v1156, 103
        %v1158 = vpop.permute.xlu0 %1157
        %1160 = vst.msk [vmem:[#allocation5 + $0x30] sm:$0xc] %vm835, %v1158
        %v1161 = vld [vmem:[#allocation2] sm:$0x3]
        %v1164 = vunpack.c.l.s4 1983009808
        %v1165 = vunpack.c.0.s8 %v1164
        %v1166 = vlaneseq
        %v1167 = vshrl.u32 %v1166, 7
        %v1168 = vsub.s32 %v1165, %v1167
        %v1169 = vrot.slane %v1161, %v1168
        %1170 = vrot.lane.b32.xlu0 %v1169, 102
        %v1171 = vpop.permute.xlu0 %1170
        %1173 = vst.msk [vmem:[#allocation5 + $0x34] sm:$0x3] %vm820, %v1171
        %v1174 = vld [vmem:[#allocation2] sm:$0x3]
        %v1176 = vcombine.low %v1174, %v1174
        %v1178 = vunpack.c.l.s4 1983009808
        %v1179 = vunpack.c.0.s8 %v1178
        %v1180 = vlaneseq
        %v1181 = vshrl.u32 %v1180, 7
        %v1182 = vsub.s32 %v1179, %v1181
        %v1183 = vrot.slane %v1176, %v1182
        %1184 = vrot.lane.b32.xlu0 %v1183, 101
        %v1185 = vpop.permute.xlu0 %1184
        %1187 = vst.msk [vmem:[#allocation5 + $0x34] sm:$0xc] %vm835, %v1185
        %v1188 = vld [vmem:[#allocation2] sm:$0x3]
        %v1191 = vunpack.c.l.s4 1983009808
        %v1192 = vunpack.c.0.s8 %v1191
        %v1193 = vlaneseq
        %v1194 = vshrl.u32 %v1193, 7
        %v1195 = vsub.s32 %v1192, %v1194
        %v1196 = vrot.slane %v1188, %v1195
        %1197 = vrot.lane.b32.xlu0 %v1196, 100
        %v1198 = vpop.permute.xlu0 %1197
        %1200 = vst.msk [vmem:[#allocation5 + $0x38] sm:$0x3] %vm820, %v1198
        %v1201 = vld [vmem:[#allocation2] sm:$0x3]
        %v1203 = vcombine.low %v1201, %v1201
        %v1205 = vunpack.c.l.s4 1983009808
        %v1206 = vunpack.c.0.s8 %v1205
        %v1207 = vlaneseq
        %v1208 = vshrl.u32 %v1207, 7
        %v1209 = vsub.s32 %v1206, %v1208
        %v1210 = vrot.slane %v1203, %v1209
        %1211 = vrot.lane.b32.xlu0 %v1210, 99
        %v1212 = vpop.permute.xlu0 %1211
        %1214 = vst.msk [vmem:[#allocation5 + $0x38] sm:$0xc] %vm835, %v1212
        %v1215 = vld [vmem:[#allocation2] sm:$0x3]
        %v1218 = vunpack.c.l.s4 1983009808
        %v1219 = vunpack.c.0.s8 %v1218
        %v1220 = vlaneseq
        %v1221 = vshrl.u32 %v1220, 7
        %v1222 = vsub.s32 %v1219, %v1221
        %v1223 = vrot.slane %v1215, %v1222
        %1224 = vrot.lane.b32.xlu0 %v1223, 98
        %v1225 = vpop.permute.xlu0 %1224
        %1227 = vst.msk [vmem:[#allocation5 + $0x3c] sm:$0x3] %vm820, %v1225
        %v1228 = vld [vmem:[#allocation2] sm:$0x3]
        %v1230 = vcombine.low %v1228, %v1228
        %v1232 = vunpack.c.l.s4 1983009808
        %v1233 = vunpack.c.0.s8 %v1232
        %v1234 = vlaneseq
        %v1235 = vshrl.u32 %v1234, 7
        %v1236 = vsub.s32 %v1233, %v1235
        %v1237 = vrot.slane %v1230, %v1236
        %1238 = vrot.lane.b32.xlu0 %v1237, 97
        %v1239 = vpop.permute.xlu0 %1238
        %1241 = vst.msk [vmem:[#allocation5 + $0x3c] sm:$0xc] %vm835, %v1239
        %v1242 = vld [vmem:[#allocation2] sm:$0x3]
        %v1245 = vunpack.c.l.s4 1983009808
        %v1246 = vunpack.c.0.s8 %v1245
        %v1247 = vlaneseq
        %v1248 = vshrl.u32 %v1247, 7
        %v1249 = vsub.s32 %v1246, %v1248
        %v1250 = vrot.slane %v1242, %v1249
        %1251 = vrot.lane.b32.xlu0 %v1250, 96
        %v1252 = vpop.permute.xlu0 %1251
        %1254 = vst.msk [vmem:[#allocation5 + $0x40] sm:$0x3] %vm820, %v1252
        %v1255 = vld [vmem:[#allocation2] sm:$0x3]
        %v1257 = vcombine.low %v1255, %v1255
        %v1259 = vunpack.c.l.s4 1983009808
        %v1260 = vunpack.c.0.s8 %v1259
        %v1261 = vlaneseq
        %v1262 = vshrl.u32 %v1261, 7
        %v1263 = vsub.s32 %v1260, %v1262
        %v1264 = vrot.slane %v1257, %v1263
        %1265 = vrot.lane.b32.xlu0 %v1264, 95
        %v1266 = vpop.permute.xlu0 %1265
        %1268 = vst.msk [vmem:[#allocation5 + $0x40] sm:$0xc] %vm835, %v1266
        %v1269 = vld [vmem:[#allocation2] sm:$0x3]
        %v1272 = vunpack.c.l.s4 1983009808
        %v1273 = vunpack.c.0.s8 %v1272
        %v1274 = vlaneseq
        %v1275 = vshrl.u32 %v1274, 7
        %v1276 = vsub.s32 %v1273, %v1275
        %v1277 = vrot.slane %v1269, %v1276
        %1278 = vrot.lane.b32.xlu0 %v1277, 94
        %v1279 = vpop.permute.xlu0 %1278
        %1281 = vst.msk [vmem:[#allocation5 + $0x44] sm:$0x3] %vm820, %v1279
        %v1282 = vld [vmem:[#allocation5] sm:$0xf]
        %v1283 = vld [vmem:[#allocation5 + $0x4] sm:$0xf]
        %v1284 = vld [vmem:[#allocation5 + $0x8] sm:$0xf]
        %v1285 = vld [vmem:[#allocation5 + $0xc] sm:$0xf]
        %v1286 = vld [vmem:[#allocation5 + $0x10] sm:$0xf]
        %v1287 = vld [vmem:[#allocation5 + $0x14] sm:$0xf]
        %v1288 = vld [vmem:[#allocation5 + $0x18] sm:$0xf]
        %v1289 = vld [vmem:[#allocation5 + $0x1c] sm:$0xf]
        %v1290 = vld [vmem:[#allocation5 + $0x20] sm:$0xf]
        %v1291 = vld [vmem:[#allocation5 + $0x24] sm:$0xf]
        %v1292 = vld [vmem:[#allocation5 + $0x28] sm:$0xf]
        %v1293 = vld [vmem:[#allocation5 + $0x2c] sm:$0xf]
        %v1294 = vld [vmem:[#allocation5 + $0x30] sm:$0xf]
        %v1295 = vld [vmem:[#allocation5 + $0x34] sm:$0xf]
        %v1296 = vld [vmem:[#allocation5 + $0x38] sm:$0xf]
        %v1297 = vld [vmem:[#allocation5 + $0x3c] sm:$0xf]
        %v1298 = vld [vmem:[#allocation5 + $0x40] sm:$0xf]
        %v1299 = vld [vmem:[#allocation5 + $0x44] sm:$0x3]
        %vm1300 = vcmp.lt.s32.totalorder %v635, 5
        %v1301 = vsub.s32 %v635, 5
        %v1302 = vmul.u32 %v1301, 2
        %v1303 = vadd.s32 %v1302, 1
        %v1304 = vsel %vm1300, %v637, %v1303
        %vm1305 = vcmp.eq.s32.totalorder %v631, %v1304
        %vm1306 = vcmp.eq.s32.totalorder %v632, %v1304
        %v1307 = vsel %vm1305, 1, 0
        %v1308 = vsel %vm1306, 1, 0
        %v1309 = vcvt.s32.f32 %v1307
        %v1310 = vcvt.s32.f32 %v1308
        %v1311 = vpack.c.bf16 %v1310, %v1309
        %v1330 = vunpack.c.l.b16 %v1282
        %v1331 = vunpack.c.l.b16 %v1283
        %v1332 = vunpack.c.l.b16 %v1284
        %v1333 = vunpack.c.l.b16 %v1285
        %v1334 = vunpack.c.l.b16 %v1286
        %v1335 = vunpack.c.l.b16 %v1287
        %v1336 = vunpack.c.l.b16 %v1288
        %v1337 = vunpack.c.l.b16 %v1289
        %v1338 = vunpack.c.l.b16 %v1290
        %v1339 = vunpack.c.l.b16 %v1291
        %v1340 = vunpack.c.l.b16 %v1292
        %v1341 = vunpack.c.l.b16 %v1293
        %v1342 = vunpack.c.l.b16 %v1294
        %v1343 = vunpack.c.l.b16 %v1295
        %v1344 = vunpack.c.l.b16 %v1296
        %v1345 = vunpack.c.l.b16 %v1297
        %v1346 = vunpack.c.l.b16 %v1298
        %v1347 = vunpack.c.l.b16 %v1299
        %v1348 = vpack.c.b16 %v1331, %v1330
        %v1349 = vpack.c.b16 %v1333, %v1332
        %v1350 = vpack.c.b16 %v1335, %v1334
        %v1351 = vpack.c.b16 %v1337, %v1336
        %v1352 = vpack.c.b16 %v1339, %v1338
        %v1353 = vpack.c.b16 %v1341, %v1340
        %v1354 = vpack.c.b16 %v1343, %v1342
        %v1355 = vpack.c.b16 %v1345, %v1344
        %v1356 = vpack.c.b16 %v1347, %v1346
        %vm1357 = vcmask 80896
        %v1359 = vsel %vm1357, %v1348, 0
        %v1362 = vsel %vm1357, %v1349, 0
        %v1365 = vsel %vm1357, %v1350, 0
        %v1368 = vsel %vm1357, %v1351, 0
        %v1371 = vsel %vm1357, %v1352, 0
        %v1374 = vsel %vm1357, %v1353, 0
        %v1377 = vsel %vm1357, %v1354, 0
        %v1380 = vsel %vm1357, %v1355, 0
        %v1383 = vsel %vm1357, %v1356, 0
        %vm1385 = vcmask 1044480
        %v1387 = vsel %vm1385, %v1311, 0
        %1389 = vmatprep.subr.bf16.mxu0 0
        %1390 = vmatpush1.bf16.msra.mxu0 0
        %1391 = vmatprep.subr.bf16.mxu0 0
        %1392 = vmatpush1.bf16.msra.mxu0 0
        %1393 = vmatprep.subr.bf16.mxu0 0
        %1394 = vmatpush1.bf16.msra.mxu0 0
        %1395 = vmatprep.subr.bf16.mxu0 0
        %1396 = vmatpush1.bf16.msra.mxu0 0
        %1397 = vmatprep.subr.bf16.mxu0 0
        %1398 = vmatpush1.bf16.msra.mxu0 0
        %1399 = vmatprep.subr.bf16.mxu0 0
        %1400 = vmatpush1.bf16.msra.mxu0 0
        %1401 = vmatprep.subr.bf16.mxu0 0
        %1402 = vmatpush1.bf16.msra.mxu0 0
        %1403 = vmatprep.subr.bf16.mxu0 0
        %1404 = vmatpush1.bf16.msra.mxu0 %v1387
        %1405 = vmatprep.subr.bf16.mxu0 0
        %1406 = vmatpush2.bf16.msra.mxu0 0
        %1407 = vmatprep.subr.bf16.mxu0 0
        %1408 = vmatpush2.bf16.msra.mxu0 0
        %1409 = vmatprep.subr.bf16.mxu0 0
        %1410 = vmatpush2.bf16.msra.mxu0 0
        %1411 = vmatprep.subr.bf16.mxu0 0
        %1412 = vmatpush2.bf16.msra.mxu0 0
        %1413 = vmatprep.subr.bf16.mxu0 0
        %1414 = vmatpush2.bf16.msra.mxu0 0
        %1415 = vmatprep.subr.bf16.mxu0 0
        %1416 = vmatpush2.bf16.msra.mxu0 0
        %1417 = vmatprep.subr.bf16.mxu0 0
        %1418 = vmatpush2.bf16.msra.mxu0 0
        %1419 = vmatprep.subr.bf16.mxu0 0
        %1420 = vmatpush2.bf16.msra.mxu0 0
        %1421 = vmatprep.mubr.bf16.mxu0 0
        %1422 = vmatmul.mubr.bf16.gmra.mxu0 %v1359
        %v1423 = vpop.f32.mrf.mxu0
        %v1424 = vadd.f32 0.0, %v1423
        %v1425 = vpop.f32.mrf.mxu0
        %v1426 = vpop.f32.mrf.mxu0
        %v1427 = vadd.f32 0.0, %v1426
        %v1428 = vpop.f32.mrf.mxu0
        %1429 = vmatprep.mubr.bf16.mxu0 0
        %1430 = vmatmul.mubr.bf16.gmra.mxu0 %v1362
        %v1431 = vpop.f32.mrf.mxu0
        %v1432 = vadd.f32 0.0, %v1431
        %v1433 = vpop.f32.mrf.mxu0
        %v1434 = vpop.f32.mrf.mxu0
        %v1435 = vadd.f32 0.0, %v1434
        %v1436 = vpop.f32.mrf.mxu0
        %1437 = vmatprep.mubr.bf16.mxu0 0
        %1438 = vmatmul.mubr.bf16.gmra.mxu0 %v1365
        %v1439 = vpop.f32.mrf.mxu0
        %v1440 = vadd.f32 0.0, %v1439
        %v1441 = vpop.f32.mrf.mxu0
        %v1442 = vpop.f32.mrf.mxu0
        %v1443 = vadd.f32 0.0, %v1442
        %v1444 = vpop.f32.mrf.mxu0
        %1445 = vmatprep.mubr.bf16.mxu0 0
        %1446 = vmatmul.mubr.bf16.gmra.mxu0 %v1368
        %v1447 = vpop.f32.mrf.mxu0
        %v1448 = vadd.f32 0.0, %v1447
        %v1449 = vpop.f32.mrf.mxu0
        %v1450 = vpop.f32.mrf.mxu0
        %v1451 = vadd.f32 0.0, %v1450
        %v1452 = vpop.f32.mrf.mxu0
        %1453 = vmatprep.mubr.bf16.mxu0 0
        %1454 = vmatmul.mubr.bf16.gmra.mxu0 %v1371
        %v1455 = vpop.f32.mrf.mxu0
        %v1456 = vadd.f32 0.0, %v1455
        %v1457 = vpop.f32.mrf.mxu0
        %v1458 = vpop.f32.mrf.mxu0
        %v1459 = vadd.f32 0.0, %v1458
        %v1460 = vpop.f32.mrf.mxu0
        %1461 = vmatprep.mubr.bf16.mxu0 0
        %1462 = vmatmul.mubr.bf16.gmra.mxu0 %v1374
        %v1463 = vpop.f32.mrf.mxu0
        %v1464 = vadd.f32 0.0, %v1463
        %v1465 = vpop.f32.mrf.mxu0
        %v1466 = vpop.f32.mrf.mxu0
        %v1467 = vadd.f32 0.0, %v1466
        %v1468 = vpop.f32.mrf.mxu0
        %1469 = vmatprep.mubr.bf16.mxu0 0
        %1470 = vmatmul.mubr.bf16.gmra.mxu0 %v1377
        %v1471 = vpop.f32.mrf.mxu0
        %v1472 = vadd.f32 0.0, %v1471
        %v1473 = vpop.f32.mrf.mxu0
        %v1474 = vpop.f32.mrf.mxu0
        %v1475 = vadd.f32 0.0, %v1474
        %v1476 = vpop.f32.mrf.mxu0
        %1477 = vmatprep.mubr.bf16.mxu0 0
        %1478 = vmatmul.mubr.bf16.gmra.mxu0 %v1380
        %v1479 = vpop.f32.mrf.mxu0
        %v1480 = vadd.f32 0.0, %v1479
        %v1481 = vpop.f32.mrf.mxu0
        %v1482 = vpop.f32.mrf.mxu0
        %v1483 = vadd.f32 0.0, %v1482
        %v1484 = vpop.f32.mrf.mxu0
        %1485 = vmatprep.mubr.bf16.mxu0 0
        %1486 = vmatmul.mubr.bf16.gmra.mxu0 %v1383
        %v1487 = vpop.f32.mrf.mxu0
        %v1488 = vadd.f32 0.0, %v1487
        %v1489 = vpop.f32.mrf.mxu0
        %v1490 = vpop.f32.mrf.mxu0
        %v1491 = vadd.f32 0.0, %v1490
        %v1492 = vpop.f32.mrf.mxu0
        %1493 = vdwg.mxu0
        %v1494 = vpack.c.bf16 %v1427, %v1424
        %v1495 = vpack.c.bf16 %v1435, %v1432
        %v1496 = vpack.c.bf16 %v1443, %v1440
        %v1497 = vpack.c.bf16 %v1451, %v1448
        %v1498 = vpack.c.bf16 %v1459, %v1456
        %v1499 = vpack.c.bf16 %v1467, %v1464
        %v1500 = vpack.c.bf16 %v1475, %v1472
        %v1501 = vpack.c.bf16 %v1483, %v1480
        %v1502 = vpack.c.bf16 %v1491, %v1488
        %v1503 = vld [vmem:[#allocation13] sm:$0xff]
        %v1505 = vunpack.c.l.b16 %v1503
        %v1506 = vunpack.c.h.b16 %v1503
        %v1507 = vpack.c.b16 %v1505, %v1505
        %v1508 = vpack.c.b16 %v1506, %v1506
        %vm1510 = vcmask 97280
        %v1512 = vsel %vm1510, %v1508, 0
        %vm1514 = vcmask 1045504
        %v1516 = vsel %vm1514, %v1502, 0
        %1518 = vmatprep.subr.bf16.mxu0 0
        %1519 = vmatpush1.bf16.msra.mxu0 %v1501
        %1520 = vmatprep.subr.bf16.mxu0 0
        %1521 = vmatpush1.bf16.msra.mxu0 %v1500
        %1522 = vmatprep.subr.bf16.mxu0 0
        %1523 = vmatpush1.bf16.msra.mxu0 %v1499
        %1524 = vmatprep.subr.bf16.mxu0 0
        %1525 = vmatpush1.bf16.msra.mxu0 %v1498
        %1526 = vmatprep.subr.bf16.mxu0 0
        %1527 = vmatpush1.bf16.msra.mxu0 %v1497
        %1528 = vmatprep.subr.bf16.mxu0 0
        %1529 = vmatpush1.bf16.msra.mxu0 %v1496
        %1530 = vmatprep.subr.bf16.mxu0 0
        %1531 = vmatpush1.bf16.msra.mxu0 %v1495
        %1532 = vmatprep.subr.bf16.mxu0 0
        %1533 = vmatpush1.bf16.msra.mxu0 %v1494
        %1534 = vmatprep.subr.bf16.mxu0 0
        %1535 = vmatpush2.bf16.msra.mxu0 0
        %1536 = vmatprep.subr.bf16.mxu0 0
        %1537 = vmatpush2.bf16.msra.mxu0 0
        %1538 = vmatprep.subr.bf16.mxu0 0
        %1539 = vmatpush2.bf16.msra.mxu0 0
        %1540 = vmatprep.subr.bf16.mxu0 0
        %1541 = vmatpush2.bf16.msra.mxu0 0
        %1542 = vmatprep.subr.bf16.mxu0 0
        %1543 = vmatpush2.bf16.msra.mxu0 0
        %1544 = vmatprep.subr.bf16.mxu0 0
        %1545 = vmatpush2.bf16.msra.mxu0 0
        %1546 = vmatprep.subr.bf16.mxu0 0
        %1547 = vmatpush2.bf16.msra.mxu0 0
        %1548 = vmatprep.subr.bf16.mxu0 0
        %1549 = vmatpush2.bf16.msra.mxu0 %v1516
        %1550 = vmatprep.mubr.bf16.mxu0 %v1512
        %1551 = vmatmul.mubr.bf16.gmra.mxu0 %v1507
        %v1552 = vpop.f32.mrf.mxu0
        %v1553 = vadd.f32 0.0, %v1552
        %v1554 = vpop.f32.mrf.mxu0
        %v1555 = vpop.f32.mrf.mxu0
        %v1556 = vpop.f32.mrf.mxu0
        %1557 = vdwg.mxu0
        %1559 = vrot.lane.b32.xlu0 %v1553, 123
        %v1560 = vpop.permute.xlu0 %1559
        %v1562 = vmax.f32 %v1553, %v1560
        %v1563 = vld [vmem:[#allocation14] sm:$0xff]
        %1565 = vset.pattern.permute.xlu0 0
        %1566 = vperm.xlu0 %1565, %v1563
        %v1567 = vpop.permute.xlu0 %1566
        %v1569 = vadd.f32 %v1562, %v1567
        %v1570 = vmax.f32 %v1569, 0.0
        %vm1571 = vcmask 314368
        %1572 = vst.msk [vmem:[#allocation3] sm:$0xf] %vm1571, 0
        %v1573 = vpack.c.bf16 %v1570, %v1570
        %v1575 = vunpack.c.l.b16 %v1573
        %v1576 = vpack.c.b16 %v1575, %v1575
        %1577 = vrot.lane.b32.xlu0 %v1576, 17
        %v1578 = vpop.permute.xlu0 %1577
        %vm1580 = vcmask 175240
        %1581 = vst.msk [vmem:[#allocation3] sm:$0xf] %vm1580, %v1578
        %v1582 = vld [vmem:[#allocation3] sm:$0xf]
        %vm1583 = vcmask 27648
        %1584 = vst.msk [vmem:[#allocation6] sm:$0xf] %vm1583, %v1582
        %v1585 = vld [vmem:[#allocation3] sm:$0xf]
        %1587 = vrot.lane.b32.xlu0 %v1585, 127
        %v1588 = vpop.permute.xlu0 %1587
        %1590 = vst.msk [vmem:[#allocation6 + $0x4] sm:$0xf] %vm1583, %v1588
        %v1591 = vld [vmem:[#allocation3] sm:$0xf]
        %1593 = vrot.lane.b32.xlu0 %v1591, 126
        %v1594 = vpop.permute.xlu0 %1593
        %1596 = vst.msk [vmem:[#allocation6 + $0x8] sm:$0xf] %vm1583, %v1594
        %v1597 = vld [vmem:[#allocation3] sm:$0xf]
        %1599 = vrot.lane.b32.xlu0 %v1597, 125
        %v1600 = vpop.permute.xlu0 %1599
        %1602 = vst.msk [vmem:[#allocation6 + $0xc] sm:$0xf] %vm1583, %v1600
        %v1603 = vld [vmem:[#allocation3] sm:$0xf]
        %1605 = vrot.lane.b32.xlu0 %v1603, 124
        %v1606 = vpop.permute.xlu0 %1605
        %1608 = vst.msk [vmem:[#allocation6 + $0x10] sm:$0xf] %vm1583, %v1606
        %v1609 = vld [vmem:[#allocation3] sm:$0xf]
        %1611 = vrot.lane.b32.xlu0 %v1609, 123
        %v1612 = vpop.permute.xlu0 %1611
        %1614 = vst.msk [vmem:[#allocation6 + $0x14] sm:$0xf] %vm1583, %v1612
        %v1615 = vld [vmem:[#allocation3] sm:$0xf]
        %1617 = vrot.lane.b32.xlu0 %v1615, 122
        %v1618 = vpop.permute.xlu0 %1617
        %1620 = vst.msk [vmem:[#allocation6 + $0x18] sm:$0xf] %vm1583, %v1618
        %v1621 = vld [vmem:[#allocation3] sm:$0xf]
        %1623 = vrot.lane.b32.xlu0 %v1621, 121
        %v1624 = vpop.permute.xlu0 %1623
        %1626 = vst.msk [vmem:[#allocation6 + $0x1c] sm:$0xf] %vm1583, %v1624
        %v1627 = vld [vmem:[#allocation3] sm:$0xf]
        %1629 = vrot.lane.b32.xlu0 %v1627, 120
        %v1630 = vpop.permute.xlu0 %1629
        %1632 = vst.msk [vmem:[#allocation6 + $0x20] sm:$0xf] %vm1583, %v1630
        %v1633 = vld [vmem:[#allocation3] sm:$0xf]
        %1635 = vrot.lane.b32.xlu0 %v1633, 119
        %v1636 = vpop.permute.xlu0 %1635
        %1638 = vst.msk [vmem:[#allocation6 + $0x24] sm:$0xf] %vm1583, %v1636
        %v1639 = vld [vmem:[#allocation3] sm:$0xf]
        %1641 = vrot.lane.b32.xlu0 %v1639, 118
        %v1642 = vpop.permute.xlu0 %1641
        %1644 = vst.msk [vmem:[#allocation6 + $0x28] sm:$0xf] %vm1583, %v1642
        %v1645 = vld [vmem:[#allocation3] sm:$0xf]
        %1647 = vrot.lane.b32.xlu0 %v1645, 117
        %v1648 = vpop.permute.xlu0 %1647
        %1650 = vst.msk [vmem:[#allocation6 + $0x2c] sm:$0xf] %vm1583, %v1648
        %v1651 = vld [vmem:[#allocation3] sm:$0xf]
        %1653 = vrot.lane.b32.xlu0 %v1651, 116
        %v1654 = vpop.permute.xlu0 %1653
        %1656 = vst.msk [vmem:[#allocation6 + $0x30] sm:$0xf] %vm1583, %v1654
        %v1657 = vld [vmem:[#allocation3] sm:$0xf]
        %1659 = vrot.lane.b32.xlu0 %v1657, 115
        %v1660 = vpop.permute.xlu0 %1659
        %1662 = vst.msk [vmem:[#allocation6 + $0x34] sm:$0xf] %vm1583, %v1660
        %v1663 = vld [vmem:[#allocation3] sm:$0xf]
        %1665 = vrot.lane.b32.xlu0 %v1663, 114
        %v1666 = vpop.permute.xlu0 %1665
        %1668 = vst.msk [vmem:[#allocation6 + $0x38] sm:$0xf] %vm1583, %v1666
        %v1669 = vld [vmem:[#allocation3] sm:$0xf]
        %1671 = vrot.lane.b32.xlu0 %v1669, 113
        %v1672 = vpop.permute.xlu0 %1671
        %1674 = vst.msk [vmem:[#allocation6 + $0x3c] sm:$0xf] %vm1583, %v1672
        %v1675 = vld [vmem:[#allocation3] sm:$0xf]
        %1677 = vrot.lane.b32.xlu0 %v1675, 112
        %v1678 = vpop.permute.xlu0 %1677
        %1680 = vst.msk [vmem:[#allocation6 + $0x40] sm:$0xf] %vm1583, %v1678
        %v1681 = vld [vmem:[#allocation3] sm:$0xf]
        %1683 = vrot.lane.b32.xlu0 %v1681, 111
        %v1684 = vpop.permute.xlu0 %1683
        %1686 = vst.msk [vmem:[#allocation6 + $0x44] sm:$0xf] %vm1583, %v1684
        %v1687 = vld [vmem:[#allocation3] sm:$0xf]
        %1689 = vrot.lane.b32.xlu0 %v1687, 110
        %v1690 = vpop.permute.xlu0 %1689
        %1692 = vst.msk [vmem:[#allocation6 + $0x48] sm:$0xf] %vm1583, %v1690
        %v1693 = vld [vmem:[#allocation3] sm:$0xf]
        %1695 = vrot.lane.b32.xlu0 %v1693, 109
        %v1696 = vpop.permute.xlu0 %1695
        %1698 = vst.msk [vmem:[#allocation6 + $0x4c] sm:$0xf] %vm1583, %v1696
        %v1699 = vld [vmem:[#allocation3] sm:$0xf]
        %1701 = vrot.lane.b32.xlu0 %v1699, 108
        %v1702 = vpop.permute.xlu0 %1701
        %1704 = vst.msk [vmem:[#allocation6 + $0x50] sm:$0xf] %vm1583, %v1702
        %v1705 = vld [vmem:[#allocation3] sm:$0xf]
        %1707 = vrot.lane.b32.xlu0 %v1705, 107
        %v1708 = vpop.permute.xlu0 %1707
        %1710 = vst.msk [vmem:[#allocation6 + $0x54] sm:$0xf] %vm1583, %v1708
        %v1711 = vld [vmem:[#allocation3] sm:$0xf]
        %1713 = vrot.lane.b32.xlu0 %v1711, 106
        %v1714 = vpop.permute.xlu0 %1713
        %1716 = vst.msk [vmem:[#allocation6 + $0x58] sm:$0xf] %vm1583, %v1714
        %v1717 = vld [vmem:[#allocation3] sm:$0xf]
        %1719 = vrot.lane.b32.xlu0 %v1717, 105
        %v1720 = vpop.permute.xlu0 %1719
        %1722 = vst.msk [vmem:[#allocation6 + $0x5c] sm:$0xf] %vm1583, %v1720
        %v1723 = vld [vmem:[#allocation3] sm:$0xf]
        %1725 = vrot.lane.b32.xlu0 %v1723, 104
        %v1726 = vpop.permute.xlu0 %1725
        %1728 = vst.msk [vmem:[#allocation6 + $0x60] sm:$0xf] %vm1583, %v1726
        %v1729 = vld [vmem:[#allocation3] sm:$0xf]
        %1731 = vrot.lane.b32.xlu0 %v1729, 103
        %v1732 = vpop.permute.xlu0 %1731
        %1734 = vst.msk [vmem:[#allocation6 + $0x64] sm:$0xf] %vm1583, %v1732
        %v1735 = vld [vmem:[#allocation3] sm:$0xf]
        %1737 = vrot.lane.b32.xlu0 %v1735, 102
        %v1738 = vpop.permute.xlu0 %1737
        %1740 = vst.msk [vmem:[#allocation6 + $0x68] sm:$0xf] %vm1583, %v1738
        %v1741 = vld [vmem:[#allocation3] sm:$0xf]
        %1743 = vrot.lane.b32.xlu0 %v1741, 101
        %v1744 = vpop.permute.xlu0 %1743
        %1746 = vst.msk [vmem:[#allocation6 + $0x6c] sm:$0xf] %vm1583, %v1744
        %v1747 = vld [vmem:[#allocation3] sm:$0xf]
        %1749 = vrot.lane.b32.xlu0 %v1747, 100
        %v1750 = vpop.permute.xlu0 %1749
        %1752 = vst.msk [vmem:[#allocation6 + $0x70] sm:$0xf] %vm1583, %v1750
        %v1753 = vld [vmem:[#allocation3] sm:$0xf]
        %1755 = vrot.lane.b32.xlu0 %v1753, 99
        %v1756 = vpop.permute.xlu0 %1755
        %1758 = vst.msk [vmem:[#allocation6 + $0x74] sm:$0xf] %vm1583, %v1756
        %v1759 = vld [vmem:[#allocation3] sm:$0xf]
        %1761 = vrot.lane.b32.xlu0 %v1759, 98
        %v1762 = vpop.permute.xlu0 %1761
        %1764 = vst.msk [vmem:[#allocation6 + $0x78] sm:$0xf] %vm1583, %v1762
        %v1765 = vld [vmem:[#allocation3] sm:$0xf]
        %1767 = vrot.lane.b32.xlu0 %v1765, 97
        %v1768 = vpop.permute.xlu0 %1767
        %1770 = vst.msk [vmem:[#allocation6 + $0x7c] sm:$0xf] %vm1583, %v1768
        %v1771 = vld [vmem:[#allocation3] sm:$0xf]
        %1773 = vrot.lane.b32.xlu0 %v1771, 96
        %v1774 = vpop.permute.xlu0 %1773
        %1776 = vst.msk [vmem:[#allocation6 + $0x80] sm:$0xf] %vm1583, %v1774
        %v1777 = vld [vmem:[#allocation3] sm:$0xf]
        %1779 = vrot.lane.b32.xlu0 %v1777, 95
        %v1780 = vpop.permute.xlu0 %1779
        %1782 = vst.msk [vmem:[#allocation6 + $0x84] sm:$0xf] %vm1583, %v1780
        %v1783 = vld [vmem:[#allocation3] sm:$0xf]
        %1785 = vrot.lane.b32.xlu0 %v1783, 94
        %v1786 = vpop.permute.xlu0 %1785
        %1788 = vst.msk [vmem:[#allocation6 + $0x88] sm:$0xf] %vm1583, %v1786
        %v1789 = vld [vmem:[#allocation6] sm:$0xf]
        %v1790 = vld [vmem:[#allocation6 + $0x4] sm:$0xf]
        %v1791 = vld [vmem:[#allocation6 + $0x8] sm:$0xf]
        %v1792 = vld [vmem:[#allocation6 + $0xc] sm:$0xf]
        %v1793 = vld [vmem:[#allocation6 + $0x10] sm:$0xf]
        %v1794 = vld [vmem:[#allocation6 + $0x14] sm:$0xf]
        %v1795 = vld [vmem:[#allocation6 + $0x18] sm:$0xf]
        %v1796 = vld [vmem:[#allocation6 + $0x1c] sm:$0xf]
        %v1797 = vld [vmem:[#allocation6 + $0x20] sm:$0xf]
        %v1798 = vld [vmem:[#allocation6 + $0x24] sm:$0xf]
        %v1799 = vld [vmem:[#allocation6 + $0x28] sm:$0xf]
        %v1800 = vld [vmem:[#allocation6 + $0x2c] sm:$0xf]
        %v1801 = vld [vmem:[#allocation6 + $0x30] sm:$0xf]
        %v1802 = vld [vmem:[#allocation6 + $0x34] sm:$0xf]
        %v1803 = vld [vmem:[#allocation6 + $0x38] sm:$0xf]
        %v1804 = vld [vmem:[#allocation6 + $0x3c] sm:$0xf]
        %v1805 = vld [vmem:[#allocation6 + $0x40] sm:$0xf]
        %v1806 = vld [vmem:[#allocation6 + $0x44] sm:$0xf]
        %v1807 = vld [vmem:[#allocation6 + $0x48] sm:$0xf]
        %v1808 = vld [vmem:[#allocation6 + $0x4c] sm:$0xf]
        %v1809 = vld [vmem:[#allocation6 + $0x50] sm:$0xf]
        %v1810 = vld [vmem:[#allocation6 + $0x54] sm:$0xf]
        %v1811 = vld [vmem:[#allocation6 + $0x58] sm:$0xf]
        %v1812 = vld [vmem:[#allocation6 + $0x5c] sm:$0xf]
        %v1813 = vld [vmem:[#allocation6 + $0x60] sm:$0xf]
        %v1814 = vld [vmem:[#allocation6 + $0x64] sm:$0xf]
        %v1815 = vld [vmem:[#allocation6 + $0x68] sm:$0xf]
        %v1816 = vld [vmem:[#allocation6 + $0x6c] sm:$0xf]
        %v1817 = vld [vmem:[#allocation6 + $0x70] sm:$0xf]
        %v1818 = vld [vmem:[#allocation6 + $0x74] sm:$0xf]
        %v1819 = vld [vmem:[#allocation6 + $0x78] sm:$0xf]
        %v1820 = vld [vmem:[#allocation6 + $0x7c] sm:$0xf]
        %v1821 = vld [vmem:[#allocation6 + $0x80] sm:$0xf]
        %v1822 = vld [vmem:[#allocation6 + $0x84] sm:$0xf]
        %v1823 = vld [vmem:[#allocation6 + $0x88] sm:$0xf]
        %vm1824 = vcmp.lt.s32.totalorder %v635, 2
        %v1825 = vsub.s32 %v635, 2
        %v1826 = vmul.u32 %v1825, 2
        %v1827 = vadd.s32 %v1826, 1
        %v1828 = vsel %vm1824, %v637, %v1827
        %vm1829 = vcmp.eq.s32.totalorder %v631, %v1828
        %v1830 = vsel %vm1829, 1, 0
        %v1831 = vcvt.s32.f32 %v1830
        %v1832 = vpack.c.bf16 %v1831, %v1831
        %v1868 = vunpack.c.l.b16 %v1789
        %v1869 = vunpack.c.l.b16 %v1790
        %v1870 = vunpack.c.l.b16 %v1791
        %v1871 = vunpack.c.l.b16 %v1792
        %v1872 = vunpack.c.l.b16 %v1793
        %v1873 = vunpack.c.l.b16 %v1794
        %v1874 = vunpack.c.l.b16 %v1795
        %v1875 = vunpack.c.l.b16 %v1796
        %v1876 = vunpack.c.l.b16 %v1797
        %v1877 = vunpack.c.l.b16 %v1798
        %v1878 = vunpack.c.l.b16 %v1799
        %v1879 = vunpack.c.l.b16 %v1800
        %v1880 = vunpack.c.l.b16 %v1801
        %v1881 = vunpack.c.l.b16 %v1802
        %v1882 = vunpack.c.l.b16 %v1803
        %v1883 = vunpack.c.l.b16 %v1804
        %v1884 = vunpack.c.l.b16 %v1805
        %v1885 = vunpack.c.l.b16 %v1806
        %v1886 = vunpack.c.l.b16 %v1807
        %v1887 = vunpack.c.l.b16 %v1808
        %v1888 = vunpack.c.l.b16 %v1809
        %v1889 = vunpack.c.l.b16 %v1810
        %v1890 = vunpack.c.l.b16 %v1811
        %v1891 = vunpack.c.l.b16 %v1812
        %v1892 = vunpack.c.l.b16 %v1813
        %v1893 = vunpack.c.l.b16 %v1814
        %v1894 = vunpack.c.l.b16 %v1815
        %v1895 = vunpack.c.l.b16 %v1816
        %v1896 = vunpack.c.l.b16 %v1817
        %v1897 = vunpack.c.l.b16 %v1818
        %v1898 = vunpack.c.l.b16 %v1819
        %v1899 = vunpack.c.l.b16 %v1820
        %v1900 = vunpack.c.l.b16 %v1821
        %v1901 = vunpack.c.l.b16 %v1822
        %v1902 = vunpack.c.l.b16 %v1823
        %v1903 = vpack.c.b16 %v1869, %v1868
        %v1904 = vpack.c.b16 %v1871, %v1870
        %v1905 = vpack.c.b16 %v1873, %v1872
        %v1906 = vpack.c.b16 %v1875, %v1874
        %v1907 = vpack.c.b16 %v1877, %v1876
        %v1908 = vpack.c.b16 %v1879, %v1878
        %v1909 = vpack.c.b16 %v1881, %v1880
        %v1910 = vpack.c.b16 %v1883, %v1882
        %v1911 = vpack.c.b16 %v1885, %v1884
        %v1912 = vpack.c.b16 %v1887, %v1886
        %v1913 = vpack.c.b16 %v1889, %v1888
        %v1914 = vpack.c.b16 %v1891, %v1890
        %v1915 = vpack.c.b16 %v1893, %v1892
        %v1916 = vpack.c.b16 %v1895, %v1894
        %v1917 = vpack.c.b16 %v1897, %v1896
        %v1918 = vpack.c.b16 %v1899, %v1898
        %v1919 = vpack.c.b16 %v1901, %v1900
        %v1920 = vpack.c.b16 %v1902, %v1902
        %vm1921 = vcmask 31744
        %v1923 = vsel %vm1921, %v1903, 0
        %v1926 = vsel %vm1921, %v1904, 0
        %v1929 = vsel %vm1921, %v1905, 0
        %v1932 = vsel %vm1921, %v1906, 0
        %v1935 = vsel %vm1921, %v1907, 0
        %v1938 = vsel %vm1921, %v1908, 0
        %v1941 = vsel %vm1921, %v1909, 0
        %v1944 = vsel %vm1921, %v1910, 0
        %v1947 = vsel %vm1921, %v1911, 0
        %v1950 = vsel %vm1921, %v1912, 0
        %v1953 = vsel %vm1921, %v1913, 0
        %v1956 = vsel %vm1921, %v1914, 0
        %v1959 = vsel %vm1921, %v1915, 0
        %v1962 = vsel %vm1921, %v1916, 0
        %v1965 = vsel %vm1921, %v1917, 0
        %v1968 = vsel %vm1921, %v1918, 0
        %v1971 = vsel %vm1921, %v1919, 0
        %v1974 = vsel %vm1921, %v1920, 0
        %v1977 = vsel %vm676, %v1832, 0
        %1979 = vmatprep.subr.bf16.mxu0 0
        %1980 = vmatpush1.bf16.msra.mxu0 0
        %1981 = vmatprep.subr.bf16.mxu0 0
        %1982 = vmatpush1.bf16.msra.mxu0 0
        %1983 = vmatprep.subr.bf16.mxu0 0
        %1984 = vmatpush1.bf16.msra.mxu0 0
        %1985 = vmatprep.subr.bf16.mxu0 0
        %1986 = vmatpush1.bf16.msra.mxu0 0
        %1987 = vmatprep.subr.bf16.mxu0 0
        %1988 = vmatpush1.bf16.msra.mxu0 0
        %1989 = vmatprep.subr.bf16.mxu0 0
        %1990 = vmatpush1.bf16.msra.mxu0 0
        %1991 = vmatprep.subr.bf16.mxu0 0
        %1992 = vmatpush1.bf16.msra.mxu0 0
        %1993 = vmatprep.subr.bf16.mxu0 0
        %1994 = vmatpush1.bf16.msra.mxu0 %v1977
        %1995 = vmatprep.subr.bf16.mxu0 0
        %1996 = vmatpush2.bf16.msra.mxu0 0
        %1997 = vmatprep.subr.bf16.mxu0 0
        %1998 = vmatpush2.bf16.msra.mxu0 0
        %1999 = vmatprep.subr.bf16.mxu0 0
        %2000 = vmatpush2.bf16.msra.mxu0 0
        %2001 = vmatprep.subr.bf16.mxu0 0
        %2002 = vmatpush2.bf16.msra.mxu0 0
        %2003 = vmatprep.subr.bf16.mxu0 0
        %2004 = vmatpush2.bf16.msra.mxu0 0
        %2005 = vmatprep.subr.bf16.mxu0 0
        %2006 = vmatpush2.bf16.msra.mxu0 0
        %2007 = vmatprep.subr.bf16.mxu0 0
        %2008 = vmatpush2.bf16.msra.mxu0 0
        %2009 = vmatprep.subr.bf16.mxu0 0
        %2010 = vmatpush2.bf16.msra.mxu0 0
        %2011 = vmatprep.mubr.bf16.mxu0 0
        %2012 = vmatmul.mubr.bf16.gmra.mxu0 %v1923
        %v2013 = vpop.f32.mrf.mxu0
        %v2014 = vadd.f32 0.0, %v2013
        %v2015 = vpop.f32.mrf.mxu0
        %v2016 = vpop.f32.mrf.mxu0
        %v2017 = vadd.f32 0.0, %v2016
        %v2018 = vpop.f32.mrf.mxu0
        %2019 = vmatprep.mubr.bf16.mxu0 0
        %2020 = vmatmul.mubr.bf16.gmra.mxu0 %v1926
        %v2021 = vpop.f32.mrf.mxu0
        %v2022 = vadd.f32 0.0, %v2021
        %v2023 = vpop.f32.mrf.mxu0
        %v2024 = vpop.f32.mrf.mxu0
        %v2025 = vadd.f32 0.0, %v2024
        %v2026 = vpop.f32.mrf.mxu0
        %2027 = vmatprep.mubr.bf16.mxu0 0
        %2028 = vmatmul.mubr.bf16.gmra.mxu0 %v1929
        %v2029 = vpop.f32.mrf.mxu0
        %v2030 = vadd.f32 0.0, %v2029
        %v2031 = vpop.f32.mrf.mxu0
        %v2032 = vpop.f32.mrf.mxu0
        %v2033 = vadd.f32 0.0, %v2032
        %v2034 = vpop.f32.mrf.mxu0
        %2035 = vmatprep.mubr.bf16.mxu0 0
        %2036 = vmatmul.mubr.bf16.gmra.mxu0 %v1932
        %v2037 = vpop.f32.mrf.mxu0
        %v2038 = vadd.f32 0.0, %v2037
        %v2039 = vpop.f32.mrf.mxu0
        %v2040 = vpop.f32.mrf.mxu0
        %v2041 = vadd.f32 0.0, %v2040
        %v2042 = vpop.f32.mrf.mxu0
        %2043 = vmatprep.mubr.bf16.mxu0 0
        %2044 = vmatmul.mubr.bf16.gmra.mxu0 %v1935
        %v2045 = vpop.f32.mrf.mxu0
        %v2046 = vadd.f32 0.0, %v2045
        %v2047 = vpop.f32.mrf.mxu0
        %v2048 = vpop.f32.mrf.mxu0
        %v2049 = vadd.f32 0.0, %v2048
        %v2050 = vpop.f32.mrf.mxu0
        %2051 = vmatprep.mubr.bf16.mxu0 0
        %2052 = vmatmul.mubr.bf16.gmra.mxu0 %v1938
        %v2053 = vpop.f32.mrf.mxu0
        %v2054 = vadd.f32 0.0, %v2053
        %v2055 = vpop.f32.mrf.mxu0
        %v2056 = vpop.f32.mrf.mxu0
        %v2057 = vadd.f32 0.0, %v2056
        %v2058 = vpop.f32.mrf.mxu0
        %2059 = vmatprep.mubr.bf16.mxu0 0
        %2060 = vmatmul.mubr.bf16.gmra.mxu0 %v1941
        %v2061 = vpop.f32.mrf.mxu0
        %v2062 = vadd.f32 0.0, %v2061
        %v2063 = vpop.f32.mrf.mxu0
        %v2064 = vpop.f32.mrf.mxu0
        %v2065 = vadd.f32 0.0, %v2064
        %v2066 = vpop.f32.mrf.mxu0
        %2067 = vmatprep.mubr.bf16.mxu0 0
        %2068 = vmatmul.mubr.bf16.gmra.mxu0 %v1944
        %v2069 = vpop.f32.mrf.mxu0
        %v2070 = vadd.f32 0.0, %v2069
        %v2071 = vpop.f32.mrf.mxu0
        %v2072 = vpop.f32.mrf.mxu0
        %v2073 = vadd.f32 0.0, %v2072
        %v2074 = vpop.f32.mrf.mxu0
        %2075 = vmatprep.mubr.bf16.mxu0 0
        %2076 = vmatmul.mubr.bf16.gmra.mxu0 %v1947
        %v2077 = vpop.f32.mrf.mxu0
        %v2078 = vadd.f32 0.0, %v2077
        %v2079 = vpop.f32.mrf.mxu0
        %v2080 = vpop.f32.mrf.mxu0
        %v2081 = vadd.f32 0.0, %v2080
        %v2082 = vpop.f32.mrf.mxu0
        %2083 = vmatprep.mubr.bf16.mxu0 0
        %2084 = vmatmul.mubr.bf16.gmra.mxu0 %v1950
        %v2085 = vpop.f32.mrf.mxu0
        %v2086 = vadd.f32 0.0, %v2085
        %v2087 = vpop.f32.mrf.mxu0
        %v2088 = vpop.f32.mrf.mxu0
        %v2089 = vadd.f32 0.0, %v2088
        %v2090 = vpop.f32.mrf.mxu0
        %2091 = vmatprep.mubr.bf16.mxu0 0
        %2092 = vmatmul.mubr.bf16.gmra.mxu0 %v1953
        %v2093 = vpop.f32.mrf.mxu0
        %v2094 = vadd.f32 0.0, %v2093
        %v2095 = vpop.f32.mrf.mxu0
        %v2096 = vpop.f32.mrf.mxu0
        %v2097 = vadd.f32 0.0, %v2096
        %v2098 = vpop.f32.mrf.mxu0
        %2099 = vmatprep.mubr.bf16.mxu0 0
        %2100 = vmatmul.mubr.bf16.gmra.mxu0 %v1956
        %v2101 = vpop.f32.mrf.mxu0
        %v2102 = vadd.f32 0.0, %v2101
        %v2103 = vpop.f32.mrf.mxu0
        %v2104 = vpop.f32.mrf.mxu0
        %v2105 = vadd.f32 0.0, %v2104
        %v2106 = vpop.f32.mrf.mxu0
        %2107 = vmatprep.mubr.bf16.mxu0 0
        %2108 = vmatmul.mubr.bf16.gmra.mxu0 %v1959
        %v2109 = vpop.f32.mrf.mxu0
        %v2110 = vadd.f32 0.0, %v2109
        %v2111 = vpop.f32.mrf.mxu0
        %v2112 = vpop.f32.mrf.mxu0
        %v2113 = vadd.f32 0.0, %v2112
        %v2114 = vpop.f32.mrf.mxu0
        %2115 = vmatprep.mubr.bf16.mxu0 0
        %2116 = vmatmul.mubr.bf16.gmra.mxu0 %v1962
        %v2117 = vpop.f32.mrf.mxu0
        %v2118 = vadd.f32 0.0, %v2117
        %v2119 = vpop.f32.mrf.mxu0
        %v2120 = vpop.f32.mrf.mxu0
        %v2121 = vadd.f32 0.0, %v2120
        %v2122 = vpop.f32.mrf.mxu0
        %2123 = vmatprep.mubr.bf16.mxu0 0
        %2124 = vmatmul.mubr.bf16.gmra.mxu0 %v1965
        %v2125 = vpop.f32.mrf.mxu0
        %v2126 = vadd.f32 0.0, %v2125
        %v2127 = vpop.f32.mrf.mxu0
        %v2128 = vpop.f32.mrf.mxu0
        %v2129 = vadd.f32 0.0, %v2128
        %v2130 = vpop.f32.mrf.mxu0
        %2131 = vmatprep.mubr.bf16.mxu0 0
        %2132 = vmatmul.mubr.bf16.gmra.mxu0 %v1968
        %v2133 = vpop.f32.mrf.mxu0
        %v2134 = vadd.f32 0.0, %v2133
        %v2135 = vpop.f32.mrf.mxu0
        %v2136 = vpop.f32.mrf.mxu0
        %v2137 = vadd.f32 0.0, %v2136
        %v2138 = vpop.f32.mrf.mxu0
        %2139 = vmatprep.mubr.bf16.mxu0 0
        %2140 = vmatmul.mubr.bf16.gmra.mxu0 %v1971
        %v2141 = vpop.f32.mrf.mxu0
        %v2142 = vadd.f32 0.0, %v2141
        %v2143 = vpop.f32.mrf.mxu0
        %v2144 = vpop.f32.mrf.mxu0
        %v2145 = vadd.f32 0.0, %v2144
        %v2146 = vpop.f32.mrf.mxu0
        %2147 = vmatprep.mubr.bf16.mxu0 0
        %2148 = vmatmul.mubr.bf16.gmra.mxu0 %v1974
        %v2149 = vpop.f32.mrf.mxu0
        %v2150 = vadd.f32 0.0, %v2149
        %v2151 = vpop.f32.mrf.mxu0
        %v2152 = vpop.f32.mrf.mxu0
        %v2153 = vpop.f32.mrf.mxu0
        %2154 = vdwg.mxu0
        %v2155 = vpack.c.bf16 %v2017, %v2014
        %v2156 = vpack.c.bf16 %v2025, %v2022
        %v2157 = vpack.c.bf16 %v2033, %v2030
        %v2158 = vpack.c.bf16 %v2041, %v2038
        %v2159 = vpack.c.bf16 %v2049, %v2046
        %v2160 = vpack.c.bf16 %v2057, %v2054
        %v2161 = vpack.c.bf16 %v2065, %v2062
        %v2162 = vpack.c.bf16 %v2073, %v2070
        %v2163 = vpack.c.bf16 %v2081, %v2078
        %v2164 = vpack.c.bf16 %v2089, %v2086
        %v2165 = vpack.c.bf16 %v2097, %v2094
        %v2166 = vpack.c.bf16 %v2105, %v2102
        %v2167 = vpack.c.bf16 %v2113, %v2110
        %v2168 = vpack.c.bf16 %v2121, %v2118
        %v2169 = vpack.c.bf16 %v2129, %v2126
        %v2170 = vpack.c.bf16 %v2137, %v2134
        %v2171 = vpack.c.bf16 %v2145, %v2142
        %v2172 = vpack.c.bf16 %v2150, %v2150
        %v2173 = vld [vmem:[#allocation16] sm:$0xff]
        %v2174 = vld [vmem:[#allocation16 + $0x8] sm:$0xf]
        %v2175 = vld [vmem:[#allocation16 + $0xc] sm:$0xff]
        %v2176 = vld [vmem:[#allocation16 + $0x14] sm:$0xf]
        %v2177 = vld [vmem:[#allocation16 + $0x18] sm:$0xff]
        %v2178 = vld [vmem:[#allocation16 + $0x20] sm:$0xf]
        %v2185 = vunpack.c.l.b16 %v2173
        %v2186 = vunpack.c.h.b16 %v2173
        %v2187 = vunpack.c.l.b16 %v2174
        %v2188 = vunpack.c.l.b16 %v2175
        %v2189 = vunpack.c.h.b16 %v2175
        %v2190 = vunpack.c.l.b16 %v2176
        %v2191 = vunpack.c.l.b16 %v2177
        %v2192 = vunpack.c.h.b16 %v2177
        %v2193 = vunpack.c.l.b16 %v2178
        %v2194 = vpack.c.b16 %v2188, %v2185
        %v2195 = vpack.c.b16 %v2189, %v2186
        %v2196 = vpack.c.b16 %v2190, %v2187
        %v2197 = vpack.c.b16 %v2191, %v2191
        %v2198 = vpack.c.b16 %v2192, %v2192
        %v2199 = vpack.c.b16 %v2193, %v2193
        %vm2204 = vcmask 195584
        %v2206 = vsel %vm2204, %v2196, 0
        %v2209 = vsel %vm2204, %v2199, 0
        %vm2211 = vcmask 1043456
        %v2213 = vsel %vm2211, %v2172, 0
        %2215 = vmatprep.subr.bf16.mxu0 0
        %2216 = vmatpush1.bf16.msra.mxu0 %v2162
        %2217 = vmatprep.subr.bf16.mxu0 0
        %2218 = vmatpush1.bf16.msra.mxu0 %v2161
        %2219 = vmatprep.subr.bf16.mxu0 0
        %2220 = vmatpush1.bf16.msra.mxu0 %v2160
        %2221 = vmatprep.subr.bf16.mxu0 0
        %2222 = vmatpush1.bf16.msra.mxu0 %v2159
        %2223 = vmatprep.subr.bf16.mxu0 0
        %2224 = vmatpush1.bf16.msra.mxu0 %v2158
        %2225 = vmatprep.subr.bf16.mxu0 0
        %2226 = vmatpush1.bf16.msra.mxu0 %v2157
        %2227 = vmatprep.subr.bf16.mxu0 0
        %2228 = vmatpush1.bf16.msra.mxu0 %v2156
        %2229 = vmatprep.subr.bf16.mxu0 0
        %2230 = vmatpush1.bf16.msra.mxu0 %v2155
        %2231 = vmatprep.subr.bf16.mxu0 0
        %2232 = vmatpush2.bf16.msra.mxu0 %v2170
        %2233 = vmatprep.subr.bf16.mxu0 0
        %2234 = vmatpush2.bf16.msra.mxu0 %v2169
        %2235 = vmatprep.subr.bf16.mxu0 0
        %2236 = vmatpush2.bf16.msra.mxu0 %v2168
        %2237 = vmatprep.subr.bf16.mxu0 0
        %2238 = vmatpush2.bf16.msra.mxu0 %v2167
        %2239 = vmatprep.subr.bf16.mxu0 0
        %2240 = vmatpush2.bf16.msra.mxu0 %v2166
        %2241 = vmatprep.subr.bf16.mxu0 0
        %2242 = vmatpush2.bf16.msra.mxu0 %v2165
        %2243 = vmatprep.subr.bf16.mxu0 0
        %2244 = vmatpush2.bf16.msra.mxu0 %v2164
        %2245 = vmatprep.subr.bf16.mxu0 0
        %2246 = vmatpush2.bf16.msra.mxu0 %v2163
        %2247 = vmatprep.mubr.bf16.mxu0 %v2195
        %2248 = vmatmul.mubr.bf16.gmra.mxu0 %v2194
        %v2249 = vpop.f32.mrf.mxu0
        %v2250 = vadd.f32 0.0, %v2249
        %v2251 = vpop.f32.mrf.mxu0
        %v2252 = vpop.f32.mrf.mxu0
        %v2253 = vadd.f32 0.0, %v2252
        %v2254 = vpop.f32.mrf.mxu0
        %2255 = vmatprep.mubr.bf16.mxu0 %v2198
        %2256 = vmatmul.mubr.bf16.gmra.mxu0 %v2197
        %v2257 = vpop.f32.mrf.mxu0
        %v2258 = vadd.f32 0.0, %v2257
        %v2259 = vpop.f32.mrf.mxu0
        %v2260 = vpop.f32.mrf.mxu0
        %v2261 = vpop.f32.mrf.mxu0
        %2262 = vdwg.mxu0
        %2263 = vmatprep.subr.bf16.mxu0 0
        %2264 = vmatpush1.bf16.msra.mxu0 0
        %2265 = vmatprep.subr.bf16.mxu0 0
        %2266 = vmatpush1.bf16.msra.mxu0 0
        %2267 = vmatprep.subr.bf16.mxu0 0
        %2268 = vmatpush1.bf16.msra.mxu0 0
        %2269 = vmatprep.subr.bf16.mxu0 0
        %2270 = vmatpush1.bf16.msra.mxu0 0
        %2271 = vmatprep.subr.bf16.mxu0 0
        %2272 = vmatpush1.bf16.msra.mxu0 0
        %2273 = vmatprep.subr.bf16.mxu0 0
        %2274 = vmatpush1.bf16.msra.mxu0 0
        %2275 = vmatprep.subr.bf16.mxu0 0
        %2276 = vmatpush1.bf16.msra.mxu0 %v2213
        %2277 = vmatprep.subr.bf16.mxu0 0
        %2278 = vmatpush1.bf16.msra.mxu0 %v2171
        %2279 = vmatprep.subr.bf16.mxu0 0
        %2280 = vmatpush2.bf16.msra.mxu0 0
        %2281 = vmatprep.subr.bf16.mxu0 0
        %2282 = vmatpush2.bf16.msra.mxu0 0
        %2283 = vmatprep.subr.bf16.mxu0 0
        %2284 = vmatpush2.bf16.msra.mxu0 0
        %2285 = vmatprep.subr.bf16.mxu0 0
        %2286 = vmatpush2.bf16.msra.mxu0 0
        %2287 = vmatprep.subr.bf16.mxu0 0
        %2288 = vmatpush2.bf16.msra.mxu0 0
        %2289 = vmatprep.subr.bf16.mxu0 0
        %2290 = vmatpush2.bf16.msra.mxu0 0
        %2291 = vmatprep.subr.bf16.mxu0 0
        %2292 = vmatpush2.bf16.msra.mxu0 0
        %2293 = vmatprep.subr.bf16.mxu0 0
        %2294 = vmatpush2.bf16.msra.mxu0 0
        %2295 = vmatprep.mubr.bf16.mxu0 0
        %2296 = vmatmul.mubr.bf16.gmra.mxu0 %v2206
        %v2297 = vpop.f32.mrf.mxu0
        %v2298 = vadd.f32 %v2250, %v2297
        %v2299 = vpop.f32.mrf.mxu0
        %v2300 = vpop.f32.mrf.mxu0
        %v2301 = vadd.f32 %v2253, %v2300
        %v2302 = vpop.f32.mrf.mxu0
        %2303 = vmatprep.mubr.bf16.mxu0 0
        %2304 = vmatmul.mubr.bf16.gmra.mxu0 %v2209
        %v2305 = vpop.f32.mrf.mxu0
        %v2306 = vadd.f32 %v2258, %v2305
        %v2307 = vpop.f32.mrf.mxu0
        %v2308 = vpop.f32.mrf.mxu0
        %v2309 = vpop.f32.mrf.mxu0
        %2310 = vdwg.mxu0
        %2314 = vrot.lane.b32.xlu0 %v2298, 126
        %v2315 = vpop.permute.xlu0 %2314
        %2316 = vrot.lane.b32.xlu0 %v2301, 126
        %v2317 = vpop.permute.xlu0 %2316
        %2318 = vrot.lane.b32.xlu0 %v2306, 126
        %v2319 = vpop.permute.xlu0 %2318
        %v2323 = vmax.f32 %v2298, %v2315
        %v2324 = vmax.f32 %v2301, %v2317
        %v2325 = vmax.f32 %v2306, %v2319
        %v2326 = vld [vmem:[%s6] sm:$0xff]
        %v2327 = vld [vmem:[%s6 + $0x8] sm:$0xff]
        %v2328 = vld [vmem:[%s6 + $0x10] sm:$0xff]
        %2330 = vset.pattern.permute.xlu0 0
        %2331 = vperm.xlu0 %2330, %v2326
        %v2332 = vpop.permute.xlu0 %2331
        %2335 = vset.pattern.permute.xlu0 0
        %2336 = vperm.xlu0 %2335, %v2327
        %v2337 = vpop.permute.xlu0 %2336
        %2340 = vset.pattern.permute.xlu0 0
        %2341 = vperm.xlu0 %2340, %v2328
        %v2342 = vpop.permute.xlu0 %2341
        %v2344 = vadd.f32 %v2323, %v2332
        %v2345 = vadd.f32 %v2324, %v2337
        %v2346 = vadd.f32 %v2325, %v2342
        %v2347 = vmax.f32 %v2344, 0.0
        %v2348 = vmax.f32 %v2345, 0.0
        %v2349 = vmax.f32 %v2346, 0.0
        %vm2350 = vcmask 289792
        %2351 = vst.msk [vmem:[#allocation4] sm:$0xf] %vm2350, 0
        %2352 = vst.msk [vmem:[#allocation4 + $0x4] sm:$0xf] %vm2350, 0
        %2353 = vst.msk [vmem:[#allocation4 + $0x8] sm:$0xf] %vm2350, 0
        %v2354 = vpack.c.bf16 %v2348, %v2347
        %v2355 = vpack.c.bf16 %v2349, %v2349
        %v2358 = vunpack.c.l.b16 %v2354
        %v2359 = vunpack.c.h.b16 %v2354
        %v2360 = vunpack.c.l.b16 %v2355
        %v2361 = vpack.c.b16 %v2358, %v2358
        %v2362 = vpack.c.b16 %v2359, %v2359
        %v2363 = vpack.c.b16 %v2360, %v2360
        %2364 = vrot.lane.b32.xlu0 %v2361, 17
        %v2365 = vpop.permute.xlu0 %2364
        %2366 = vrot.lane.b32.xlu0 %v2362, 17
        %v2367 = vpop.permute.xlu0 %2366
        %2368 = vrot.lane.b32.xlu0 %v2363, 17
        %v2369 = vpop.permute.xlu0 %2368
        %vm2373 = vcmask 150664
        %2374 = vst.msk [vmem:[#allocation4] sm:$0xf] %vm2373, %v2365
        %2375 = vst.msk [vmem:[#allocation4 + $0x4] sm:$0xf] %vm2373, %v2367
        %2376 = vst.msk [vmem:[#allocation4 + $0x8] sm:$0xf] %vm2373, %v2369
        %v2377 = vld [vmem:[#allocation4] sm:$0xf]
        %v2378 = vld [vmem:[#allocation4 + $0x4] sm:$0xf]
        %v2379 = vld [vmem:[#allocation4 + $0x8] sm:$0xf]
        %vm2380 = vcmask 11264
        %2381 = vst.msk [vmem:[#allocation7] sm:$0xf] %vm2380, %v2377
        %2382 = vst.msk [vmem:[#allocation7 + $0x4] sm:$0xf] %vm2380, %v2378
        %2383 = vst.msk [vmem:[#allocation7 + $0x8] sm:$0xf] %vm2380, %v2379
        %v2384 = vld [vmem:[#allocation4] sm:$0xf]
        %v2385 = vld [vmem:[#allocation4 + $0x4] sm:$0xf]
        %v2386 = vld [vmem:[#allocation4 + $0x8] sm:$0xf]
        %2390 = vrot.lane.b32.xlu0 %v2384, 127
        %v2391 = vpop.permute.xlu0 %2390
        %2392 = vrot.lane.b32.xlu0 %v2385, 127
        %v2393 = vpop.permute.xlu0 %2392
        %2394 = vrot.lane.b32.xlu0 %v2386, 127
        %v2395 = vpop.permute.xlu0 %2394
        %2399 = vst.msk [vmem:[#allocation7 + $0xc] sm:$0xf] %vm2380, %v2391
        %2400 = vst.msk [vmem:[#allocation7 + $0x10] sm:$0xf] %vm2380, %v2393
        %2401 = vst.msk [vmem:[#allocation7 + $0x14] sm:$0xf] %vm2380, %v2395
        %v2402 = vld [vmem:[#allocation4] sm:$0xf]
        %v2403 = vld [vmem:[#allocation4 + $0x4] sm:$0xf]
        %v2404 = vld [vmem:[#allocation4 + $0x8] sm:$0xf]
        %2408 = vrot.lane.b32.xlu0 %v2402, 126
        %v2409 = vpop.permute.xlu0 %2408
        %2410 = vrot.lane.b32.xlu0 %v2403, 126
        %v2411 = vpop.permute.xlu0 %2410
        %2412 = vrot.lane.b32.xlu0 %v2404, 126
        %v2413 = vpop.permute.xlu0 %2412
        %2417 = vst.msk [vmem:[#allocation7 + $0x18] sm:$0xf] %vm2380, %v2409
        %2418 = vst.msk [vmem:[#allocation7 + $0x1c] sm:$0xf] %vm2380, %v2411
        %2419 = vst.msk [vmem:[#allocation7 + $0x20] sm:$0xf] %vm2380, %v2413
        %v2420 = vld [vmem:[#allocation4] sm:$0xf]
        %v2421 = vld [vmem:[#allocation4 + $0x4] sm:$0xf]
        %v2422 = vld [vmem:[#allocation4 + $0x8] sm:$0xf]
        %2426 = vrot.lane.b32.xlu0 %v2420, 125
        %v2427 = vpop.permute.xlu0 %2426
        %2428 = vrot.lane.b32.xlu0 %v2421, 125
        %v2429 = vpop.permute.xlu0 %2428
        %2430 = vrot.lane.b32.xlu0 %v2422, 125
        %v2431 = vpop.permute.xlu0 %2430
        %2435 = vst.msk [vmem:[#allocation7 + $0x24] sm:$0xf] %vm2380, %v2427
        %2436 = vst.msk [vmem:[#allocation7 + $0x28] sm:$0xf] %vm2380, %v2429
        %2437 = vst.msk [vmem:[#allocation7 + $0x2c] sm:$0xf] %vm2380, %v2431
        %v2438 = vld [vmem:[#allocation4] sm:$0xf]
        %v2439 = vld [vmem:[#allocation4 + $0x4] sm:$0xf]
        %v2440 = vld [vmem:[#allocation4 + $0x8] sm:$0xf]
        %2444 = vrot.lane.b32.xlu0 %v2438, 124
        %v2445 = vpop.permute.xlu0 %2444
        %2446 = vrot.lane.b32.xlu0 %v2439, 124
        %v2447 = vpop.permute.xlu0 %2446
        %2448 = vrot.lane.b32.xlu0 %v2440, 124
        %v2449 = vpop.permute.xlu0 %2448
        %2453 = vst.msk [vmem:[#allocation7 + $0x30] sm:$0xf] %vm2380, %v2445
        %2454 = vst.msk [vmem:[#allocation7 + $0x34] sm:$0xf] %vm2380, %v2447
        %2455 = vst.msk [vmem:[#allocation7 + $0x38] sm:$0xf] %vm2380, %v2449
        %v2456 = vld [vmem:[#allocation4] sm:$0xf]
        %v2457 = vld [vmem:[#allocation4 + $0x4] sm:$0xf]
        %v2458 = vld [vmem:[#allocation4 + $0x8] sm:$0xf]
        %2462 = vrot.lane.b32.xlu0 %v2456, 123
        %v2463 = vpop.permute.xlu0 %2462
        %2464 = vrot.lane.b32.xlu0 %v2457, 123
        %v2465 = vpop.permute.xlu0 %2464
        %2466 = vrot.lane.b32.xlu0 %v2458, 123
        %v2467 = vpop.permute.xlu0 %2466
        %2471 = vst.msk [vmem:[#allocation7 + $0x3c] sm:$0xf] %vm2380, %v2463
        %2472 = vst.msk [vmem:[#allocation7 + $0x40] sm:$0xf] %vm2380, %v2465
        %2473 = vst.msk [vmem:[#allocation7 + $0x44] sm:$0xf] %vm2380, %v2467
        %v2474 = vld [vmem:[#allocation4] sm:$0xf]
        %v2475 = vld [vmem:[#allocation4 + $0x4] sm:$0xf]
        %v2476 = vld [vmem:[#allocation4 + $0x8] sm:$0xf]
        %2480 = vrot.lane.b32.xlu0 %v2474, 122
        %v2481 = vpop.permute.xlu0 %2480
        %2482 = vrot.lane.b32.xlu0 %v2475, 122
        %v2483 = vpop.permute.xlu0 %2482
        %2484 = vrot.lane.b32.xlu0 %v2476, 122
        %v2485 = vpop.permute.xlu0 %2484
        %2489 = vst.msk [vmem:[#allocation7 + $0x48] sm:$0xf] %vm2380, %v2481
        %2490 = vst.msk [vmem:[#allocation7 + $0x4c] sm:$0xf] %vm2380, %v2483
        %2491 = vst.msk [vmem:[#allocation7 + $0x50] sm:$0xf] %vm2380, %v2485
        %v2492 = vld [vmem:[#allocation4] sm:$0xf]
        %v2493 = vld [vmem:[#allocation4 + $0x4] sm:$0xf]
        %v2494 = vld [vmem:[#allocation4 + $0x8] sm:$0xf]
        %2498 = vrot.lane.b32.xlu0 %v2492, 121
        %v2499 = vpop.permute.xlu0 %2498
        %2500 = vrot.lane.b32.xlu0 %v2493, 121
        %v2501 = vpop.permute.xlu0 %2500
        %2502 = vrot.lane.b32.xlu0 %v2494, 121
        %v2503 = vpop.permute.xlu0 %2502
        %2507 = vst.msk [vmem:[#allocation7 + $0x54] sm:$0xf] %vm2380, %v2499
        %2508 = vst.msk [vmem:[#allocation7 + $0x58] sm:$0xf] %vm2380, %v2501
        %2509 = vst.msk [vmem:[#allocation7 + $0x5c] sm:$0xf] %vm2380, %v2503
        %v2510 = vld [vmem:[#allocation4] sm:$0xf]
        %v2511 = vld [vmem:[#allocation4 + $0x4] sm:$0xf]
        %v2512 = vld [vmem:[#allocation4 + $0x8] sm:$0xf]
        %2516 = vrot.lane.b32.xlu0 %v2510, 120
        %v2517 = vpop.permute.xlu0 %2516
        %2518 = vrot.lane.b32.xlu0 %v2511, 120
        %v2519 = vpop.permute.xlu0 %2518
        %2520 = vrot.lane.b32.xlu0 %v2512, 120
        %v2521 = vpop.permute.xlu0 %2520
        %2525 = vst.msk [vmem:[#allocation7 + $0x60] sm:$0xf] %vm2380, %v2517
        %2526 = vst.msk [vmem:[#allocation7 + $0x64] sm:$0xf] %vm2380, %v2519
        %2527 = vst.msk [vmem:[#allocation7 + $0x68] sm:$0xf] %vm2380, %v2521
        %v2528 = vld [vmem:[#allocation4] sm:$0xf]
        %v2529 = vld [vmem:[#allocation4 + $0x4] sm:$0xf]
        %v2530 = vld [vmem:[#allocation4 + $0x8] sm:$0xf]
        %2534 = vrot.lane.b32.xlu0 %v2528, 119
        %v2535 = vpop.permute.xlu0 %2534
        %2536 = vrot.lane.b32.xlu0 %v2529, 119
        %v2537 = vpop.permute.xlu0 %2536
        %2538 = vrot.lane.b32.xlu0 %v2530, 119
        %v2539 = vpop.permute.xlu0 %2538
        %2543 = vst.msk [vmem:[#allocation7 + $0x6c] sm:$0xf] %vm2380, %v2535
        %2544 = vst.msk [vmem:[#allocation7 + $0x70] sm:$0xf] %vm2380, %v2537
        %2545 = vst.msk [vmem:[#allocation7 + $0x74] sm:$0xf] %vm2380, %v2539
        %v2546 = vld [vmem:[#allocation4] sm:$0xf]
        %v2547 = vld [vmem:[#allocation4 + $0x4] sm:$0xf]
        %v2548 = vld [vmem:[#allocation4 + $0x8] sm:$0xf]
        %2552 = vrot.lane.b32.xlu0 %v2546, 118
        %v2553 = vpop.permute.xlu0 %2552
        %2554 = vrot.lane.b32.xlu0 %v2547, 118
        %v2555 = vpop.permute.xlu0 %2554
        %2556 = vrot.lane.b32.xlu0 %v2548, 118
        %v2557 = vpop.permute.xlu0 %2556
        %2561 = vst.msk [vmem:[#allocation7 + $0x78] sm:$0xf] %vm2380, %v2553
        %2562 = vst.msk [vmem:[#allocation7 + $0x7c] sm:$0xf] %vm2380, %v2555
        %2563 = vst.msk [vmem:[#allocation7 + $0x80] sm:$0xf] %vm2380, %v2557
        %v2564 = vld [vmem:[#allocation4] sm:$0xf]
        %v2565 = vld [vmem:[#allocation4 + $0x4] sm:$0xf]
        %v2566 = vld [vmem:[#allocation4 + $0x8] sm:$0xf]
        %2570 = vrot.lane.b32.xlu0 %v2564, 117
        %v2571 = vpop.permute.xlu0 %2570
        %2572 = vrot.lane.b32.xlu0 %v2565, 117
        %v2573 = vpop.permute.xlu0 %2572
        %2574 = vrot.lane.b32.xlu0 %v2566, 117
        %v2575 = vpop.permute.xlu0 %2574
        %2579 = vst.msk [vmem:[#allocation7 + $0x84] sm:$0xf] %vm2380, %v2571
        %2580 = vst.msk [vmem:[#allocation7 + $0x88] sm:$0xf] %vm2380, %v2573
        %2581 = vst.msk [vmem:[#allocation7 + $0x8c] sm:$0xf] %vm2380, %v2575
        %v2582 = vld [vmem:[#allocation4] sm:$0xf]
        %v2583 = vld [vmem:[#allocation4 + $0x4] sm:$0xf]
        %v2584 = vld [vmem:[#allocation4 + $0x8] sm:$0xf]
        %2588 = vrot.lane.b32.xlu0 %v2582, 116
        %v2589 = vpop.permute.xlu0 %2588
        %2590 = vrot.lane.b32.xlu0 %v2583, 116
        %v2591 = vpop.permute.xlu0 %2590
        %2592 = vrot.lane.b32.xlu0 %v2584, 116
        %v2593 = vpop.permute.xlu0 %2592
        %2597 = vst.msk [vmem:[#allocation7 + $0x90] sm:$0xf] %vm2380, %v2589
        %2598 = vst.msk [vmem:[#allocation7 + $0x94] sm:$0xf] %vm2380, %v2591
        %2599 = vst.msk [vmem:[#allocation7 + $0x98] sm:$0xf] %vm2380, %v2593
        %v2600 = vld [vmem:[#allocation4] sm:$0xf]
        %v2601 = vld [vmem:[#allocation4 + $0x4] sm:$0xf]
        %v2602 = vld [vmem:[#allocation4 + $0x8] sm:$0xf]
        %2606 = vrot.lane.b32.xlu0 %v2600, 115
        %v2607 = vpop.permute.xlu0 %2606
        %2608 = vrot.lane.b32.xlu0 %v2601, 115
        %v2609 = vpop.permute.xlu0 %2608
        %2610 = vrot.lane.b32.xlu0 %v2602, 115
        %v2611 = vpop.permute.xlu0 %2610
        %2615 = vst.msk [vmem:[#allocation7 + $0x9c] sm:$0xf] %vm2380, %v2607
        %2616 = vst.msk [vmem:[#allocation7 + $0xa0] sm:$0xf] %vm2380, %v2609
        %2617 = vst.msk [vmem:[#allocation7 + $0xa4] sm:$0xf] %vm2380, %v2611
        %v2618 = vld [vmem:[#allocation4] sm:$0xf]
        %v2619 = vld [vmem:[#allocation4 + $0x4] sm:$0xf]
        %v2620 = vld [vmem:[#allocation4 + $0x8] sm:$0xf]
        %2624 = vrot.lane.b32.xlu0 %v2618, 114
        %v2625 = vpop.permute.xlu0 %2624
        %2626 = vrot.lane.b32.xlu0 %v2619, 114
        %v2627 = vpop.permute.xlu0 %2626
        %2628 = vrot.lane.b32.xlu0 %v2620, 114
        %v2629 = vpop.permute.xlu0 %2628
        %2633 = vst.msk [vmem:[#allocation7 + $0xa8] sm:$0xf] %vm2380, %v2625
        %2634 = vst.msk [vmem:[#allocation7 + $0xac] sm:$0xf] %vm2380, %v2627
        %2635 = vst.msk [vmem:[#allocation7 + $0xb0] sm:$0xf] %vm2380, %v2629
        %v2636 = vld [vmem:[#allocation4] sm:$0xf]
        %v2637 = vld [vmem:[#allocation4 + $0x4] sm:$0xf]
        %v2638 = vld [vmem:[#allocation4 + $0x8] sm:$0xf]
        %2642 = vrot.lane.b32.xlu0 %v2636, 113
        %v2643 = vpop.permute.xlu0 %2642
        %2644 = vrot.lane.b32.xlu0 %v2637, 113
        %v2645 = vpop.permute.xlu0 %2644
        %2646 = vrot.lane.b32.xlu0 %v2638, 113
        %v2647 = vpop.permute.xlu0 %2646
        %2651 = vst.msk [vmem:[#allocation7 + $0xb4] sm:$0xf] %vm2380, %v2643
        %2652 = vst.msk [vmem:[#allocation7 + $0xb8] sm:$0xf] %vm2380, %v2645
        %2653 = vst.msk [vmem:[#allocation7 + $0xbc] sm:$0xf] %vm2380, %v2647
        %v2654 = vld [vmem:[#allocation4] sm:$0xf]
        %v2655 = vld [vmem:[#allocation4 + $0x4] sm:$0xf]
        %v2656 = vld [vmem:[#allocation4 + $0x8] sm:$0xf]
        %2660 = vrot.lane.b32.xlu0 %v2654, 112
        %v2661 = vpop.permute.xlu0 %2660
        %2662 = vrot.lane.b32.xlu0 %v2655, 112
        %v2663 = vpop.permute.xlu0 %2662
        %2664 = vrot.lane.b32.xlu0 %v2656, 112
        %v2665 = vpop.permute.xlu0 %2664
        %2669 = vst.msk [vmem:[#allocation7 + $0xc0] sm:$0xf] %vm2380, %v2661
        %2670 = vst.msk [vmem:[#allocation7 + $0xc4] sm:$0xf] %vm2380, %v2663
        %2671 = vst.msk [vmem:[#allocation7 + $0xc8] sm:$0xf] %vm2380, %v2665
        %v2672 = vld [vmem:[#allocation4] sm:$0xf]
        %v2673 = vld [vmem:[#allocation4 + $0x4] sm:$0xf]
        %v2674 = vld [vmem:[#allocation4 + $0x8] sm:$0xf]
        %2678 = vrot.lane.b32.xlu0 %v2672, 111
        %v2679 = vpop.permute.xlu0 %2678
        %2680 = vrot.lane.b32.xlu0 %v2673, 111
        %v2681 = vpop.permute.xlu0 %2680
        %2682 = vrot.lane.b32.xlu0 %v2674, 111
        %v2683 = vpop.permute.xlu0 %2682
        %2687 = vst.msk [vmem:[#allocation7 + $0xcc] sm:$0xf] %vm2380, %v2679
        %2688 = vst.msk [vmem:[#allocation7 + $0xd0] sm:$0xf] %vm2380, %v2681
        %2689 = vst.msk [vmem:[#allocation7 + $0xd4] sm:$0xf] %vm2380, %v2683
        %v2690 = vld [vmem:[#allocation4] sm:$0xf]
        %v2691 = vld [vmem:[#allocation4 + $0x4] sm:$0xf]
        %v2692 = vld [vmem:[#allocation4 + $0x8] sm:$0xf]
        %2696 = vrot.lane.b32.xlu0 %v2690, 110
        %v2697 = vpop.permute.xlu0 %2696
        %2698 = vrot.lane.b32.xlu0 %v2691, 110
        %v2699 = vpop.permute.xlu0 %2698
        %2700 = vrot.lane.b32.xlu0 %v2692, 110
        %v2701 = vpop.permute.xlu0 %2700
        %2705 = vst.msk [vmem:[#allocation7 + $0xd8] sm:$0xf] %vm2380, %v2697
        %2706 = vst.msk [vmem:[#allocation7 + $0xdc] sm:$0xf] %vm2380, %v2699
        %2707 = vst.msk [vmem:[#allocation7 + $0xe0] sm:$0xf] %vm2380, %v2701
        %v2708 = vld [vmem:[#allocation4] sm:$0xf]
        %v2709 = vld [vmem:[#allocation4 + $0x4] sm:$0xf]
        %v2710 = vld [vmem:[#allocation4 + $0x8] sm:$0xf]
        %2714 = vrot.lane.b32.xlu0 %v2708, 109
        %v2715 = vpop.permute.xlu0 %2714
        %2716 = vrot.lane.b32.xlu0 %v2709, 109
        %v2717 = vpop.permute.xlu0 %2716
        %2718 = vrot.lane.b32.xlu0 %v2710, 109
        %v2719 = vpop.permute.xlu0 %2718
        %2723 = vst.msk [vmem:[#allocation7 + $0xe4] sm:$0xf] %vm2380, %v2715
        %2724 = vst.msk [vmem:[#allocation7 + $0xe8] sm:$0xf] %vm2380, %v2717
        %2725 = vst.msk [vmem:[#allocation7 + $0xec] sm:$0xf] %vm2380, %v2719
        %v2726 = vld [vmem:[#allocation4] sm:$0xf]
        %v2727 = vld [vmem:[#allocation4 + $0x4] sm:$0xf]
        %v2728 = vld [vmem:[#allocation4 + $0x8] sm:$0xf]
        %2732 = vrot.lane.b32.xlu0 %v2726, 108
        %v2733 = vpop.permute.xlu0 %2732
        %2734 = vrot.lane.b32.xlu0 %v2727, 108
        %v2735 = vpop.permute.xlu0 %2734
        %2736 = vrot.lane.b32.xlu0 %v2728, 108
        %v2737 = vpop.permute.xlu0 %2736
        %2741 = vst.msk [vmem:[#allocation7 + $0xf0] sm:$0xf] %vm2380, %v2733
        %2742 = vst.msk [vmem:[#allocation7 + $0xf4] sm:$0xf] %vm2380, %v2735
        %2743 = vst.msk [vmem:[#allocation7 + $0xf8] sm:$0xf] %vm2380, %v2737
        %v2744 = vld [vmem:[#allocation4] sm:$0xf]
        %v2745 = vld [vmem:[#allocation4 + $0x4] sm:$0xf]
        %v2746 = vld [vmem:[#allocation4 + $0x8] sm:$0xf]
        %2750 = vrot.lane.b32.xlu0 %v2744, 107
        %v2751 = vpop.permute.xlu0 %2750
        %2752 = vrot.lane.b32.xlu0 %v2745, 107
        %v2753 = vpop.permute.xlu0 %2752
        %2754 = vrot.lane.b32.xlu0 %v2746, 107
        %v2755 = vpop.permute.xlu0 %2754
        %2759 = vst.msk [vmem:[#allocation7 + $0xfc] sm:$0xf] %vm2380, %v2751
        %2760 = vst.msk [vmem:[#allocation7 + $0x100] sm:$0xf] %vm2380, %v2753
        %2761 = vst.msk [vmem:[#allocation7 + $0x104] sm:$0xf] %vm2380, %v2755
        %v2762 = vld [vmem:[#allocation4] sm:$0xf]
        %v2763 = vld [vmem:[#allocation4 + $0x4] sm:$0xf]
        %v2764 = vld [vmem:[#allocation4 + $0x8] sm:$0xf]
        %2768 = vrot.lane.b32.xlu0 %v2762, 106
        %v2769 = vpop.permute.xlu0 %2768
        %2770 = vrot.lane.b32.xlu0 %v2763, 106
        %v2771 = vpop.permute.xlu0 %2770
        %2772 = vrot.lane.b32.xlu0 %v2764, 106
        %v2773 = vpop.permute.xlu0 %2772
        %2777 = vst.msk [vmem:[#allocation7 + $0x108] sm:$0xf] %vm2380, %v2769
        %2778 = vst.msk [vmem:[#allocation7 + $0x10c] sm:$0xf] %vm2380, %v2771
        %2779 = vst.msk [vmem:[#allocation7 + $0x110] sm:$0xf] %vm2380, %v2773
        %v2780 = vld [vmem:[#allocation4] sm:$0xf]
        %v2781 = vld [vmem:[#allocation4 + $0x4] sm:$0xf]
        %v2782 = vld [vmem:[#allocation4 + $0x8] sm:$0xf]
        %2786 = vrot.lane.b32.xlu0 %v2780, 105
        %v2787 = vpop.permute.xlu0 %2786
        %2788 = vrot.lane.b32.xlu0 %v2781, 105
        %v2789 = vpop.permute.xlu0 %2788
        %2790 = vrot.lane.b32.xlu0 %v2782, 105
        %v2791 = vpop.permute.xlu0 %2790
        %2795 = vst.msk [vmem:[#allocation7 + $0x114] sm:$0xf] %vm2380, %v2787
        %2796 = vst.msk [vmem:[#allocation7 + $0x118] sm:$0xf] %vm2380, %v2789
        %2797 = vst.msk [vmem:[#allocation7 + $0x11c] sm:$0xf] %vm2380, %v2791
        %v2798 = vld [vmem:[#allocation4] sm:$0xf]
        %v2799 = vld [vmem:[#allocation4 + $0x4] sm:$0xf]
        %v2800 = vld [vmem:[#allocation4 + $0x8] sm:$0xf]
        %2804 = vrot.lane.b32.xlu0 %v2798, 104
        %v2805 = vpop.permute.xlu0 %2804
        %2806 = vrot.lane.b32.xlu0 %v2799, 104
        %v2807 = vpop.permute.xlu0 %2806
        %2808 = vrot.lane.b32.xlu0 %v2800, 104
        %v2809 = vpop.permute.xlu0 %2808
        %2813 = vst.msk [vmem:[#allocation7 + $0x120] sm:$0xf] %vm2380, %v2805
        %2814 = vst.msk [vmem:[#allocation7 + $0x124] sm:$0xf] %vm2380, %v2807
        %2815 = vst.msk [vmem:[#allocation7 + $0x128] sm:$0xf] %vm2380, %v2809
        %v2816 = vld [vmem:[#allocation4] sm:$0xf]
        %v2817 = vld [vmem:[#allocation4 + $0x4] sm:$0xf]
        %v2818 = vld [vmem:[#allocation4 + $0x8] sm:$0xf]
        %2822 = vrot.lane.b32.xlu0 %v2816, 103
        %v2823 = vpop.permute.xlu0 %2822
        %2824 = vrot.lane.b32.xlu0 %v2817, 103
        %v2825 = vpop.permute.xlu0 %2824
        %2826 = vrot.lane.b32.xlu0 %v2818, 103
        %v2827 = vpop.permute.xlu0 %2826
        %2831 = vst.msk [vmem:[#allocation7 + $0x12c] sm:$0xf] %vm2380, %v2823
        %2832 = vst.msk [vmem:[#allocation7 + $0x130] sm:$0xf] %vm2380, %v2825
        %2833 = vst.msk [vmem:[#allocation7 + $0x134] sm:$0xf] %vm2380, %v2827
        %v2834 = vld [vmem:[#allocation4] sm:$0xf]
        %v2835 = vld [vmem:[#allocation4 + $0x4] sm:$0xf]
        %v2836 = vld [vmem:[#allocation4 + $0x8] sm:$0xf]
        %2840 = vrot.lane.b32.xlu0 %v2834, 102
        %v2841 = vpop.permute.xlu0 %2840
        %2842 = vrot.lane.b32.xlu0 %v2835, 102
        %v2843 = vpop.permute.xlu0 %2842
        %2844 = vrot.lane.b32.xlu0 %v2836, 102
        %v2845 = vpop.permute.xlu0 %2844
        %2849 = vst.msk [vmem:[#allocation7 + $0x138] sm:$0xf] %vm2380, %v2841
        %2850 = vst.msk [vmem:[#allocation7 + $0x13c] sm:$0xf] %vm2380, %v2843
        %2851 = vst.msk [vmem:[#allocation7 + $0x140] sm:$0xf] %vm2380, %v2845
        %v2852 = vld [vmem:[#allocation4] sm:$0xf]
        %v2853 = vld [vmem:[#allocation4 + $0x4] sm:$0xf]
        %v2854 = vld [vmem:[#allocation4 + $0x8] sm:$0xf]
        %2858 = vrot.lane.b32.xlu0 %v2852, 101
        %v2859 = vpop.permute.xlu0 %2858
        %2860 = vrot.lane.b32.xlu0 %v2853, 101
        %v2861 = vpop.permute.xlu0 %2860
        %2862 = vrot.lane.b32.xlu0 %v2854, 101
        %v2863 = vpop.permute.xlu0 %2862
        %2867 = vst.msk [vmem:[#allocation7 + $0x144] sm:$0xf] %vm2380, %v2859
        %2868 = vst.msk [vmem:[#allocation7 + $0x148] sm:$0xf] %vm2380, %v2861
        %2869 = vst.msk [vmem:[#allocation7 + $0x14c] sm:$0xf] %vm2380, %v2863
        %v2870 = vld [vmem:[#allocation4] sm:$0xf]
        %v2871 = vld [vmem:[#allocation4 + $0x4] sm:$0xf]
        %v2872 = vld [vmem:[#allocation4 + $0x8] sm:$0xf]
        %2876 = vrot.lane.b32.xlu0 %v2870, 100
        %v2877 = vpop.permute.xlu0 %2876
        %2878 = vrot.lane.b32.xlu0 %v2871, 100
        %v2879 = vpop.permute.xlu0 %2878
        %2880 = vrot.lane.b32.xlu0 %v2872, 100
        %v2881 = vpop.permute.xlu0 %2880
        %2885 = vst.msk [vmem:[#allocation7 + $0x150] sm:$0xf] %vm2380, %v2877
        %2886 = vst.msk [vmem:[#allocation7 + $0x154] sm:$0xf] %vm2380, %v2879
        %2887 = vst.msk [vmem:[#allocation7 + $0x158] sm:$0xf] %vm2380, %v2881
        %v2888 = vld [vmem:[#allocation4] sm:$0xf]
        %v2889 = vld [vmem:[#allocation4 + $0x4] sm:$0xf]
        %v2890 = vld [vmem:[#allocation4 + $0x8] sm:$0xf]
        %2894 = vrot.lane.b32.xlu0 %v2888, 99
        %v2895 = vpop.permute.xlu0 %2894
        %2896 = vrot.lane.b32.xlu0 %v2889, 99
        %v2897 = vpop.permute.xlu0 %2896
        %2898 = vrot.lane.b32.xlu0 %v2890, 99
        %v2899 = vpop.permute.xlu0 %2898
        %2903 = vst.msk [vmem:[#allocation7 + $0x15c] sm:$0xf] %vm2380, %v2895
        %2904 = vst.msk [vmem:[#allocation7 + $0x160] sm:$0xf] %vm2380, %v2897
        %2905 = vst.msk [vmem:[#allocation7 + $0x164] sm:$0xf] %vm2380, %v2899
        %v2906 = vld [vmem:[#allocation4] sm:$0xf]
        %v2907 = vld [vmem:[#allocation4 + $0x4] sm:$0xf]
        %v2908 = vld [vmem:[#allocation4 + $0x8] sm:$0xf]
        %2912 = vrot.lane.b32.xlu0 %v2906, 98
        %v2913 = vpop.permute.xlu0 %2912
        %2914 = vrot.lane.b32.xlu0 %v2907, 98
        %v2915 = vpop.permute.xlu0 %2914
        %2916 = vrot.lane.b32.xlu0 %v2908, 98
        %v2917 = vpop.permute.xlu0 %2916
        %2921 = vst.msk [vmem:[#allocation7 + $0x168] sm:$0xf] %vm2380, %v2913
        %2922 = vst.msk [vmem:[#allocation7 + $0x16c] sm:$0xf] %vm2380, %v2915
        %2923 = vst.msk [vmem:[#allocation7 + $0x170] sm:$0xf] %vm2380, %v2917
        %v2924 = vld [vmem:[#allocation4] sm:$0xf]
        %v2925 = vld [vmem:[#allocation4 + $0x4] sm:$0xf]
        %v2926 = vld [vmem:[#allocation4 + $0x8] sm:$0xf]
        %2930 = vrot.lane.b32.xlu0 %v2924, 97
        %v2931 = vpop.permute.xlu0 %2930
        %2932 = vrot.lane.b32.xlu0 %v2925, 97
        %v2933 = vpop.permute.xlu0 %2932
        %2934 = vrot.lane.b32.xlu0 %v2926, 97
        %v2935 = vpop.permute.xlu0 %2934
        %2939 = vst.msk [vmem:[#allocation7 + $0x174] sm:$0xf] %vm2380, %v2931
        %2940 = vst.msk [vmem:[#allocation7 + $0x178] sm:$0xf] %vm2380, %v2933
        %2941 = vst.msk [vmem:[#allocation7 + $0x17c] sm:$0xf] %vm2380, %v2935
        %v2942 = vld [vmem:[#allocation4] sm:$0xf]
        %v2943 = vld [vmem:[#allocation4 + $0x4] sm:$0xf]
        %v2944 = vld [vmem:[#allocation4 + $0x8] sm:$0xf]
        %2948 = vrot.lane.b32.xlu0 %v2942, 96
        %v2949 = vpop.permute.xlu0 %2948
        %2950 = vrot.lane.b32.xlu0 %v2943, 96
        %v2951 = vpop.permute.xlu0 %2950
        %2952 = vrot.lane.b32.xlu0 %v2944, 96
        %v2953 = vpop.permute.xlu0 %2952
        %2957 = vst.msk [vmem:[#allocation7 + $0x180] sm:$0xf] %vm2380, %v2949
        %2958 = vst.msk [vmem:[#allocation7 + $0x184] sm:$0xf] %vm2380, %v2951
        %2959 = vst.msk [vmem:[#allocation7 + $0x188] sm:$0xf] %vm2380, %v2953
        %v2960 = vld [vmem:[#allocation4] sm:$0xf]
        %v2961 = vld [vmem:[#allocation4 + $0x4] sm:$0xf]
        %v2962 = vld [vmem:[#allocation4 + $0x8] sm:$0xf]
        %2966 = vrot.lane.b32.xlu0 %v2960, 95
        %v2967 = vpop.permute.xlu0 %2966
        %2968 = vrot.lane.b32.xlu0 %v2961, 95
        %v2969 = vpop.permute.xlu0 %2968
        %2970 = vrot.lane.b32.xlu0 %v2962, 95
        %v2971 = vpop.permute.xlu0 %2970
        %2975 = vst.msk [vmem:[#allocation7 + $0x18c] sm:$0xf] %vm2380, %v2967
        %2976 = vst.msk [vmem:[#allocation7 + $0x190] sm:$0xf] %vm2380, %v2969
        %2977 = vst.msk [vmem:[#allocation7 + $0x194] sm:$0xf] %vm2380, %v2971
        %v2978 = vld [vmem:[#allocation4] sm:$0xf]
        %v2979 = vld [vmem:[#allocation4 + $0x4] sm:$0xf]
        %v2980 = vld [vmem:[#allocation4 + $0x8] sm:$0xf]
        %2984 = vrot.lane.b32.xlu0 %v2978, 94
        %v2985 = vpop.permute.xlu0 %2984
        %2986 = vrot.lane.b32.xlu0 %v2979, 94
        %v2987 = vpop.permute.xlu0 %2986
        %2988 = vrot.lane.b32.xlu0 %v2980, 94
        %v2989 = vpop.permute.xlu0 %2988
        %2993 = vst.msk [vmem:[#allocation7 + $0x198] sm:$0xf] %vm2380, %v2985
        %2994 = vst.msk [vmem:[#allocation7 + $0x19c] sm:$0xf] %vm2380, %v2987
        %2995 = vst.msk [vmem:[#allocation7 + $0x1a0] sm:$0xf] %vm2380, %v2989
        %v2996 = vld [vmem:[#allocation7] sm:$0xf]
        %v2997 = vld [vmem:[#allocation7 + $0x4] sm:$0xf]
        %v2998 = vld [vmem:[#allocation7 + $0x8] sm:$0xf]
        %v2999 = vld [vmem:[#allocation7 + $0xc] sm:$0xf]
        %v3000 = vld [vmem:[#allocation7 + $0x10] sm:$0xf]
        %v3001 = vld [vmem:[#allocation7 + $0x14] sm:$0xf]
        %v3002 = vld [vmem:[#allocation7 + $0x18] sm:$0xf]
        %v3003 = vld [vmem:[#allocation7 + $0x1c] sm:$0xf]
        %v3004 = vld [vmem:[#allocation7 + $0x20] sm:$0xf]
        %v3005 = vld [vmem:[#allocation7 + $0x24] sm:$0xf]
        %v3006 = vld [vmem:[#allocation7 + $0x28] sm:$0xf]
        %v3007 = vld [vmem:[#allocation7 + $0x2c] sm:$0xf]
        %v3008 = vld [vmem:[#allocation7 + $0x30] sm:$0xf]
        %v3009 = vld [vmem:[#allocation7 + $0x34] sm:$0xf]
        %v3010 = vld [vmem:[#allocation7 + $0x38] sm:$0xf]
        %v3011 = vld [vmem:[#allocation7 + $0x3c] sm:$0xf]
        %v3012 = vld [vmem:[#allocation7 + $0x40] sm:$0xf]
        %v3013 = vld [vmem:[#allocation7 + $0x44] sm:$0xf]
        %v3014 = vld [vmem:[#allocation7 + $0x48] sm:$0xf]
        %v3015 = vld [vmem:[#allocation7 + $0x4c] sm:$0xf]
        %v3016 = vld [vmem:[#allocation7 + $0x50] sm:$0xf]
        %v3017 = vld [vmem:[#allocation7 + $0x54] sm:$0xf]
        %v3018 = vld [vmem:[#allocation7 + $0x58] sm:$0xf]
        %v3019 = vld [vmem:[#allocation7 + $0x5c] sm:$0xf]
        %v3020 = vld [vmem:[#allocation7 + $0x60] sm:$0xf]
        %v3021 = vld [vmem:[#allocation7 + $0x64] sm:$0xf]
        %v3022 = vld [vmem:[#allocation7 + $0x68] sm:$0xf]
        %v3023 = vld [vmem:[#allocation7 + $0x6c] sm:$0xf]
        %v3024 = vld [vmem:[#allocation7 + $0x70] sm:$0xf]
        %v3025 = vld [vmem:[#allocation7 + $0x74] sm:$0xf]
        %v3026 = vld [vmem:[#allocation7 + $0x78] sm:$0xf]
        %v3027 = vld [vmem:[#allocation7 + $0x7c] sm:$0xf]
        %v3028 = vld [vmem:[#allocation7 + $0x80] sm:$0xf]
        %v3029 = vld [vmem:[#allocation7 + $0x84] sm:$0xf]
        %v3030 = vld [vmem:[#allocation7 + $0x88] sm:$0xf]
        %v3031 = vld [vmem:[#allocation7 + $0x8c] sm:$0xf]
        %v3032 = vld [vmem:[#allocation7 + $0x90] sm:$0xf]
        %v3033 = vld [vmem:[#allocation7 + $0x94] sm:$0xf]
        %v3034 = vld [vmem:[#allocation7 + $0x98] sm:$0xf]
        %v3035 = vld [vmem:[#allocation7 + $0x9c] sm:$0xf]
        %v3036 = vld [vmem:[#allocation7 + $0xa0] sm:$0xf]
        %v3037 = vld [vmem:[#allocation7 + $0xa4] sm:$0xf]
        %v3038 = vld [vmem:[#allocation7 + $0xa8] sm:$0xf]
        %v3039 = vld [vmem:[#allocation7 + $0xac] sm:$0xf]
        %v3040 = vld [vmem:[#allocation7 + $0xb0] sm:$0xf]
        %v3041 = vld [vmem:[#allocation7 + $0xb4] sm:$0xf]
        %v3042 = vld [vmem:[#allocation7 + $0xb8] sm:$0xf]
        %v3043 = vld [vmem:[#allocation7 + $0xbc] sm:$0xf]
        %v3044 = vld [vmem:[#allocation7 + $0xc0] sm:$0xf]
        %v3045 = vld [vmem:[#allocation7 + $0xc4] sm:$0xf]
        %v3046 = vld [vmem:[#allocation7 + $0xc8] sm:$0xf]
        %v3047 = vld [vmem:[#allocation7 + $0xcc] sm:$0xf]
        %v3048 = vld [vmem:[#allocation7 + $0xd0] sm:$0xf]
        %v3049 = vld [vmem:[#allocation7 + $0xd4] sm:$0xf]
        %v3050 = vld [vmem:[#allocation7 + $0xd8] sm:$0xf]
        %v3051 = vld [vmem:[#allocation7 + $0xdc] sm:$0xf]
        %v3052 = vld [vmem:[#allocation7 + $0xe0] sm:$0xf]
        %v3053 = vld [vmem:[#allocation7 + $0xe4] sm:$0xf]
        %v3054 = vld [vmem:[#allocation7 + $0xe8] sm:$0xf]
        %v3055 = vld [vmem:[#allocation7 + $0xec] sm:$0xf]
        %v3056 = vld [vmem:[#allocation7 + $0xf0] sm:$0xf]
        %v3057 = vld [vmem:[#allocation7 + $0xf4] sm:$0xf]
        %v3058 = vld [vmem:[#allocation7 + $0xf8] sm:$0xf]
        %v3059 = vld [vmem:[#allocation7 + $0xfc] sm:$0xf]
        %v3060 = vld [vmem:[#allocation7 + $0x100] sm:$0xf]
        %v3061 = vld [vmem:[#allocation7 + $0x104] sm:$0xf]
        %v3062 = vld [vmem:[#allocation7 + $0x108] sm:$0xf]
        %v3063 = vld [vmem:[#allocation7 + $0x10c] sm:$0xf]
        %v3064 = vld [vmem:[#allocation7 + $0x110] sm:$0xf]
        %v3065 = vld [vmem:[#allocation7 + $0x114] sm:$0xf]
        %v3066 = vld [vmem:[#allocation7 + $0x118] sm:$0xf]
        %v3067 = vld [vmem:[#allocation7 + $0x11c] sm:$0xf]
        %v3068 = vld [vmem:[#allocation7 + $0x120] sm:$0xf]
        %v3069 = vld [vmem:[#allocation7 + $0x124] sm:$0xf]
        %v3070 = vld [vmem:[#allocation7 + $0x128] sm:$0xf]
        %v3071 = vld [vmem:[#allocation7 + $0x12c] sm:$0xf]
        %v3072 = vld [vmem:[#allocation7 + $0x130] sm:$0xf]
        %v3073 = vld [vmem:[#allocation7 + $0x134] sm:$0xf]
        %v3074 = vld [vmem:[#allocation7 + $0x138] sm:$0xf]
        %v3075 = vld [vmem:[#allocation7 + $0x13c] sm:$0xf]
        %v3076 = vld [vmem:[#allocation7 + $0x140] sm:$0xf]
        %v3077 = vld [vmem:[#allocation7 + $0x144] sm:$0xf]
        %v3078 = vld [vmem:[#allocation7 + $0x148] sm:$0xf]
        %v3079 = vld [vmem:[#allocation7 + $0x14c] sm:$0xf]
        %v3080 = vld [vmem:[#allocation7 + $0x150] sm:$0xf]
        %v3081 = vld [vmem:[#allocation7 + $0x154] sm:$0xf]
        %v3082 = vld [vmem:[#allocation7 + $0x158] sm:$0xf]
        %v3083 = vld [vmem:[#allocation7 + $0x15c] sm:$0xf]
        %v3084 = vld [vmem:[#allocation7 + $0x160] sm:$0xf]
        %v3085 = vld [vmem:[#allocation7 + $0x164] sm:$0xf]
        %v3086 = vld [vmem:[#allocation7 + $0x168] sm:$0xf]
        %v3087 = vld [vmem:[#allocation7 + $0x16c] sm:$0xf]
        %v3088 = vld [vmem:[#allocation7 + $0x170] sm:$0xf]
        %v3089 = vld [vmem:[#allocation7 + $0x174] sm:$0xf]
        %v3090 = vld [vmem:[#allocation7 + $0x178] sm:$0xf]
        %v3091 = vld [vmem:[#allocation7 + $0x17c] sm:$0xf]
        %v3092 = vld [vmem:[#allocation7 + $0x180] sm:$0xf]
        %v3093 = vld [vmem:[#allocation7 + $0x184] sm:$0xf]
        %v3094 = vld [vmem:[#allocation7 + $0x188] sm:$0xf]
        %v3095 = vld [vmem:[#allocation7 + $0x18c] sm:$0xf]
        %v3096 = vld [vmem:[#allocation7 + $0x190] sm:$0xf]
        %v3097 = vld [vmem:[#allocation7 + $0x194] sm:$0xf]
        %v3098 = vld [vmem:[#allocation7 + $0x198] sm:$0xf]
        %v3099 = vld [vmem:[#allocation7 + $0x19c] sm:$0xf]
        %v3100 = vld [vmem:[#allocation7 + $0x1a0] sm:$0xf]
        %v3101 = vld [vmem:[%s7] sm:$0xff]
        %v3102 = vld [vmem:[%s7 + $0x8] sm:$0xff]
        %v3103 = vld [vmem:[%s7 + $0x10] sm:$0xff]
        %v3104 = vld [vmem:[%s7 + $0x18] sm:$0xf]
        %v3105 = vld [vmem:[%s7 + $0x1c] sm:$0xff]
        %v3106 = vld [vmem:[%s7 + $0x24] sm:$0xff]
        %v3107 = vld [vmem:[%s7 + $0x2c] sm:$0xff]
        %v3108 = vld [vmem:[%s7 + $0x34] sm:$0xf]
        %v3109 = vld [vmem:[%s7 + $0x38] sm:$0xff]
        %v3110 = vld [vmem:[%s7 + $0x40] sm:$0xff]
        %v3111 = vld [vmem:[%s7 + $0x48] sm:$0xff]
        %v3112 = vld [vmem:[%s7 + $0x50] sm:$0xf]
        %v3113 = vld [vmem:[%s7 + $0x54] sm:$0xff]
        %v3114 = vld [vmem:[%s7 + $0x5c] sm:$0xff]
        %v3115 = vld [vmem:[%s7 + $0x64] sm:$0xff]
        %v3116 = vld [vmem:[%s7 + $0x6c] sm:$0xf]
        %v3117 = vld [vmem:[%s7 + $0x70] sm:$0xff]
        %v3118 = vld [vmem:[%s7 + $0x78] sm:$0xff]
        %v3119 = vld [vmem:[%s7 + $0x80] sm:$0xff]
        %v3120 = vld [vmem:[%s7 + $0x88] sm:$0xf]
        %v3121 = vld [vmem:[%s7 + $0x8c] sm:$0xff]
        %v3122 = vld [vmem:[%s7 + $0x94] sm:$0xff]
        %v3123 = vld [vmem:[%s7 + $0x9c] sm:$0xff]
        %v3124 = vld [vmem:[%s7 + $0xa4] sm:$0xf]
        %v3125 = vld [vmem:[%s7 + $0xa8] sm:$0xff]
        %v3126 = vld [vmem:[%s7 + $0xb0] sm:$0xff]
        %v3127 = vld [vmem:[%s7 + $0xb8] sm:$0xff]
        %v3128 = vld [vmem:[%s7 + $0xc0] sm:$0xf]
        %v3129 = vld [vmem:[%s7 + $0xc4] sm:$0xff]
        %v3130 = vld [vmem:[%s7 + $0xcc] sm:$0xff]
        %v3131 = vld [vmem:[%s7 + $0xd4] sm:$0xff]
        %v3132 = vld [vmem:[%s7 + $0xdc] sm:$0xf]
        %v3133 = vld [vmem:[%s7 + $0xe0] sm:$0xff]
        %v3134 = vld [vmem:[%s7 + $0xe8] sm:$0xff]
        %v3135 = vld [vmem:[%s7 + $0xf0] sm:$0xff]
        %v3136 = vld [vmem:[%s7 + $0xf8] sm:$0xf]
        %v3137 = vld [vmem:[%s7 + $0xfc] sm:$0xff]
        %v3138 = vld [vmem:[%s7 + $0x104] sm:$0xff]
        %v3139 = vld [vmem:[%s7 + $0x10c] sm:$0xff]
        %v3140 = vld [vmem:[%s7 + $0x114] sm:$0xf]
        %v3181 = vunpack.c.l.b16 %v3101
        %v3182 = vunpack.c.h.b16 %v3101
        %v3183 = vunpack.c.l.b16 %v3102
        %v3184 = vunpack.c.h.b16 %v3102
        %v3185 = vunpack.c.l.b16 %v3103
        %v3186 = vunpack.c.h.b16 %v3103
        %v3187 = vunpack.c.l.b16 %v3104
        %v3188 = vunpack.c.l.b16 %v3105
        %v3189 = vunpack.c.h.b16 %v3105
        %v3190 = vunpack.c.l.b16 %v3106
        %v3191 = vunpack.c.h.b16 %v3106
        %v3192 = vunpack.c.l.b16 %v3107
        %v3193 = vunpack.c.h.b16 %v3107
        %v3194 = vunpack.c.l.b16 %v3108
        %v3195 = vunpack.c.l.b16 %v3109
        %v3196 = vunpack.c.h.b16 %v3109
        %v3197 = vunpack.c.l.b16 %v3110
        %v3198 = vunpack.c.h.b16 %v3110
        %v3199 = vunpack.c.l.b16 %v3111
        %v3200 = vunpack.c.h.b16 %v3111
        %v3201 = vunpack.c.l.b16 %v3112
        %v3202 = vunpack.c.l.b16 %v3113
        %v3203 = vunpack.c.h.b16 %v3113
        %v3204 = vunpack.c.l.b16 %v3114
        %v3205 = vunpack.c.h.b16 %v3114
        %v3206 = vunpack.c.l.b16 %v3115
        %v3207 = vunpack.c.h.b16 %v3115
        %v3208 = vunpack.c.l.b16 %v3116
        %v3209 = vunpack.c.l.b16 %v3117
        %v3210 = vunpack.c.h.b16 %v3117
        %v3211 = vunpack.c.l.b16 %v3118
        %v3212 = vunpack.c.h.b16 %v3118
        %v3213 = vunpack.c.l.b16 %v3119
        %v3214 = vunpack.c.h.b16 %v3119
        %v3215 = vunpack.c.l.b16 %v3120
        %v3216 = vunpack.c.l.b16 %v3121
        %v3217 = vunpack.c.h.b16 %v3121
        %v3218 = vunpack.c.l.b16 %v3122
        %v3219 = vunpack.c.h.b16 %v3122
        %v3220 = vunpack.c.l.b16 %v3123
        %v3221 = vunpack.c.h.b16 %v3123
        %v3222 = vunpack.c.l.b16 %v3124
        %v3223 = vunpack.c.l.b16 %v3125
        %v3224 = vunpack.c.h.b16 %v3125
        %v3225 = vunpack.c.l.b16 %v3126
        %v3226 = vunpack.c.h.b16 %v3126
        %v3227 = vunpack.c.l.b16 %v3127
        %v3228 = vunpack.c.h.b16 %v3127
        %v3229 = vunpack.c.l.b16 %v3128
        %v3230 = vunpack.c.l.b16 %v3129
        %v3231 = vunpack.c.h.b16 %v3129
        %v3232 = vunpack.c.l.b16 %v3130
        %v3233 = vunpack.c.h.b16 %v3130
        %v3234 = vunpack.c.l.b16 %v3131
        %v3235 = vunpack.c.h.b16 %v3131
        %v3236 = vunpack.c.l.b16 %v3132
        %v3237 = vunpack.c.l.b16 %v3133
        %v3238 = vunpack.c.h.b16 %v3133
        %v3239 = vunpack.c.l.b16 %v3134
        %v3240 = vunpack.c.h.b16 %v3134
        %v3241 = vunpack.c.l.b16 %v3135
        %v3242 = vunpack.c.h.b16 %v3135
        %v3243 = vunpack.c.l.b16 %v3136
        %v3244 = vunpack.c.l.b16 %v3137
        %v3245 = vunpack.c.h.b16 %v3137
        %v3246 = vunpack.c.l.b16 %v3138
        %v3247 = vunpack.c.h.b16 %v3138
        %v3248 = vunpack.c.l.b16 %v3139
        %v3249 = vunpack.c.h.b16 %v3139
        %v3250 = vunpack.c.l.b16 %v3140
        %v3251 = vpack.c.b16 %v3188, %v3181
        %v3252 = vpack.c.b16 %v3189, %v3182
        %v3253 = vpack.c.b16 %v3190, %v3183
        %v3254 = vpack.c.b16 %v3191, %v3184
        %v3255 = vpack.c.b16 %v3192, %v3185
        %v3256 = vpack.c.b16 %v3193, %v3186
        %v3257 = vpack.c.b16 %v3194, %v3187
        %v3258 = vpack.c.b16 %v3202, %v3195
        %v3259 = vpack.c.b16 %v3203, %v3196
        %v3260 = vpack.c.b16 %v3204, %v3197
        %v3261 = vpack.c.b16 %v3205, %v3198
        %v3262 = vpack.c.b16 %v3206, %v3199
        %v3263 = vpack.c.b16 %v3207, %v3200
        %v3264 = vpack.c.b16 %v3208, %v3201
        %v3265 = vpack.c.b16 %v3216, %v3209
        %v3266 = vpack.c.b16 %v3217, %v3210
        %v3267 = vpack.c.b16 %v3218, %v3211
        %v3268 = vpack.c.b16 %v3219, %v3212
        %v3269 = vpack.c.b16 %v3220, %v3213
        %v3270 = vpack.c.b16 %v3221, %v3214
        %v3271 = vpack.c.b16 %v3222, %v3215
        %v3272 = vpack.c.b16 %v3230, %v3223
        %v3273 = vpack.c.b16 %v3231, %v3224
        %v3274 = vpack.c.b16 %v3232, %v3225
        %v3275 = vpack.c.b16 %v3233, %v3226
        %v3276 = vpack.c.b16 %v3234, %v3227
        %v3277 = vpack.c.b16 %v3235, %v3228
        %v3278 = vpack.c.b16 %v3236, %v3229
        %v3279 = vpack.c.b16 %v3244, %v3237
        %v3280 = vpack.c.b16 %v3245, %v3238
        %v3281 = vpack.c.b16 %v3246, %v3239
        %v3282 = vpack.c.b16 %v3247, %v3240
        %v3283 = vpack.c.b16 %v3248, %v3241
        %v3284 = vpack.c.b16 %v3249, %v3242
        %v3285 = vpack.c.b16 %v3250, %v3243
        %v3421 = vunpack.c.l.b16 %v2996
        %v3422 = vunpack.c.l.b16 %v2997
        %v3423 = vunpack.c.l.b16 %v2998
        %v3424 = vunpack.c.l.b16 %v2999
        %v3425 = vunpack.c.l.b16 %v3000
        %v3426 = vunpack.c.l.b16 %v3001
        %v3427 = vunpack.c.l.b16 %v3002
        %v3428 = vunpack.c.l.b16 %v3003
        %v3429 = vunpack.c.l.b16 %v3004
        %v3430 = vunpack.c.l.b16 %v3005
        %v3431 = vunpack.c.l.b16 %v3006
        %v3432 = vunpack.c.l.b16 %v3007
        %v3433 = vunpack.c.l.b16 %v3008
        %v3434 = vunpack.c.l.b16 %v3009
        %v3435 = vunpack.c.l.b16 %v3010
        %v3436 = vunpack.c.l.b16 %v3011
        %v3437 = vunpack.c.l.b16 %v3012
        %v3438 = vunpack.c.l.b16 %v3013
        %v3439 = vunpack.c.l.b16 %v3014
        %v3440 = vunpack.c.l.b16 %v3015
        %v3441 = vunpack.c.l.b16 %v3016
        %v3442 = vunpack.c.l.b16 %v3017
        %v3443 = vunpack.c.l.b16 %v3018
        %v3444 = vunpack.c.l.b16 %v3019
        %v3445 = vunpack.c.l.b16 %v3020
        %v3446 = vunpack.c.l.b16 %v3021
        %v3447 = vunpack.c.l.b16 %v3022
        %v3448 = vunpack.c.l.b16 %v3023
        %v3449 = vunpack.c.l.b16 %v3024
        %v3450 = vunpack.c.l.b16 %v3025
        %v3451 = vunpack.c.l.b16 %v3026
        %v3452 = vunpack.c.l.b16 %v3027
        %v3453 = vunpack.c.l.b16 %v3028
        %v3454 = vunpack.c.l.b16 %v3029
        %v3455 = vunpack.c.l.b16 %v3030
        %v3456 = vunpack.c.l.b16 %v3031
        %v3457 = vunpack.c.l.b16 %v3032
        %v3458 = vunpack.c.l.b16 %v3033
        %v3459 = vunpack.c.l.b16 %v3034
        %v3460 = vunpack.c.l.b16 %v3035
        %v3461 = vunpack.c.l.b16 %v3036
        %v3462 = vunpack.c.l.b16 %v3037
        %v3463 = vunpack.c.l.b16 %v3038
        %v3464 = vunpack.c.l.b16 %v3039
        %v3465 = vunpack.c.l.b16 %v3040
        %v3466 = vunpack.c.l.b16 %v3041
        %v3467 = vunpack.c.l.b16 %v3042
        %v3468 = vunpack.c.l.b16 %v3043
        %v3469 = vunpack.c.l.b16 %v3044
        %v3470 = vunpack.c.l.b16 %v3045
        %v3471 = vunpack.c.l.b16 %v3046
        %v3472 = vunpack.c.l.b16 %v3047
        %v3473 = vunpack.c.l.b16 %v3048
        %v3474 = vunpack.c.l.b16 %v3049
        %v3475 = vunpack.c.l.b16 %v3050
        %v3476 = vunpack.c.l.b16 %v3051
        %v3477 = vunpack.c.l.b16 %v3052
        %v3478 = vunpack.c.l.b16 %v3053
        %v3479 = vunpack.c.l.b16 %v3054
        %v3480 = vunpack.c.l.b16 %v3055
        %v3481 = vunpack.c.l.b16 %v3056
        %v3482 = vunpack.c.l.b16 %v3057
        %v3483 = vunpack.c.l.b16 %v3058
        %v3484 = vunpack.c.l.b16 %v3059
        %v3485 = vunpack.c.l.b16 %v3060
        %v3486 = vunpack.c.l.b16 %v3061
        %v3487 = vunpack.c.l.b16 %v3062
        %v3488 = vunpack.c.l.b16 %v3063
        %v3489 = vunpack.c.l.b16 %v3064
        %v3490 = vunpack.c.l.b16 %v3065
        %v3491 = vunpack.c.l.b16 %v3066
        %v3492 = vunpack.c.l.b16 %v3067
        %v3493 = vunpack.c.l.b16 %v3068
        %v3494 = vunpack.c.l.b16 %v3069
        %v3495 = vunpack.c.l.b16 %v3070
        %v3496 = vunpack.c.l.b16 %v3071
        %v3497 = vunpack.c.l.b16 %v3072
        %v3498 = vunpack.c.l.b16 %v3073
        %v3499 = vunpack.c.l.b16 %v3074
        %v3500 = vunpack.c.l.b16 %v3075
        %v3501 = vunpack.c.l.b16 %v3076
        %v3502 = vunpack.c.l.b16 %v3077
        %v3503 = vunpack.c.l.b16 %v3078
        %v3504 = vunpack.c.l.b16 %v3079
        %v3505 = vunpack.c.l.b16 %v3080
        %v3506 = vunpack.c.l.b16 %v3081
        %v3507 = vunpack.c.l.b16 %v3082
        %v3508 = vunpack.c.l.b16 %v3083
        %v3509 = vunpack.c.l.b16 %v3084
        %v3510 = vunpack.c.l.b16 %v3085
        %v3511 = vunpack.c.l.b16 %v3086
        %v3512 = vunpack.c.l.b16 %v3087
        %v3513 = vunpack.c.l.b16 %v3088
        %v3514 = vunpack.c.l.b16 %v3089
        %v3515 = vunpack.c.l.b16 %v3090
        %v3516 = vunpack.c.l.b16 %v3091
        %v3517 = vunpack.c.l.b16 %v3092
        %v3518 = vunpack.c.l.b16 %v3093
        %v3519 = vunpack.c.l.b16 %v3094
        %v3520 = vunpack.c.l.b16 %v3095
        %v3521 = vunpack.c.l.b16 %v3096
        %v3522 = vunpack.c.l.b16 %v3097
        %v3523 = vunpack.c.l.b16 %v3098
        %v3524 = vunpack.c.l.b16 %v3099
        %v3525 = vunpack.c.l.b16 %v3100
        %v3526 = vpack.c.b16 %v3422, %v3421
        %v3527 = vpack.c.b16 %v3424, %v3423
        %v3528 = vpack.c.b16 %v3426, %v3425
        %v3529 = vpack.c.b16 %v3428, %v3427
        %v3530 = vpack.c.b16 %v3430, %v3429
        %v3531 = vpack.c.b16 %v3432, %v3431
        %v3532 = vpack.c.b16 %v3434, %v3433
        %v3533 = vpack.c.b16 %v3436, %v3435
        %v3534 = vpack.c.b16 %v3438, %v3437
        %v3535 = vpack.c.b16 %v3440, %v3439
        %v3536 = vpack.c.b16 %v3442, %v3441
        %v3537 = vpack.c.b16 %v3444, %v3443
        %v3538 = vpack.c.b16 %v3446, %v3445
        %v3539 = vpack.c.b16 %v3448, %v3447
        %v3540 = vpack.c.b16 %v3450, %v3449
        %v3541 = vpack.c.b16 %v3452, %v3451
        %v3542 = vpack.c.b16 %v3454, %v3453
        %v3543 = vpack.c.b16 %v3456, %v3455
        %v3544 = vpack.c.b16 %v3458, %v3457
        %v3545 = vpack.c.b16 %v3460, %v3459
        %v3546 = vpack.c.b16 %v3462, %v3461
        %v3547 = vpack.c.b16 %v3464, %v3463
        %v3548 = vpack.c.b16 %v3466, %v3465
        %v3549 = vpack.c.b16 %v3468, %v3467
        %v3550 = vpack.c.b16 %v3470, %v3469
        %v3551 = vpack.c.b16 %v3472, %v3471
        %v3552 = vpack.c.b16 %v3474, %v3473
        %v3553 = vpack.c.b16 %v3476, %v3475
        %v3554 = vpack.c.b16 %v3478, %v3477
        %v3555 = vpack.c.b16 %v3480, %v3479
        %v3556 = vpack.c.b16 %v3482, %v3481
        %v3557 = vpack.c.b16 %v3484, %v3483
        %v3558 = vpack.c.b16 %v3486, %v3485
        %v3559 = vpack.c.b16 %v3488, %v3487
        %v3560 = vpack.c.b16 %v3490, %v3489
        %v3561 = vpack.c.b16 %v3492, %v3491
        %v3562 = vpack.c.b16 %v3494, %v3493
        %v3563 = vpack.c.b16 %v3496, %v3495
        %v3564 = vpack.c.b16 %v3498, %v3497
        %v3565 = vpack.c.b16 %v3500, %v3499
        %v3566 = vpack.c.b16 %v3502, %v3501
        %v3567 = vpack.c.b16 %v3504, %v3503
        %v3568 = vpack.c.b16 %v3506, %v3505
        %v3569 = vpack.c.b16 %v3508, %v3507
        %v3570 = vpack.c.b16 %v3510, %v3509
        %v3571 = vpack.c.b16 %v3512, %v3511
        %v3572 = vpack.c.b16 %v3514, %v3513
        %v3573 = vpack.c.b16 %v3516, %v3515
        %v3574 = vpack.c.b16 %v3518, %v3517
        %v3575 = vpack.c.b16 %v3520, %v3519
        %v3576 = vpack.c.b16 %v3522, %v3521
        %v3577 = vpack.c.b16 %v3524, %v3523
        %v3578 = vpack.c.b16 %v3525, %v3525
        %vm3631 = vcmask 588800
        %v3633 = vsel %vm3631, %v3257, 0
        %v3636 = vsel %vm3631, %v3264, 0
        %v3639 = vsel %vm3631, %v3271, 0
        %v3642 = vsel %vm3631, %v3278, 0
        %v3645 = vsel %vm3631, %v3285, 0
        %v3648 = vsel %vm2211, %v3578, 0
        %3650 = vmatprep.subr.bf16.mxu0 0
        %3651 = vmatpush1.bf16.msra.mxu0 %v3533
        %3652 = vmatprep.subr.bf16.mxu0 0
        %3653 = vmatpush1.bf16.msra.mxu0 %v3532
        %3654 = vmatprep.subr.bf16.mxu0 0
        %3655 = vmatpush1.bf16.msra.mxu0 %v3531
        %3656 = vmatprep.subr.bf16.mxu0 0
        %3657 = vmatpush1.bf16.msra.mxu0 %v3530
        %3658 = vmatprep.subr.bf16.mxu0 0
        %3659 = vmatpush1.bf16.msra.mxu0 %v3529
        %3660 = vmatprep.subr.bf16.mxu0 0
        %3661 = vmatpush1.bf16.msra.mxu0 %v3528
        %3662 = vmatprep.subr.bf16.mxu0 0
        %3663 = vmatpush1.bf16.msra.mxu0 %v3527
        %3664 = vmatprep.subr.bf16.mxu0 0
        %3665 = vmatpush1.bf16.msra.mxu0 %v3526
        %3666 = vmatprep.subr.bf16.mxu0 0
        %3667 = vmatpush2.bf16.msra.mxu0 %v3541
        %3668 = vmatprep.subr.bf16.mxu0 0
        %3669 = vmatpush2.bf16.msra.mxu0 %v3540
        %3670 = vmatprep.subr.bf16.mxu0 0
        %3671 = vmatpush2.bf16.msra.mxu0 %v3539
        %3672 = vmatprep.subr.bf16.mxu0 0
        %3673 = vmatpush2.bf16.msra.mxu0 %v3538
        %3674 = vmatprep.subr.bf16.mxu0 0
        %3675 = vmatpush2.bf16.msra.mxu0 %v3537
        %3676 = vmatprep.subr.bf16.mxu0 0
        %3677 = vmatpush2.bf16.msra.mxu0 %v3536
        %3678 = vmatprep.subr.bf16.mxu0 0
        %3679 = vmatpush2.bf16.msra.mxu0 %v3535
        %3680 = vmatprep.subr.bf16.mxu0 0
        %3681 = vmatpush2.bf16.msra.mxu0 %v3534
        %3682 = vmatprep.mubr.bf16.mxu0 %v3252
        %3683 = vmatmul.mubr.bf16.gmra.mxu0 %v3251
        %v3684 = vpop.f32.mrf.mxu0
        %v3685 = vadd.f32 0.0, %v3684
        %v3686 = vpop.f32.mrf.mxu0
        %v3687 = vpop.f32.mrf.mxu0
        %v3688 = vadd.f32 0.0, %v3687
        %v3689 = vpop.f32.mrf.mxu0
        %3690 = vmatprep.mubr.bf16.mxu0 %v3259
        %3691 = vmatmul.mubr.bf16.gmra.mxu0 %v3258
        %v3692 = vpop.f32.mrf.mxu0
        %v3693 = vadd.f32 0.0, %v3692
        %v3694 = vpop.f32.mrf.mxu0
        %v3695 = vpop.f32.mrf.mxu0
        %v3696 = vadd.f32 0.0, %v3695
        %v3697 = vpop.f32.mrf.mxu0
        %3698 = vmatprep.mubr.bf16.mxu0 %v3266
        %3699 = vmatmul.mubr.bf16.gmra.mxu0 %v3265
        %v3700 = vpop.f32.mrf.mxu0
        %v3701 = vadd.f32 0.0, %v3700
        %v3702 = vpop.f32.mrf.mxu0
        %v3703 = vpop.f32.mrf.mxu0
        %v3704 = vadd.f32 0.0, %v3703
        %v3705 = vpop.f32.mrf.mxu0
        %3706 = vmatprep.mubr.bf16.mxu0 %v3273
        %3707 = vmatmul.mubr.bf16.gmra.mxu0 %v3272
        %v3708 = vpop.f32.mrf.mxu0
        %v3709 = vadd.f32 0.0, %v3708
        %v3710 = vpop.f32.mrf.mxu0
        %v3711 = vpop.f32.mrf.mxu0
        %v3712 = vadd.f32 0.0, %v3711
        %v3713 = vpop.f32.mrf.mxu0
        %3714 = vmatprep.mubr.bf16.mxu0 %v3280
        %3715 = vmatmul.mubr.bf16.gmra.mxu0 %v3279
        %v3716 = vpop.f32.mrf.mxu0
        %v3717 = vadd.f32 0.0, %v3716
        %v3718 = vpop.f32.mrf.mxu0
        %v3719 = vpop.f32.mrf.mxu0
        %v3720 = vadd.f32 0.0, %v3719
        %v3721 = vpop.f32.mrf.mxu0
        %3722 = vdwg.mxu0
        %3723 = vmatprep.subr.bf16.mxu0 0
        %3724 = vmatpush1.bf16.msra.mxu0 %v3549
        %3725 = vmatprep.subr.bf16.mxu0 0
        %3726 = vmatpush1.bf16.msra.mxu0 %v3548
        %3727 = vmatprep.subr.bf16.mxu0 0
        %3728 = vmatpush1.bf16.msra.mxu0 %v3547
        %3729 = vmatprep.subr.bf16.mxu0 0
        %3730 = vmatpush1.bf16.msra.mxu0 %v3546
        %3731 = vmatprep.subr.bf16.mxu0 0
        %3732 = vmatpush1.bf16.msra.mxu0 %v3545
        %3733 = vmatprep.subr.bf16.mxu0 0
        %3734 = vmatpush1.bf16.msra.mxu0 %v3544
        %3735 = vmatprep.subr.bf16.mxu0 0
        %3736 = vmatpush1.bf16.msra.mxu0 %v3543
        %3737 = vmatprep.subr.bf16.mxu0 0
        %3738 = vmatpush1.bf16.msra.mxu0 %v3542
        %3739 = vmatprep.subr.bf16.mxu0 0
        %3740 = vmatpush2.bf16.msra.mxu0 %v3557
        %3741 = vmatprep.subr.bf16.mxu0 0
        %3742 = vmatpush2.bf16.msra.mxu0 %v3556
        %3743 = vmatprep.subr.bf16.mxu0 0
        %3744 = vmatpush2.bf16.msra.mxu0 %v3555
        %3745 = vmatprep.subr.bf16.mxu0 0
        %3746 = vmatpush2.bf16.msra.mxu0 %v3554
        %3747 = vmatprep.subr.bf16.mxu0 0
        %3748 = vmatpush2.bf16.msra.mxu0 %v3553
        %3749 = vmatprep.subr.bf16.mxu0 0
        %3750 = vmatpush2.bf16.msra.mxu0 %v3552
        %3751 = vmatprep.subr.bf16.mxu0 0
        %3752 = vmatpush2.bf16.msra.mxu0 %v3551
        %3753 = vmatprep.subr.bf16.mxu0 0
        %3754 = vmatpush2.bf16.msra.mxu0 %v3550
        %3755 = vmatprep.mubr.bf16.mxu0 %v3254
        %3756 = vmatmul.mubr.bf16.gmra.mxu0 %v3253
        %v3757 = vpop.f32.mrf.mxu0
        %v3758 = vadd.f32 %v3685, %v3757
        %v3759 = vpop.f32.mrf.mxu0
        %v3760 = vpop.f32.mrf.mxu0
        %v3761 = vadd.f32 %v3688, %v3760
        %v3762 = vpop.f32.mrf.mxu0
        %3763 = vmatprep.mubr.bf16.mxu0 %v3261
        %3764 = vmatmul.mubr.bf16.gmra.mxu0 %v3260
        %v3765 = vpop.f32.mrf.mxu0
        %v3766 = vadd.f32 %v3693, %v3765
        %v3767 = vpop.f32.mrf.mxu0
        %v3768 = vpop.f32.mrf.mxu0
        %v3769 = vadd.f32 %v3696, %v3768
        %v3770 = vpop.f32.mrf.mxu0
        %3771 = vmatprep.mubr.bf16.mxu0 %v3268
        %3772 = vmatmul.mubr.bf16.gmra.mxu0 %v3267
        %v3773 = vpop.f32.mrf.mxu0
        %v3774 = vadd.f32 %v3701, %v3773
        %v3775 = vpop.f32.mrf.mxu0
        %v3776 = vpop.f32.mrf.mxu0
        %v3777 = vadd.f32 %v3704, %v3776
        %v3778 = vpop.f32.mrf.mxu0
        %3779 = vmatprep.mubr.bf16.mxu0 %v3275
        %3780 = vmatmul.mubr.bf16.gmra.mxu0 %v3274
        %v3781 = vpop.f32.mrf.mxu0
        %v3782 = vadd.f32 %v3709, %v3781
        %v3783 = vpop.f32.mrf.mxu0
        %v3784 = vpop.f32.mrf.mxu0
        %v3785 = vadd.f32 %v3712, %v3784
        %v3786 = vpop.f32.mrf.mxu0
        %3787 = vmatprep.mubr.bf16.mxu0 %v3282
        %3788 = vmatmul.mubr.bf16.gmra.mxu0 %v3281
        %v3789 = vpop.f32.mrf.mxu0
        %v3790 = vadd.f32 %v3717, %v3789
        %v3791 = vpop.f32.mrf.mxu0
        %v3792 = vpop.f32.mrf.mxu0
        %v3793 = vadd.f32 %v3720, %v3792
        %v3794 = vpop.f32.mrf.mxu0
        %3795 = vdwg.mxu0
        %3796 = vmatprep.subr.bf16.mxu0 0
        %3797 = vmatpush1.bf16.msra.mxu0 %v3565
        %3798 = vmatprep.subr.bf16.mxu0 0
        %3799 = vmatpush1.bf16.msra.mxu0 %v3564
        %3800 = vmatprep.subr.bf16.mxu0 0
        %3801 = vmatpush1.bf16.msra.mxu0 %v3563
        %3802 = vmatprep.subr.bf16.mxu0 0
        %3803 = vmatpush1.bf16.msra.mxu0 %v3562
        %3804 = vmatprep.subr.bf16.mxu0 0
        %3805 = vmatpush1.bf16.msra.mxu0 %v3561
        %3806 = vmatprep.subr.bf16.mxu0 0
        %3807 = vmatpush1.bf16.msra.mxu0 %v3560
        %3808 = vmatprep.subr.bf16.mxu0 0
        %3809 = vmatpush1.bf16.msra.mxu0 %v3559
        %3810 = vmatprep.subr.bf16.mxu0 0
        %3811 = vmatpush1.bf16.msra.mxu0 %v3558
        %3812 = vmatprep.subr.bf16.mxu0 0
        %3813 = vmatpush2.bf16.msra.mxu0 %v3573
        %3814 = vmatprep.subr.bf16.mxu0 0
        %3815 = vmatpush2.bf16.msra.mxu0 %v3572
        %3816 = vmatprep.subr.bf16.mxu0 0
        %3817 = vmatpush2.bf16.msra.mxu0 %v3571
        %3818 = vmatprep.subr.bf16.mxu0 0
        %3819 = vmatpush2.bf16.msra.mxu0 %v3570
        %3820 = vmatprep.subr.bf16.mxu0 0
        %3821 = vmatpush2.bf16.msra.mxu0 %v3569
        %3822 = vmatprep.subr.bf16.mxu0 0
        %3823 = vmatpush2.bf16.msra.mxu0 %v3568
        %3824 = vmatprep.subr.bf16.mxu0 0
        %3825 = vmatpush2.bf16.msra.mxu0 %v3567
        %3826 = vmatprep.subr.bf16.mxu0 0
        %3827 = vmatpush2.bf16.msra.mxu0 %v3566
        %3828 = vmatprep.mubr.bf16.mxu0 %v3256
        %3829 = vmatmul.mubr.bf16.gmra.mxu0 %v3255
        %v3830 = vpop.f32.mrf.mxu0
        %v3831 = vadd.f32 %v3758, %v3830
        %v3832 = vpop.f32.mrf.mxu0
        %v3833 = vpop.f32.mrf.mxu0
        %v3834 = vadd.f32 %v3761, %v3833
        %v3835 = vpop.f32.mrf.mxu0
        %3836 = vmatprep.mubr.bf16.mxu0 %v3263
        %3837 = vmatmul.mubr.bf16.gmra.mxu0 %v3262
        %v3838 = vpop.f32.mrf.mxu0
        %v3839 = vadd.f32 %v3766, %v3838
        %v3840 = vpop.f32.mrf.mxu0
        %v3841 = vpop.f32.mrf.mxu0
        %v3842 = vadd.f32 %v3769, %v3841
        %v3843 = vpop.f32.mrf.mxu0
        %3844 = vmatprep.mubr.bf16.mxu0 %v3270
        %3845 = vmatmul.mubr.bf16.gmra.mxu0 %v3269
        %v3846 = vpop.f32.mrf.mxu0
        %v3847 = vadd.f32 %v3774, %v3846
        %v3848 = vpop.f32.mrf.mxu0
        %v3849 = vpop.f32.mrf.mxu0
        %v3850 = vadd.f32 %v3777, %v3849
        %v3851 = vpop.f32.mrf.mxu0
        %3852 = vmatprep.mubr.bf16.mxu0 %v3277
        %3853 = vmatmul.mubr.bf16.gmra.mxu0 %v3276
        %v3854 = vpop.f32.mrf.mxu0
        %v3855 = vadd.f32 %v3782, %v3854
        %v3856 = vpop.f32.mrf.mxu0
        %v3857 = vpop.f32.mrf.mxu0
        %v3858 = vadd.f32 %v3785, %v3857
        %v3859 = vpop.f32.mrf.mxu0
        %3860 = vmatprep.mubr.bf16.mxu0 %v3284
        %3861 = vmatmul.mubr.bf16.gmra.mxu0 %v3283
        %v3862 = vpop.f32.mrf.mxu0
        %v3863 = vadd.f32 %v3790, %v3862
        %v3864 = vpop.f32.mrf.mxu0
        %v3865 = vpop.f32.mrf.mxu0
        %v3866 = vadd.f32 %v3793, %v3865
        %v3867 = vpop.f32.mrf.mxu0
        %3868 = vdwg.mxu0
        %3869 = vmatprep.subr.bf16.mxu0 0
        %3870 = vmatpush1.bf16.msra.mxu0 0
        %3871 = vmatprep.subr.bf16.mxu0 0
        %3872 = vmatpush1.bf16.msra.mxu0 0
        %3873 = vmatprep.subr.bf16.mxu0 0
        %3874 = vmatpush1.bf16.msra.mxu0 0
        %3875 = vmatprep.subr.bf16.mxu0 0
        %3876 = vmatpush1.bf16.msra.mxu0 %v3648
        %3877 = vmatprep.subr.bf16.mxu0 0
        %3878 = vmatpush1.bf16.msra.mxu0 %v3577
        %3879 = vmatprep.subr.bf16.mxu0 0
        %3880 = vmatpush1.bf16.msra.mxu0 %v3576
        %3881 = vmatprep.subr.bf16.mxu0 0
        %3882 = vmatpush1.bf16.msra.mxu0 %v3575
        %3883 = vmatprep.subr.bf16.mxu0 0
        %3884 = vmatpush1.bf16.msra.mxu0 %v3574
        %3885 = vmatprep.subr.bf16.mxu0 0
        %3886 = vmatpush2.bf16.msra.mxu0 0
        %3887 = vmatprep.subr.bf16.mxu0 0
        %3888 = vmatpush2.bf16.msra.mxu0 0
        %3889 = vmatprep.subr.bf16.mxu0 0
        %3890 = vmatpush2.bf16.msra.mxu0 0
        %3891 = vmatprep.subr.bf16.mxu0 0
        %3892 = vmatpush2.bf16.msra.mxu0 0
        %3893 = vmatprep.subr.bf16.mxu0 0
        %3894 = vmatpush2.bf16.msra.mxu0 0
        %3895 = vmatprep.subr.bf16.mxu0 0
        %3896 = vmatpush2.bf16.msra.mxu0 0
        %3897 = vmatprep.subr.bf16.mxu0 0
        %3898 = vmatpush2.bf16.msra.mxu0 0
        %3899 = vmatprep.subr.bf16.mxu0 0
        %3900 = vmatpush2.bf16.msra.mxu0 0
        %3901 = vmatprep.mubr.bf16.mxu0 0
        %3902 = vmatmul.mubr.bf16.gmra.mxu0 %v3633
        %v3903 = vpop.f32.mrf.mxu0
        %v3904 = vadd.f32 %v3831, %v3903
        %v3905 = vpop.f32.mrf.mxu0
        %v3906 = vpop.f32.mrf.mxu0
        %v3907 = vadd.f32 %v3834, %v3906
        %v3908 = vpop.f32.mrf.mxu0
        %3909 = vmatprep.mubr.bf16.mxu0 0
        %3910 = vmatmul.mubr.bf16.gmra.mxu0 %v3636
        %v3911 = vpop.f32.mrf.mxu0
        %v3912 = vadd.f32 %v3839, %v3911
        %v3913 = vpop.f32.mrf.mxu0
        %v3914 = vpop.f32.mrf.mxu0
        %v3915 = vadd.f32 %v3842, %v3914
        %v3916 = vpop.f32.mrf.mxu0
        %3917 = vmatprep.mubr.bf16.mxu0 0
        %3918 = vmatmul.mubr.bf16.gmra.mxu0 %v3639
        %v3919 = vpop.f32.mrf.mxu0
        %v3920 = vadd.f32 %v3847, %v3919
        %v3921 = vpop.f32.mrf.mxu0
        %v3922 = vpop.f32.mrf.mxu0
        %v3923 = vadd.f32 %v3850, %v3922
        %v3924 = vpop.f32.mrf.mxu0
        %3925 = vmatprep.mubr.bf16.mxu0 0
        %3926 = vmatmul.mubr.bf16.gmra.mxu0 %v3642
        %v3927 = vpop.f32.mrf.mxu0
        %v3928 = vadd.f32 %v3855, %v3927
        %v3929 = vpop.f32.mrf.mxu0
        %v3930 = vpop.f32.mrf.mxu0
        %v3931 = vadd.f32 %v3858, %v3930
        %v3932 = vpop.f32.mrf.mxu0
        %3933 = vmatprep.mubr.bf16.mxu0 0
        %3934 = vmatmul.mubr.bf16.gmra.mxu0 %v3645
        %v3935 = vpop.f32.mrf.mxu0
        %v3936 = vadd.f32 %v3863, %v3935
        %v3937 = vpop.f32.mrf.mxu0
        %v3938 = vpop.f32.mrf.mxu0
        %v3939 = vadd.f32 %v3866, %v3938
        %v3940 = vpop.f32.mrf.mxu0
        %3941 = vdwg.mxu0
        %3952 = vrot.lane.b32.xlu0 %v3904, 127
        %v3953 = vpop.permute.xlu0 %3952
        %3954 = vrot.lane.b32.xlu0 %v3907, 127
        %v3955 = vpop.permute.xlu0 %3954
        %3956 = vrot.lane.b32.xlu0 %v3912, 127
        %v3957 = vpop.permute.xlu0 %3956
        %3958 = vrot.lane.b32.xlu0 %v3915, 127
        %v3959 = vpop.permute.xlu0 %3958
        %3960 = vrot.lane.b32.xlu0 %v3920, 127
        %v3961 = vpop.permute.xlu0 %3960
        %3962 = vrot.lane.b32.xlu0 %v3923, 127
        %v3963 = vpop.permute.xlu0 %3962
        %3964 = vrot.lane.b32.xlu0 %v3928, 127
        %v3965 = vpop.permute.xlu0 %3964
        %3966 = vrot.lane.b32.xlu0 %v3931, 127
        %v3967 = vpop.permute.xlu0 %3966
        %3968 = vrot.lane.b32.xlu0 %v3936, 127
        %v3969 = vpop.permute.xlu0 %3968
        %3970 = vrot.lane.b32.xlu0 %v3939, 127
        %v3971 = vpop.permute.xlu0 %3970
        %v3982 = vmax.f32 %v3904, %v3953
        %v3983 = vmax.f32 %v3907, %v3955
        %v3984 = vmax.f32 %v3912, %v3957
        %v3985 = vmax.f32 %v3915, %v3959
        %v3986 = vmax.f32 %v3920, %v3961
        %v3987 = vmax.f32 %v3923, %v3963
        %v3988 = vmax.f32 %v3928, %v3965
        %v3989 = vmax.f32 %v3931, %v3967
        %v3990 = vmax.f32 %v3936, %v3969
        %v3991 = vmax.f32 %v3939, %v3971
        %v3992 = vld [vmem:[%s8] sm:$0xff]
        %v3993 = vld [vmem:[%s8 + $0x8] sm:$0xff]
        %v3994 = vld [vmem:[%s8 + $0x10] sm:$0xff]
        %v3995 = vld [vmem:[%s8 + $0x18] sm:$0xff]
        %v3996 = vld [vmem:[%s8 + $0x20] sm:$0xff]
        %v3997 = vld [vmem:[%s8 + $0x28] sm:$0xff]
        %v3998 = vld [vmem:[%s8 + $0x30] sm:$0xff]
        %v3999 = vld [vmem:[%s8 + $0x38] sm:$0xff]
        %v4000 = vld [vmem:[%s8 + $0x40] sm:$0xff]
        %v4001 = vld [vmem:[%s8 + $0x48] sm:$0xff]
        %v4002 = vadd.f32 %v3982, %v3992
        %v4003 = vadd.f32 %v3983, %v3993
        %v4004 = vadd.f32 %v3984, %v3994
        %v4005 = vadd.f32 %v3985, %v3995
        %v4006 = vadd.f32 %v3986, %v3996
        %v4007 = vadd.f32 %v3987, %v3997
        %v4008 = vadd.f32 %v3988, %v3998
        %v4009 = vadd.f32 %v3989, %v3999
        %v4010 = vadd.f32 %v3990, %v4000
        %v4011 = vadd.f32 %v3991, %v4001
        %v4012 = vmax.f32 %v4002, 0.0
        %v4013 = vmax.f32 %v4003, 0.0
        %v4014 = vmax.f32 %v4004, 0.0
        %v4015 = vmax.f32 %v4005, 0.0
        %v4016 = vmax.f32 %v4006, 0.0
        %v4017 = vmax.f32 %v4007, 0.0
        %v4018 = vmax.f32 %v4008, 0.0
        %v4019 = vmax.f32 %v4009, 0.0
        %v4020 = vmax.f32 %v4010, 0.0
        %v4021 = vmax.f32 %v4011, 0.0
        %v4022 = vpack.c.bf16 %v4013, %v4012
        %v4023 = vpack.c.bf16 %v4015, %v4014
        %v4024 = vpack.c.bf16 %v4017, %v4016
        %v4025 = vpack.c.bf16 %v4019, %v4018
        %v4026 = vpack.c.bf16 %v4021, %v4020
        %v4027 = vld [vmem:[#allocation17] sm:$0xff]
        %v4028 = vld [vmem:[#allocation17 + $0x8] sm:$0xff]
        %v4029 = vld [vmem:[#allocation17 + $0x10] sm:$0xff]
        %v4030 = vld [vmem:[#allocation17 + $0x18] sm:$0xff]
        %v4031 = vld [vmem:[#allocation17 + $0x20] sm:$0xff]
        %v4032 = vld [vmem:[#allocation17 + $0x28] sm:$0xff]
        %v4033 = vld [vmem:[#allocation17 + $0x30] sm:$0xff]
        %v4034 = vld [vmem:[#allocation17 + $0x38] sm:$0xff]
        %v4035 = vld [vmem:[#allocation17 + $0x40] sm:$0xff]
        %v4036 = vld [vmem:[#allocation17 + $0x48] sm:$0xff]
        %v4037 = vld [vmem:[#allocation17 + $0x50] sm:$0xff]
        %v4038 = vld [vmem:[#allocation17 + $0x58] sm:$0xff]
        %v4039 = vld [vmem:[#allocation17 + $0x60] sm:$0xff]
        %v4040 = vld [vmem:[#allocation17 + $0x68] sm:$0xff]
        %v4041 = vld [vmem:[#allocation17 + $0x70] sm:$0xff]
        %v4042 = vld [vmem:[#allocation17 + $0x78] sm:$0xff]
        %v4043 = vld [vmem:[#allocation17 + $0x80] sm:$0xff]
        %v4044 = vld [vmem:[#allocation17 + $0x88] sm:$0xff]
        %v4045 = vld [vmem:[#allocation17 + $0x90] sm:$0xff]
        %v4046 = vld [vmem:[#allocation17 + $0x98] sm:$0xff]
        %v4047 = vld [vmem:[#allocation19] sm:$0xf]
        %4048 = vxpose.xlu0.c.b16.start [1/8] %v4022, 128
        %4049 = vxpose.xlu0.c.b16.cont [2/8] %v4023, 128
        %4050 = vxpose.xlu0.c.b16.cont [3/8] %v4024, 128
        %4051 = vxpose.xlu0.c.b16.cont [4/8] %v4025, 128
        %4052 = vxpose.xlu0.c.b16.cont [5/8] %v4026, 128
        %4053 = vxpose.xlu0.c.b16.cont [6/8] 0, 128
        %4054 = vxpose.xlu0.c.b16.cont [7/8] 0, 128
        %4055 = vxpose.xlu0.c.b16.end [8/8] 0, 128
        %v4056 = vpop.trf.xlu0
        %v4057 = vpop.trf.xlu0
        %v4058 = vpop.trf.xlu0
        %v4059 = vpop.trf.xlu0
        %v4060 = vpop.trf.xlu0
        %v4061 = vpop.trf.xlu0
        %v4062 = vpop.trf.xlu0
        %v4063 = vpop.trf.xlu0
        %v4084 = vunpack.c.l.b16 %v4027
        %v4085 = vunpack.c.h.b16 %v4027
        %v4086 = vunpack.c.l.b16 %v4028
        %v4087 = vunpack.c.h.b16 %v4028
        %v4088 = vunpack.c.l.b16 %v4029
        %v4089 = vunpack.c.h.b16 %v4029
        %v4090 = vunpack.c.l.b16 %v4030
        %v4091 = vunpack.c.h.b16 %v4030
        %v4092 = vunpack.c.l.b16 %v4031
        %v4093 = vunpack.c.h.b16 %v4031
        %v4094 = vunpack.c.l.b16 %v4032
        %v4095 = vunpack.c.h.b16 %v4032
        %v4096 = vunpack.c.l.b16 %v4033
        %v4097 = vunpack.c.h.b16 %v4033
        %v4098 = vunpack.c.l.b16 %v4034
        %v4099 = vunpack.c.h.b16 %v4034
        %v4100 = vunpack.c.l.b16 %v4035
        %v4101 = vunpack.c.h.b16 %v4035
        %v4102 = vunpack.c.l.b16 %v4036
        %v4103 = vunpack.c.h.b16 %v4036
        %v4104 = vunpack.c.l.b16 %v4037
        %v4105 = vunpack.c.h.b16 %v4037
        %v4106 = vunpack.c.l.b16 %v4038
        %v4107 = vunpack.c.h.b16 %v4038
        %v4108 = vunpack.c.l.b16 %v4039
        %v4109 = vunpack.c.h.b16 %v4039
        %v4110 = vunpack.c.l.b16 %v4040
        %v4111 = vunpack.c.h.b16 %v4040
        %v4112 = vunpack.c.l.b16 %v4041
        %v4113 = vunpack.c.h.b16 %v4041
        %v4114 = vunpack.c.l.b16 %v4042
        %v4115 = vunpack.c.h.b16 %v4042
        %v4116 = vunpack.c.l.b16 %v4043
        %v4117 = vunpack.c.h.b16 %v4043
        %v4118 = vunpack.c.l.b16 %v4044
        %v4119 = vunpack.c.h.b16 %v4044
        %v4120 = vunpack.c.l.b16 %v4045
        %v4121 = vunpack.c.h.b16 %v4045
        %v4122 = vunpack.c.l.b16 %v4046
        %v4123 = vunpack.c.h.b16 %v4046
        %v4124 = vpack.c.b16 %v4088, %v4084
        %v4125 = vpack.c.b16 %v4089, %v4085
        %v4126 = vpack.c.b16 %v4090, %v4086
        %v4127 = vpack.c.b16 %v4091, %v4087
        %v4128 = vpack.c.b16 %v4096, %v4092
        %v4129 = vpack.c.b16 %v4097, %v4093
        %v4130 = vpack.c.b16 %v4098, %v4094
        %v4131 = vpack.c.b16 %v4099, %v4095
        %v4132 = vpack.c.b16 %v4104, %v4100
        %v4133 = vpack.c.b16 %v4105, %v4101
        %v4134 = vpack.c.b16 %v4106, %v4102
        %v4135 = vpack.c.b16 %v4107, %v4103
        %v4136 = vpack.c.b16 %v4112, %v4108
        %v4137 = vpack.c.b16 %v4113, %v4109
        %v4138 = vpack.c.b16 %v4114, %v4110
        %v4139 = vpack.c.b16 %v4115, %v4111
        %v4140 = vpack.c.b16 %v4120, %v4116
        %v4141 = vpack.c.b16 %v4121, %v4117
        %v4142 = vpack.c.b16 %v4122, %v4118
        %v4143 = vpack.c.b16 %v4123, %v4119
        %v4165 = vlaneseq
        %v4166 = vshrl.u32 %v4165, 7
        %v4167 = vsub.s32 0, %v4166
        %v4168 = vrot.slane %v4047, %v4167
        %v4169 = vlaneseq
        %v4170 = vshrl.u32 %v4169, 7
        %v4171 = vsub.s32 1, %v4170
        %v4172 = vrot.slane %v4047, %v4171
        %v4173 = vlaneseq
        %v4174 = vshrl.u32 %v4173, 7
        %v4175 = vsub.s32 2, %v4174
        %v4176 = vrot.slane %v4047, %v4175
        %v4177 = vlaneseq
        %v4178 = vshrl.u32 %v4177, 7
        %v4179 = vsub.s32 3, %v4178
        %v4180 = vrot.slane %v4047, %v4179
        %vm4185 = vcmask 654336
        %v4187 = vsel %vm4185, %v4056, 0
        %4189 = vmatprep.subr.bf16.mxu0 0
        %4190 = vmatpush1.bf16.msra.mxu0 0
        %4191 = vmatprep.subr.bf16.mxu0 0
        %4192 = vmatpush1.bf16.msra.mxu0 0
        %4193 = vmatprep.subr.bf16.mxu0 0
        %4194 = vmatpush1.bf16.msra.mxu0 0
        %4195 = vmatprep.subr.bf16.mxu0 %v4141
        %4196 = vmatpush1.bf16.msra.mxu0 %v4140
        %4197 = vmatprep.subr.bf16.mxu0 %v4137
        %4198 = vmatpush1.bf16.msra.mxu0 %v4136
        %4199 = vmatprep.subr.bf16.mxu0 %v4133
        %4200 = vmatpush1.bf16.msra.mxu0 %v4132
        %4201 = vmatprep.subr.bf16.mxu0 %v4129
        %4202 = vmatpush1.bf16.msra.mxu0 %v4128
        %4203 = vmatprep.subr.bf16.mxu0 %v4125
        %4204 = vmatpush1.bf16.msra.mxu0 %v4124
        %4205 = vmatprep.subr.bf16.mxu0 0
        %4206 = vmatpush2.bf16.msra.mxu0 0
        %4207 = vmatprep.subr.bf16.mxu0 0
        %4208 = vmatpush2.bf16.msra.mxu0 0
        %4209 = vmatprep.subr.bf16.mxu0 0
        %4210 = vmatpush2.bf16.msra.mxu0 0
        %4211 = vmatprep.subr.bf16.mxu0 0
        %4212 = vmatpush2.bf16.msra.mxu0 0
        %4213 = vmatprep.subr.bf16.mxu0 0
        %4214 = vmatpush2.bf16.msra.mxu0 0
        %4215 = vmatprep.subr.bf16.mxu0 0
        %4216 = vmatpush2.bf16.msra.mxu0 0
        %4217 = vmatprep.subr.bf16.mxu0 0
        %4218 = vmatpush2.bf16.msra.mxu0 0
        %4219 = vmatprep.subr.bf16.mxu0 0
        %4220 = vmatpush2.bf16.msra.mxu0 0
        %4221 = vmatprep.mubr.bf16.mxu0 0
        %4222 = vmatmul.mubr.bf16.gmra.mxu0 %v4187
        %v4223 = vpop.f32.mrf.mxu0
        %v4224 = vadd.f32 %v4168, %v4223
        %v4225 = vpop.f32.mrf.mxu0
        %v4226 = vadd.f32 %v4172, %v4225
        %v4227 = vpop.f32.mrf.mxu0
        %v4228 = vpop.f32.mrf.mxu0
        %4229 = vdwg.mxu0
        %4230 = vmatprep.subr.bf16.mxu0 0
        %4231 = vmatpush1.bf16.msra.mxu0 0
        %4232 = vmatprep.subr.bf16.mxu0 0
        %4233 = vmatpush1.bf16.msra.mxu0 0
        %4234 = vmatprep.subr.bf16.mxu0 0
        %4235 = vmatpush1.bf16.msra.mxu0 0
        %4236 = vmatprep.subr.bf16.mxu0 %v4143
        %4237 = vmatpush1.bf16.msra.mxu0 %v4142
        %4238 = vmatprep.subr.bf16.mxu0 %v4139
        %4239 = vmatpush1.bf16.msra.mxu0 %v4138
        %4240 = vmatprep.subr.bf16.mxu0 %v4135
        %4241 = vmatpush1.bf16.msra.mxu0 %v4134
        %4242 = vmatprep.subr.bf16.mxu0 %v4131
        %4243 = vmatpush1.bf16.msra.mxu0 %v4130
        %4244 = vmatprep.subr.bf16.mxu0 %v4127
        %4245 = vmatpush1.bf16.msra.mxu0 %v4126
        %4246 = vmatprep.subr.bf16.mxu0 0
        %4247 = vmatpush2.bf16.msra.mxu0 0
        %4248 = vmatprep.subr.bf16.mxu0 0
        %4249 = vmatpush2.bf16.msra.mxu0 0
        %4250 = vmatprep.subr.bf16.mxu0 0
        %4251 = vmatpush2.bf16.msra.mxu0 0
        %4252 = vmatprep.subr.bf16.mxu0 0
        %4253 = vmatpush2.bf16.msra.mxu0 0
        %4254 = vmatprep.subr.bf16.mxu0 0
        %4255 = vmatpush2.bf16.msra.mxu0 0
        %4256 = vmatprep.subr.bf16.mxu0 0
        %4257 = vmatpush2.bf16.msra.mxu0 0
        %4258 = vmatprep.subr.bf16.mxu0 0
        %4259 = vmatpush2.bf16.msra.mxu0 0
        %4260 = vmatprep.subr.bf16.mxu0 0
        %4261 = vmatpush2.bf16.msra.mxu0 0
        %4262 = vmatprep.mubr.bf16.mxu0 0
        %4263 = vmatmul.mubr.bf16.gmra.mxu0 %v4187
        %v4264 = vpop.f32.mrf.mxu0
        %v4265 = vadd.f32 %v4176, %v4264
        %v4266 = vpop.f32.mrf.mxu0
        %v4267 = vadd.f32 %v4180, %v4266
        %v4268 = vpop.f32.mrf.mxu0
        %v4269 = vpop.f32.mrf.mxu0
        %4270 = vdwg.mxu0
        %v4271 = vmax.f32 %v4224, 0.0
        %v4272 = vmax.f32 %v4226, 0.0
        %v4273 = vmax.f32 %v4265, 0.0
        %v4274 = vmax.f32 %v4267, 0.0
        %v4275 = vpack.c.bf16 %v4271, %v4271
        %v4276 = vpack.c.bf16 %v4272, %v4272
        %v4277 = vpack.c.bf16 %v4273, %v4273
        %v4278 = vpack.c.bf16 %v4274, %v4274
        %v4279 = vld [vmem:[%s11] sm:$0xff]
        %v4280 = vld [vmem:[%s11 + $0x8] sm:$0xff]
        %v4281 = vld [vmem:[%s11 + $0x10] sm:$0xff]
        %v4282 = vld [vmem:[%s11 + $0x18] sm:$0xff]
        %v4283 = vld [vmem:[%s11 + $0x20] sm:$0xff]
        %v4284 = vld [vmem:[%s11 + $0x28] sm:$0xff]
        %v4285 = vld [vmem:[%s11 + $0x30] sm:$0xff]
        %v4286 = vld [vmem:[%s11 + $0x38] sm:$0xff]
        %v4287 = vld [vmem:[%s11 + $0x40] sm:$0xff]
        %v4288 = vld [vmem:[%s11 + $0x48] sm:$0xff]
        %v4289 = vld [vmem:[%s11 + $0x50] sm:$0xff]
        %v4290 = vld [vmem:[%s11 + $0x58] sm:$0xff]
        %v4291 = vld [vmem:[%s11 + $0x60] sm:$0xff]
        %v4292 = vld [vmem:[%s11 + $0x68] sm:$0xff]
        %v4293 = vld [vmem:[%s11 + $0x70] sm:$0xff]
        %v4294 = vld [vmem:[%s11 + $0x78] sm:$0xff]
        %v4295 = vld [vmem:[%s11 + $0x80] sm:$0xff]
        %v4296 = vld [vmem:[%s11 + $0x88] sm:$0xff]
        %v4297 = vld [vmem:[%s11 + $0x90] sm:$0xff]
        %v4298 = vld [vmem:[%s11 + $0x98] sm:$0xff]
        %v4299 = vld [vmem:[%s11 + $0xa0] sm:$0xff]
        %v4300 = vld [vmem:[%s11 + $0xa8] sm:$0xff]
        %v4301 = vld [vmem:[%s11 + $0xb0] sm:$0xff]
        %v4302 = vld [vmem:[%s11 + $0xb8] sm:$0xff]
        %v4303 = vld [vmem:[%s11 + $0xc0] sm:$0xff]
        %v4304 = vld [vmem:[%s11 + $0xc8] sm:$0xff]
        %v4305 = vld [vmem:[%s11 + $0xd0] sm:$0xff]
        %v4306 = vld [vmem:[%s11 + $0xd8] sm:$0xff]
        %v4307 = vld [vmem:[%s11 + $0xe0] sm:$0xff]
        %v4308 = vld [vmem:[%s11 + $0xe8] sm:$0xff]
        %v4309 = vld [vmem:[%s11 + $0xf0] sm:$0xff]
        %v4310 = vld [vmem:[%s11 + $0xf8] sm:$0xff]
        %v4311 = vld [vmem:[%s11 + $0x100] sm:$0xff]
        %v4312 = vld [vmem:[%s11 + $0x108] sm:$0xff]
        %v4313 = vld [vmem:[%s11 + $0x110] sm:$0xff]
        %v4314 = vld [vmem:[%s11 + $0x118] sm:$0xff]
        %v4315 = vld [vmem:[%s11 + $0x120] sm:$0xff]
        %v4316 = vld [vmem:[%s11 + $0x128] sm:$0xff]
        %v4317 = vld [vmem:[%s11 + $0x130] sm:$0xff]
        %v4318 = vld [vmem:[%s11 + $0x138] sm:$0xff]
        %v4319 = vld [vmem:[%s11 + $0x140] sm:$0xff]
        %v4320 = vld [vmem:[%s11 + $0x148] sm:$0xff]
        %v4321 = vld [vmem:[%s11 + $0x150] sm:$0xff]
        %v4322 = vld [vmem:[%s11 + $0x158] sm:$0xff]
        %v4323 = vld [vmem:[%s11 + $0x160] sm:$0xff]
        %v4324 = vld [vmem:[%s11 + $0x168] sm:$0xff]
        %v4325 = vld [vmem:[%s11 + $0x170] sm:$0xff]
        %v4326 = vld [vmem:[%s11 + $0x178] sm:$0xff]
        %v4327 = vld [vmem:[%s11 + $0x180] sm:$0xff]
        %v4328 = vld [vmem:[%s11 + $0x188] sm:$0xff]
        %v4329 = vld [vmem:[%s11 + $0x190] sm:$0xff]
        %v4330 = vld [vmem:[%s11 + $0x198] sm:$0xff]
        %v4331 = vld [vmem:[%s11 + $0x1a0] sm:$0xff]
        %v4332 = vld [vmem:[%s11 + $0x1a8] sm:$0xff]
        %v4333 = vld [vmem:[%s11 + $0x1b0] sm:$0xff]
        %v4334 = vld [vmem:[%s11 + $0x1b8] sm:$0xff]
        %v4335 = vld [vmem:[%s11 + $0x1c0] sm:$0xff]
        %v4336 = vld [vmem:[%s11 + $0x1c8] sm:$0xff]
        %v4337 = vld [vmem:[%s11 + $0x1d0] sm:$0xff]
        %v4338 = vld [vmem:[%s11 + $0x1d8] sm:$0xff]
        %v4339 = vld [vmem:[%s11 + $0x1e0] sm:$0xff]
        %v4340 = vld [vmem:[%s11 + $0x1e8] sm:$0xff]
        %v4341 = vld [vmem:[%s11 + $0x1f0] sm:$0xff]
        %v4342 = vld [vmem:[%s11 + $0x1f8] sm:$0xff]
        %v4343 = vld [vmem:[#allocation20] sm:$0x3]
        %v4408 = vunpack.c.l.b16 %v4279
        %v4409 = vunpack.c.h.b16 %v4279
        %v4410 = vunpack.c.l.b16 %v4280
        %v4411 = vunpack.c.h.b16 %v4280
        %v4412 = vunpack.c.l.b16 %v4281
        %v4413 = vunpack.c.h.b16 %v4281
        %v4414 = vunpack.c.l.b16 %v4282
        %v4415 = vunpack.c.h.b16 %v4282
        %v4416 = vunpack.c.l.b16 %v4283
        %v4417 = vunpack.c.h.b16 %v4283
        %v4418 = vunpack.c.l.b16 %v4284
        %v4419 = vunpack.c.h.b16 %v4284
        %v4420 = vunpack.c.l.b16 %v4285
        %v4421 = vunpack.c.h.b16 %v4285
        %v4422 = vunpack.c.l.b16 %v4286
        %v4423 = vunpack.c.h.b16 %v4286
        %v4424 = vunpack.c.l.b16 %v4287
        %v4425 = vunpack.c.h.b16 %v4287
        %v4426 = vunpack.c.l.b16 %v4288
        %v4427 = vunpack.c.h.b16 %v4288
        %v4428 = vunpack.c.l.b16 %v4289
        %v4429 = vunpack.c.h.b16 %v4289
        %v4430 = vunpack.c.l.b16 %v4290
        %v4431 = vunpack.c.h.b16 %v4290
        %v4432 = vunpack.c.l.b16 %v4291
        %v4433 = vunpack.c.h.b16 %v4291
        %v4434 = vunpack.c.l.b16 %v4292
        %v4435 = vunpack.c.h.b16 %v4292
        %v4436 = vunpack.c.l.b16 %v4293
        %v4437 = vunpack.c.h.b16 %v4293
        %v4438 = vunpack.c.l.b16 %v4294
        %v4439 = vunpack.c.h.b16 %v4294
        %v4440 = vunpack.c.l.b16 %v4295
        %v4441 = vunpack.c.h.b16 %v4295
        %v4442 = vunpack.c.l.b16 %v4296
        %v4443 = vunpack.c.h.b16 %v4296
        %v4444 = vunpack.c.l.b16 %v4297
        %v4445 = vunpack.c.h.b16 %v4297
        %v4446 = vunpack.c.l.b16 %v4298
        %v4447 = vunpack.c.h.b16 %v4298
        %v4448 = vunpack.c.l.b16 %v4299
        %v4449 = vunpack.c.h.b16 %v4299
        %v4450 = vunpack.c.l.b16 %v4300
        %v4451 = vunpack.c.h.b16 %v4300
        %v4452 = vunpack.c.l.b16 %v4301
        %v4453 = vunpack.c.h.b16 %v4301
        %v4454 = vunpack.c.l.b16 %v4302
        %v4455 = vunpack.c.h.b16 %v4302
        %v4456 = vunpack.c.l.b16 %v4303
        %v4457 = vunpack.c.h.b16 %v4303
        %v4458 = vunpack.c.l.b16 %v4304
        %v4459 = vunpack.c.h.b16 %v4304
        %v4460 = vunpack.c.l.b16 %v4305
        %v4461 = vunpack.c.h.b16 %v4305
        %v4462 = vunpack.c.l.b16 %v4306
        %v4463 = vunpack.c.h.b16 %v4306
        %v4464 = vunpack.c.l.b16 %v4307
        %v4465 = vunpack.c.h.b16 %v4307
        %v4466 = vunpack.c.l.b16 %v4308
        %v4467 = vunpack.c.h.b16 %v4308
        %v4468 = vunpack.c.l.b16 %v4309
        %v4469 = vunpack.c.h.b16 %v4309
        %v4470 = vunpack.c.l.b16 %v4310
        %v4471 = vunpack.c.h.b16 %v4310
        %v4472 = vunpack.c.l.b16 %v4311
        %v4473 = vunpack.c.h.b16 %v4311
        %v4474 = vunpack.c.l.b16 %v4312
        %v4475 = vunpack.c.h.b16 %v4312
        %v4476 = vunpack.c.l.b16 %v4313
        %v4477 = vunpack.c.h.b16 %v4313
        %v4478 = vunpack.c.l.b16 %v4314
        %v4479 = vunpack.c.h.b16 %v4314
        %v4480 = vunpack.c.l.b16 %v4315
        %v4481 = vunpack.c.h.b16 %v4315
        %v4482 = vunpack.c.l.b16 %v4316
        %v4483 = vunpack.c.h.b16 %v4316
        %v4484 = vunpack.c.l.b16 %v4317
        %v4485 = vunpack.c.h.b16 %v4317
        %v4486 = vunpack.c.l.b16 %v4318
        %v4487 = vunpack.c.h.b16 %v4318
        %v4488 = vunpack.c.l.b16 %v4319
        %v4489 = vunpack.c.h.b16 %v4319
        %v4490 = vunpack.c.l.b16 %v4320
        %v4491 = vunpack.c.h.b16 %v4320
        %v4492 = vunpack.c.l.b16 %v4321
        %v4493 = vunpack.c.h.b16 %v4321
        %v4494 = vunpack.c.l.b16 %v4322
        %v4495 = vunpack.c.h.b16 %v4322
        %v4496 = vunpack.c.l.b16 %v4323
        %v4497 = vunpack.c.h.b16 %v4323
        %v4498 = vunpack.c.l.b16 %v4324
        %v4499 = vunpack.c.h.b16 %v4324
        %v4500 = vunpack.c.l.b16 %v4325
        %v4501 = vunpack.c.h.b16 %v4325
        %v4502 = vunpack.c.l.b16 %v4326
        %v4503 = vunpack.c.h.b16 %v4326
        %v4504 = vunpack.c.l.b16 %v4327
        %v4505 = vunpack.c.h.b16 %v4327
        %v4506 = vunpack.c.l.b16 %v4328
        %v4507 = vunpack.c.h.b16 %v4328
        %v4508 = vunpack.c.l.b16 %v4329
        %v4509 = vunpack.c.h.b16 %v4329
        %v4510 = vunpack.c.l.b16 %v4330
        %v4511 = vunpack.c.h.b16 %v4330
        %v4512 = vunpack.c.l.b16 %v4331
        %v4513 = vunpack.c.h.b16 %v4331
        %v4514 = vunpack.c.l.b16 %v4332
        %v4515 = vunpack.c.h.b16 %v4332
        %v4516 = vunpack.c.l.b16 %v4333
        %v4517 = vunpack.c.h.b16 %v4333
        %v4518 = vunpack.c.l.b16 %v4334
        %v4519 = vunpack.c.h.b16 %v4334
        %v4520 = vunpack.c.l.b16 %v4335
        %v4521 = vunpack.c.h.b16 %v4335
        %v4522 = vunpack.c.l.b16 %v4336
        %v4523 = vunpack.c.h.b16 %v4336
        %v4524 = vunpack.c.l.b16 %v4337
        %v4525 = vunpack.c.h.b16 %v4337
        %v4526 = vunpack.c.l.b16 %v4338
        %v4527 = vunpack.c.h.b16 %v4338
        %v4528 = vunpack.c.l.b16 %v4339
        %v4529 = vunpack.c.h.b16 %v4339
        %v4530 = vunpack.c.l.b16 %v4340
        %v4531 = vunpack.c.h.b16 %v4340
        %v4532 = vunpack.c.l.b16 %v4341
        %v4533 = vunpack.c.h.b16 %v4341
        %v4534 = vunpack.c.l.b16 %v4342
        %v4535 = vunpack.c.h.b16 %v4342
        %v4536 = vpack.c.b16 %v4410, %v4408
        %v4537 = vpack.c.b16 %v4411, %v4409
        %v4538 = vpack.c.b16 %v4414, %v4412
        %v4539 = vpack.c.b16 %v4415, %v4413
        %v4540 = vpack.c.b16 %v4418, %v4416
        %v4541 = vpack.c.b16 %v4419, %v4417
        %v4542 = vpack.c.b16 %v4422, %v4420
        %v4543 = vpack.c.b16 %v4423, %v4421
        %v4544 = vpack.c.b16 %v4426, %v4424
        %v4545 = vpack.c.b16 %v4427, %v4425
        %v4546 = vpack.c.b16 %v4430, %v4428
        %v4547 = vpack.c.b16 %v4431, %v4429
        %v4548 = vpack.c.b16 %v4434, %v4432
        %v4549 = vpack.c.b16 %v4435, %v4433
        %v4550 = vpack.c.b16 %v4438, %v4436
        %v4551 = vpack.c.b16 %v4439, %v4437
        %v4552 = vpack.c.b16 %v4442, %v4440
        %v4553 = vpack.c.b16 %v4443, %v4441
        %v4554 = vpack.c.b16 %v4446, %v4444
        %v4555 = vpack.c.b16 %v4447, %v4445
        %v4556 = vpack.c.b16 %v4450, %v4448
        %v4557 = vpack.c.b16 %v4451, %v4449
        %v4558 = vpack.c.b16 %v4454, %v4452
        %v4559 = vpack.c.b16 %v4455, %v4453
        %v4560 = vpack.c.b16 %v4458, %v4456
        %v4561 = vpack.c.b16 %v4459, %v4457
        %v4562 = vpack.c.b16 %v4462, %v4460
        %v4563 = vpack.c.b16 %v4463, %v4461
        %v4564 = vpack.c.b16 %v4466, %v4464
        %v4565 = vpack.c.b16 %v4467, %v4465
        %v4566 = vpack.c.b16 %v4470, %v4468
        %v4567 = vpack.c.b16 %v4471, %v4469
        %v4568 = vpack.c.b16 %v4474, %v4472
        %v4569 = vpack.c.b16 %v4475, %v4473
        %v4570 = vpack.c.b16 %v4478, %v4476
        %v4571 = vpack.c.b16 %v4479, %v4477
        %v4572 = vpack.c.b16 %v4482, %v4480
        %v4573 = vpack.c.b16 %v4483, %v4481
        %v4574 = vpack.c.b16 %v4486, %v4484
        %v4575 = vpack.c.b16 %v4487, %v4485
        %v4576 = vpack.c.b16 %v4490, %v4488
        %v4577 = vpack.c.b16 %v4491, %v4489
        %v4578 = vpack.c.b16 %v4494, %v4492
        %v4579 = vpack.c.b16 %v4495, %v4493
        %v4580 = vpack.c.b16 %v4498, %v4496
        %v4581 = vpack.c.b16 %v4499, %v4497
        %v4582 = vpack.c.b16 %v4502, %v4500
        %v4583 = vpack.c.b16 %v4503, %v4501
        %v4584 = vpack.c.b16 %v4506, %v4504
        %v4585 = vpack.c.b16 %v4507, %v4505
        %v4586 = vpack.c.b16 %v4510, %v4508
        %v4587 = vpack.c.b16 %v4511, %v4509
        %v4588 = vpack.c.b16 %v4514, %v4512
        %v4589 = vpack.c.b16 %v4515, %v4513
        %v4590 = vpack.c.b16 %v4518, %v4516
        %v4591 = vpack.c.b16 %v4519, %v4517
        %v4592 = vpack.c.b16 %v4522, %v4520
        %v4593 = vpack.c.b16 %v4523, %v4521
        %v4594 = vpack.c.b16 %v4526, %v4524
        %v4595 = vpack.c.b16 %v4527, %v4525
        %v4596 = vpack.c.b16 %v4530, %v4528
        %v4597 = vpack.c.b16 %v4531, %v4529
        %v4598 = vpack.c.b16 %v4534, %v4532
        %v4599 = vpack.c.b16 %v4535, %v4533
        %v4665 = vlaneseq
        %v4666 = vshrl.u32 %v4665, 7
        %v4667 = vsub.s32 0, %v4666
        %v4668 = vrot.slane %v4343, %v4667
        %v4669 = vlaneseq
        %v4670 = vshrl.u32 %v4669, 7
        %v4671 = vsub.s32 1, %v4670
        %v4672 = vrot.slane %v4343, %v4671
        %4675 = vmatprep.subr.bf16.mxu0 %v4551
        %4676 = vmatpush1.bf16.msra.mxu0 %v4550
        %4677 = vmatprep.subr.bf16.mxu0 %v4549
        %4678 = vmatpush1.bf16.msra.mxu0 %v4548
        %4679 = vmatprep.subr.bf16.mxu0 %v4547
        %4680 = vmatpush1.bf16.msra.mxu0 %v4546
        %4681 = vmatprep.subr.bf16.mxu0 %v4545
        %4682 = vmatpush1.bf16.msra.mxu0 %v4544
        %4683 = vmatprep.subr.bf16.mxu0 %v4543
        %4684 = vmatpush1.bf16.msra.mxu0 %v4542
        %4685 = vmatprep.subr.bf16.mxu0 %v4541
        %4686 = vmatpush1.bf16.msra.mxu0 %v4540
        %4687 = vmatprep.subr.bf16.mxu0 %v4539
        %4688 = vmatpush1.bf16.msra.mxu0 %v4538
        %4689 = vmatprep.subr.bf16.mxu0 %v4537
        %4690 = vmatpush1.bf16.msra.mxu0 %v4536
        %4691 = vmatprep.subr.bf16.mxu0 %v4567
        %4692 = vmatpush2.bf16.msra.mxu0 %v4566
        %4693 = vmatprep.subr.bf16.mxu0 %v4565
        %4694 = vmatpush2.bf16.msra.mxu0 %v4564
        %4695 = vmatprep.subr.bf16.mxu0 %v4563
        %4696 = vmatpush2.bf16.msra.mxu0 %v4562
        %4697 = vmatprep.subr.bf16.mxu0 %v4561
        %4698 = vmatpush2.bf16.msra.mxu0 %v4560
        %4699 = vmatprep.subr.bf16.mxu0 %v4559
        %4700 = vmatpush2.bf16.msra.mxu0 %v4558
        %4701 = vmatprep.subr.bf16.mxu0 %v4557
        %4702 = vmatpush2.bf16.msra.mxu0 %v4556
        %4703 = vmatprep.subr.bf16.mxu0 %v4555
        %4704 = vmatpush2.bf16.msra.mxu0 %v4554
        %4705 = vmatprep.subr.bf16.mxu0 %v4553
        %4706 = vmatpush2.bf16.msra.mxu0 %v4552
        %4707 = vmatprep.mubr.bf16.mxu0 %v4276
        %4708 = vmatmul.mubr.bf16.gmra.mxu0 %v4275
        %v4709 = vpop.f32.mrf.mxu0
        %v4710 = vadd.f32 %v4668, %v4709
        %v4711 = vpop.f32.mrf.mxu0
        %v4712 = vadd.f32 %v4672, %v4711
        %v4713 = vpop.f32.mrf.mxu0
        %v4714 = vpop.f32.mrf.mxu0
        %4715 = vdwg.mxu0
        %4716 = vmatprep.subr.bf16.mxu0 %v4583
        %4717 = vmatpush1.bf16.msra.mxu0 %v4582
        %4718 = vmatprep.subr.bf16.mxu0 %v4581
        %4719 = vmatpush1.bf16.msra.mxu0 %v4580
        %4720 = vmatprep.subr.bf16.mxu0 %v4579
        %4721 = vmatpush1.bf16.msra.mxu0 %v4578
        %4722 = vmatprep.subr.bf16.mxu0 %v4577
        %4723 = vmatpush1.bf16.msra.mxu0 %v4576
        %4724 = vmatprep.subr.bf16.mxu0 %v4575
        %4725 = vmatpush1.bf16.msra.mxu0 %v4574
        %4726 = vmatprep.subr.bf16.mxu0 %v4573
        %4727 = vmatpush1.bf16.msra.mxu0 %v4572
        %4728 = vmatprep.subr.bf16.mxu0 %v4571
        %4729 = vmatpush1.bf16.msra.mxu0 %v4570
        %4730 = vmatprep.subr.bf16.mxu0 %v4569
        %4731 = vmatpush1.bf16.msra.mxu0 %v4568
        %4732 = vmatprep.subr.bf16.mxu0 %v4599
        %4733 = vmatpush2.bf16.msra.mxu0 %v4598
        %4734 = vmatprep.subr.bf16.mxu0 %v4597
        %4735 = vmatpush2.bf16.msra.mxu0 %v4596
        %4736 = vmatprep.subr.bf16.mxu0 %v4595
        %4737 = vmatpush2.bf16.msra.mxu0 %v4594
        %4738 = vmatprep.subr.bf16.mxu0 %v4593
        %4739 = vmatpush2.bf16.msra.mxu0 %v4592
        %4740 = vmatprep.subr.bf16.mxu0 %v4591
        %4741 = vmatpush2.bf16.msra.mxu0 %v4590
        %4742 = vmatprep.subr.bf16.mxu0 %v4589
        %4743 = vmatpush2.bf16.msra.mxu0 %v4588
        %4744 = vmatprep.subr.bf16.mxu0 %v4587
        %4745 = vmatpush2.bf16.msra.mxu0 %v4586
        %4746 = vmatprep.subr.bf16.mxu0 %v4585
        %4747 = vmatpush2.bf16.msra.mxu0 %v4584
        %4748 = vmatprep.mubr.bf16.mxu0 %v4278
        %4749 = vmatmul.mubr.bf16.gmra.mxu0 %v4277
        %v4750 = vpop.f32.mrf.mxu0
        %v4751 = vadd.f32 %v4710, %v4750
        %v4752 = vpop.f32.mrf.mxu0
        %v4753 = vadd.f32 %v4712, %v4752
        %v4754 = vpop.f32.mrf.mxu0
        %v4755 = vpop.f32.mrf.mxu0
        %4756 = vdwg.mxu0
        %v4757 = vmax.f32 %v4751, 0.0
        %v4758 = vmax.f32 %v4753, 0.0
        %v4759 = vpack.c.bf16 %v4757, %v4757
        %v4760 = vpack.c.bf16 %v4758, %v4758
        %v4761 = vld [vmem:[#allocation22] sm:$0xf]
        %v4762 = vld [vmem:[#allocation22 + $0x4] sm:$0xf]
        %v4763 = vld [vmem:[#allocation22 + $0x8] sm:$0xf]
        %v4764 = vld [vmem:[#allocation22 + $0xc] sm:$0xf]
        %v4765 = vld [vmem:[#allocation22 + $0x10] sm:$0xf]
        %v4766 = vld [vmem:[#allocation22 + $0x14] sm:$0xf]
        %v4767 = vld [vmem:[#allocation22 + $0x18] sm:$0xf]
        %v4768 = vld [vmem:[#allocation22 + $0x1c] sm:$0xf]
        %v4769 = vld [vmem:[#allocation22 + $0x20] sm:$0xf]
        %v4770 = vld [vmem:[#allocation22 + $0x24] sm:$0xf]
        %v4771 = vld [vmem:[#allocation22 + $0x28] sm:$0xf]
        %v4772 = vld [vmem:[#allocation22 + $0x2c] sm:$0xf]
        %v4773 = vld [vmem:[#allocation22 + $0x30] sm:$0xf]
        %v4774 = vld [vmem:[#allocation22 + $0x34] sm:$0xf]
        %v4775 = vld [vmem:[#allocation22 + $0x38] sm:$0xf]
        %v4776 = vld [vmem:[#allocation22 + $0x3c] sm:$0xf]
        %v4777 = vld [vmem:[#allocation22 + $0x40] sm:$0xf]
        %v4778 = vld [vmem:[#allocation22 + $0x44] sm:$0xf]
        %v4779 = vld [vmem:[#allocation22 + $0x48] sm:$0xf]
        %v4780 = vld [vmem:[#allocation22 + $0x4c] sm:$0xf]
        %v4781 = vld [vmem:[#allocation22 + $0x50] sm:$0xf]
        %v4782 = vld [vmem:[#allocation22 + $0x54] sm:$0xf]
        %v4783 = vld [vmem:[#allocation22 + $0x58] sm:$0xf]
        %v4784 = vld [vmem:[#allocation22 + $0x5c] sm:$0xf]
        %v4785 = vld [vmem:[#allocation22 + $0x60] sm:$0xf]
        %v4786 = vld [vmem:[#allocation22 + $0x64] sm:$0xf]
        %v4787 = vld [vmem:[#allocation22 + $0x68] sm:$0xf]
        %v4788 = vld [vmem:[#allocation22 + $0x6c] sm:$0xf]
        %v4789 = vld [vmem:[#allocation22 + $0x70] sm:$0xf]
        %v4790 = vld [vmem:[#allocation22 + $0x74] sm:$0xf]
        %v4791 = vld [vmem:[#allocation22 + $0x78] sm:$0xf]
        %v4792 = vld [vmem:[#allocation22 + $0x7c] sm:$0xf]
        %v4793 = vld [vmem:[#allocation23] sm:$0x1]
        %v4826 = vunpack.c.l.b16 %v4761
        %v4827 = vunpack.c.l.b16 %v4762
        %v4828 = vunpack.c.l.b16 %v4763
        %v4829 = vunpack.c.l.b16 %v4764
        %v4830 = vunpack.c.l.b16 %v4765
        %v4831 = vunpack.c.l.b16 %v4766
        %v4832 = vunpack.c.l.b16 %v4767
        %v4833 = vunpack.c.l.b16 %v4768
        %v4834 = vunpack.c.l.b16 %v4769
        %v4835 = vunpack.c.l.b16 %v4770
        %v4836 = vunpack.c.l.b16 %v4771
        %v4837 = vunpack.c.l.b16 %v4772
        %v4838 = vunpack.c.l.b16 %v4773
        %v4839 = vunpack.c.l.b16 %v4774
        %v4840 = vunpack.c.l.b16 %v4775
        %v4841 = vunpack.c.l.b16 %v4776
        %v4842 = vunpack.c.l.b16 %v4777
        %v4843 = vunpack.c.l.b16 %v4778
        %v4844 = vunpack.c.l.b16 %v4779
        %v4845 = vunpack.c.l.b16 %v4780
        %v4846 = vunpack.c.l.b16 %v4781
        %v4847 = vunpack.c.l.b16 %v4782
        %v4848 = vunpack.c.l.b16 %v4783
        %v4849 = vunpack.c.l.b16 %v4784
        %v4850 = vunpack.c.l.b16 %v4785
        %v4851 = vunpack.c.l.b16 %v4786
        %v4852 = vunpack.c.l.b16 %v4787
        %v4853 = vunpack.c.l.b16 %v4788
        %v4854 = vunpack.c.l.b16 %v4789
        %v4855 = vunpack.c.l.b16 %v4790
        %v4856 = vunpack.c.l.b16 %v4791
        %v4857 = vunpack.c.l.b16 %v4792
        %v4858 = vpack.c.b16 %v4827, %v4826
        %v4859 = vpack.c.b16 %v4829, %v4828
        %v4860 = vpack.c.b16 %v4831, %v4830
        %v4861 = vpack.c.b16 %v4833, %v4832
        %v4862 = vpack.c.b16 %v4835, %v4834
        %v4863 = vpack.c.b16 %v4837, %v4836
        %v4864 = vpack.c.b16 %v4839, %v4838
        %v4865 = vpack.c.b16 %v4841, %v4840
        %v4866 = vpack.c.b16 %v4843, %v4842
        %v4867 = vpack.c.b16 %v4845, %v4844
        %v4868 = vpack.c.b16 %v4847, %v4846
        %v4869 = vpack.c.b16 %v4849, %v4848
        %v4870 = vpack.c.b16 %v4851, %v4850
        %v4871 = vpack.c.b16 %v4853, %v4852
        %v4872 = vpack.c.b16 %v4855, %v4854
        %v4873 = vpack.c.b16 %v4857, %v4856
        %4890 = vmatprep.subr.bf16.mxu0 0
        %4891 = vmatpush1.bf16.msra.mxu0 %v4865
        %4892 = vmatprep.subr.bf16.mxu0 0
        %4893 = vmatpush1.bf16.msra.mxu0 %v4864
        %4894 = vmatprep.subr.bf16.mxu0 0
        %4895 = vmatpush1.bf16.msra.mxu0 %v4863
        %4896 = vmatprep.subr.bf16.mxu0 0
        %4897 = vmatpush1.bf16.msra.mxu0 %v4862
        %4898 = vmatprep.subr.bf16.mxu0 0
        %4899 = vmatpush1.bf16.msra.mxu0 %v4861
        %4900 = vmatprep.subr.bf16.mxu0 0
        %4901 = vmatpush1.bf16.msra.mxu0 %v4860
        %4902 = vmatprep.subr.bf16.mxu0 0
        %4903 = vmatpush1.bf16.msra.mxu0 %v4859
        %4904 = vmatprep.subr.bf16.mxu0 0
        %4905 = vmatpush1.bf16.msra.mxu0 %v4858
        %4906 = vmatprep.subr.bf16.mxu0 0
        %4907 = vmatpush2.bf16.msra.mxu0 %v4873
        %4908 = vmatprep.subr.bf16.mxu0 0
        %4909 = vmatpush2.bf16.msra.mxu0 %v4872
        %4910 = vmatprep.subr.bf16.mxu0 0
        %4911 = vmatpush2.bf16.msra.mxu0 %v4871
        %4912 = vmatprep.subr.bf16.mxu0 0
        %4913 = vmatpush2.bf16.msra.mxu0 %v4870
        %4914 = vmatprep.subr.bf16.mxu0 0
        %4915 = vmatpush2.bf16.msra.mxu0 %v4869
        %4916 = vmatprep.subr.bf16.mxu0 0
        %4917 = vmatpush2.bf16.msra.mxu0 %v4868
        %4918 = vmatprep.subr.bf16.mxu0 0
        %4919 = vmatpush2.bf16.msra.mxu0 %v4867
        %4920 = vmatprep.subr.bf16.mxu0 0
        %4921 = vmatpush2.bf16.msra.mxu0 %v4866
        %4922 = vmatprep.mubr.bf16.mxu0 %v4760
        %4923 = vmatmul.mubr.bf16.gmra.mxu0 %v4759
        %v4924 = vpop.f32.mrf.mxu0
        %v4925 = vadd.f32 %v4793, %v4924
        %v4926 = vpop.f32.mrf.mxu0
        %v4927 = vpop.f32.mrf.mxu0
        %v4928 = vpop.f32.mrf.mxu0
        %4929 = vdwg.mxu0
        %4930 = vst [vmem:[%s618] sm:$0x1] %v4925
        %s4931 = sand.u32 %s363, 1
        %s4932 = scalar_lea.sflag [#allocation10], %s4931
        %s4933 = sand.u32 %s363, 1
        %s4934 = scalar_lea.vmem [#allocation25], %s4933
        // Predicated region
        $region121: #{forward.1} parent=79 // pred_check
          %p4935 = pneg %p373
        $region122: #{forward.1} parent=79 // pred_check_branch
          %4937 = sbr.rel (%p4935) target = $region124
        $region123: #{forward.1} parent=79 // pred_region
          %s4939 = ssub.s32 16, 16
          %4940 = vsyncadd %s4932, %s4939
          %s4941 = smul.addr %s35, 16
          %s4942 = scalar_lea.hbm %s15, %s4941
          %s4944 = sshll.u32 %s4934, 4
          %s4945 = int_to_ptr.vmem [resolvable:$true] %s4944
          %4947 = dma.vmem_to_hbm [thread:$0]  %s4945, 16, %s4942, %s4932
        $region124: #{forward.1} parent=79 // pred_fallthru
          _
      $region80: #{forward.1} parent=5 // pred_fallthru
        _
      %p4948 = scmp.le.s32.totalorder 2, %s30
      // Predicated region
      $region125: #{forward.1} parent=5 // pred_check
        %p4949 = pneg %p4948
      $region126: #{forward.1} parent=5 // pred_check_branch
        %4951 = sbr.rel (%p4949) target = $region128
      $region127: #{forward.1} parent=5 // pred_region
        %s4952 = ssub.s32 %s30, 2
        // Predicated region
        $region129: #{forward.1} parent=127 // pred_check
          %p4953 = pneg %p379
        $region130: #{forward.1} parent=127 // pred_check_branch
          %4955 = sbr.rel (%p4953) target = $region132
        $region131: #{forward.1} parent=127 // pred_region
          %s4956 = sand.u32 %s364, 1
          %s4957 = scalar_lea.sflag [#allocation10], %s4956
          %s4958 = sand.u32 %s364, 1
          %s4959 = scalar_lea.vmem [#allocation25], %s4958
          %4960 = dma.done %s4957, 16
        $region132: #{forward.1} parent=127 // pred_fallthru
          _
      $region128: #{forward.1} parent=5 // pred_fallthru
        _
    $region6: #{forward.1} parent=1 // loop_footer
      %s34 = sadd.s32 1, %s30
    $region7: #{forward.1} parent=1 // loop_footer_branch
      %29 = sbr.rel target = $region3
    $region8: #{forward.1} parent=1 // loop_exit
      _
    %4961 = vsyncpa [#allocation9], 1
    %s4962 = scalar_lea.sflag [#allocation9], 1
    %4963 = vsyncpa %s4962, 1
    %4964 = vsyncpa [#allocation12], 1
    %4965 = vsyncpa [#allocation15], 1
    %4966 = vsyncpa [#allocation18], 1
    %4967 = vsyncpa [#allocation21], 1
    %4968 = vsyncpa [#allocation24], 1
    %4969 = vsyncpa [#allocation10], 1
    %s4970 = scalar_lea.sflag [#allocation10], 1
    %4971 = vsyncpa %s4970, 1

</llo_original>
